<compile_context>
chip_gen: v6e
topology: v6e:2x2x1
jax: 0.10.0
libtpu: 0.0.40
codegen_flags: <defaults>
</compile_context>

<pallas_src>
import math

import jax
import jax.numpy as jnp
from jax import lax
from jax.experimental import pallas as pl
from jax.experimental.pallas import tpu as pltpu

LANE = 128
SUBLANE = 8
UNROLL_T = 16      # fully unroll the recurrence when T <= this


def _round_up(x, m):
    return ((x + m - 1) // m) * m


def _nbytes(shape, dtype):
    return math.prod(shape) * jnp.dtype(dtype).itemsize


def ias_lstm_kernel(emb_ref, len_ref, wih_ref, whh_ref, b_ref,
                    wslot_ref, bslot_ref, wint_ref, bint_ref,
                    slots_ref, intent_ref, xwih_ref):
    """One batch tile of fused LSTM + length masking + slot/intent heads.

    emb_ref   : (T, Bb, E)   bf16  time-major embedded tokens for this tile
    len_ref   : (Bb, 1)      int32 sequence lengths (0 for padded rows)
    wih_ref   : (E, 4Hp)     bf16  input->gate weights, gate order [i, f, o, g]
    whh_ref   : (Hp, 4Hp)    bf16  hidden->gate weights, gate order [i, f, o, g]
    b_ref     : (1, 4Hp)     f32   b_ih + b_hh, gate order [i, f, o, g]
    wslot_ref : (Hp, Sp) bf16, bslot_ref: (1, Sp) f32   lane-padded slot head
    wint_ref  : (Hp, Ip) bf16, bint_ref : (1, Ip) f32   lane-padded intent head
    slots_ref : (T, Bb, Sp)  f32   output (lane-dense)
    intent_ref: (Bb, Ip)     f32   output (lane-dense)
    xwih_ref  : (T*Bb, 4Hp)  bf16  scratch: hoisted x @ Wih
    """
    T, Bb, E = emb_ref.shape
    Hp = whh_ref.shape[0]

    # Hoisted input projection: one big MXU matmul covering all T steps.
    x_flat = emb_ref[...].reshape(T * Bb, E)
    xwih_ref[...] = jnp.dot(
        x_flat, wih_ref[...],
        preferred_element_type=jnp.float32).astype(jnp.bfloat16)

    lens = len_ref[...]                      # (Bb, 1) int32
    whh = whh_ref[...]                       # bf16
    bias = b_ref[...]                        # (1, 4Hp) f32
    wslot = wslot_ref[...]                   # bf16
    bslot = bslot_ref[...]                   # f32

    def step(t, row, h, c):
        gates = (xwih_ref[pl.ds(row, Bb), :].astype(jnp.float32)
                 + bias
                 + jnp.dot(h.astype(jnp.bfloat16), whh,
                           preferred_element_type=jnp.float32))   # (Bb, 4Hp)
        sig = jax.nn.sigmoid(gates[:, :3 * Hp])   # [i | f | o] in one EUP pass
        g_g = jnp.tanh(gates[:, 3 * Hp:])
        i_g = sig[:, 0 * Hp:1 * Hp]
        f_g = sig[:, 1 * Hp:2 * Hp]
        o_g = sig[:, 2 * Hp:3 * Hp]
        c_new = f_g * c + i_g * g_g
        h_new = o_g * jnp.tanh(c_new)

        # pack_padded_sequence semantics: zero unpacked outputs past the
        # length and freeze (h, c) there.
        m = (t < lens).astype(jnp.float32)        # (Bb, 1)
        h_out = m * h_new

        # Slot head folded into the recurrence: independent of step t+1's
        # chain, fills the otherwise-idle MXU.
        slots_ref[t] = (jnp.dot(h_out.astype(jnp.bfloat16), wslot,
                                preferred_element_type=jnp.float32) + bslot)

        om = 1.0 - m
        return h_out + om * h, m * c_new + om * c

    h = jnp.zeros((Bb, Hp), jnp.float32)
    c = jnp.zeros((Bb, Hp), jnp.float32)
    if T <= UNROLL_T:
        for t in range(T):                        # static, sublane-aligned
            h, c = step(t, t * Bb, h, c)
    else:
        def body(t, carry):
            hh, cc = carry
            return step(t, pl.multiple_of(t * Bb, Bb), hh, cc)
        h, c = lax.fori_loop(0, T, body, (h, c))

    # Intent head on the last valid hidden state (h frozen past the length).
    intent_ref[...] = (jnp.dot(h.astype(jnp.bfloat16), wint_ref[...],
                               preferred_element_type=jnp.float32)
                       + bint_ref[...])


def prepare_params(params):
    """Gate-reorder ([i,f,g,o] -> [i,f,o,g]), pad H to a lane multiple,
    lane-pad the head outputs, and cast MXU operands to bf16 (done once)."""
    H = params["whh"].shape[0]
    Hp = _round_up(H, LANE)

    def fix_gates(w):
        # [i, f, g, o] -> [i, f, o, g]; each gate chunk zero-padded H -> Hp.
        i, f, g, o = jnp.split(w, 4, axis=-1)
        pad = [(0, 0)] * (w.ndim - 1) + [(0, Hp - H)]
        return jnp.concatenate([jnp.pad(x, pad) for x in (i, f, o, g)], axis=-1)

    def pad_rows(w):
        return jnp.pad(w, [(0, Hp - H)] + [(0, 0)] * (w.ndim - 1))

    def lane_pad(w):
        n = w.shape[-1]
        return jnp.pad(w, [(0, 0)] * (w.ndim - 1) + [(0, _round_up(n, LANE) - n)])

    return dict(
        emb=params["emb"].astype(jnp.bfloat16),
        wih=fix_gates(params["wih"]).astype(jnp.bfloat16),
        whh=fix_gates(pad_rows(params["whh"])).astype(jnp.bfloat16),
        b=fix_gates(params["b"]).astype(jnp.float32),
        wslot=lane_pad(pad_rows(params["wslot"])).astype(jnp.bfloat16),
        bslot=lane_pad(params["bslot"]).astype(jnp.float32),
        wint=lane_pad(pad_rows(params["wint"])).astype(jnp.bfloat16),
        bint=lane_pad(params["bint"]).astype(jnp.float32),
    )


def model_ias_forward(utterance, seq_lengths, prep, out_slot, out_int,
                      *, batch_block=None):
    """utterance: (B, T) int32 token ids; seq_lengths: (B,) int32."""
    emb_table = prep["emb"]                      # (V, E) bf16
    B, T = utterance.shape
    E = emb_table.shape[1]
    Hp = prep["whh"].shape[0]
    G = 4 * Hp
    S_pad = prep["wslot"].shape[1]
    I_pad = prep["wint"].shape[1]

    # Batch tile: sublane-aligned; default bounded so per-block VMEM fits v7x.
    if batch_block is None:
        batch_block = min(128, _round_up(B, SUBLANE))
    Bb = _round_up(batch_block, SUBLANE)
    Bp = _round_up(max(B, Bb), Bb)               # padded batch, multiple of Bb
    n_blocks = Bp // Bb

    utt = jnp.pad(utterance, ((0, Bp - B), (0, 0)))           # padded rows: len 0
    lens2d = jnp.pad(seq_lengths.astype(jnp.int32), (0, Bp - B)).reshape(Bp, 1)

    # Time-major bf16 embedding gather (no separate transpose pass).
    # TODO(synk): fuse this gather into the kernel via scalar-prefetched token
    # ids + manual DMA from the HBM table.
    emb_tm = emb_table[utt.T]                    # (T, Bp, E) bf16

    wb = lambda i: (0, 0)                        # weights: same block every step
    in_specs = [
        pl.BlockSpec((T, Bb, E), lambda i: (0, i, 0)),
        pl.BlockSpec((Bb, 1), lambda i: (i, 0)),
        pl.BlockSpec((E, G), wb),
        pl.BlockSpec((Hp, G), wb),
        pl.BlockSpec((1, G), wb),
        pl.BlockSpec((Hp, S_pad), wb),
        pl.BlockSpec((1, S_pad), wb),
        pl.BlockSpec((Hp, I_pad), wb),
        pl.BlockSpec((1, I_pad), wb),
    ]
    out_specs = (
        pl.BlockSpec((T, Bb, S_pad), lambda i: (0, i, 0)),
        pl.BlockSpec((Bb, I_pad), lambda i: (i, 0)),
    )

    # Per-block VMEM footprint (double-buffered in/out) -> scoped-VMEM limit.
    blk_in = (_nbytes((T, Bb, E), jnp.bfloat16) + _nbytes((Bb, 1), jnp.int32)
              + _nbytes((E, G), jnp.bfloat16) + _nbytes((Hp, G), jnp.bfloat16)
              + _nbytes((1, G), jnp.float32)
              + _nbytes((Hp, S_pad), jnp.bfloat16)
              + _nbytes((1, S_pad), jnp.float32)
              + _nbytes((Hp, I_pad), jnp.bfloat16)
              + _nbytes((1, I_pad), jnp.float32))
    blk_out = (_nbytes((T, Bb, S_pad), jnp.float32)
               + _nbytes((Bb, I_pad), jnp.float32))
    scratch_bytes = _nbytes((T * Bb, G), jnp.bfloat16)
    vmem_limit = min(max(2 * (blk_in + blk_out) + scratch_bytes + (8 << 20),
                         32 << 20), 64 << 20)

    cost = pl.CostEstimate(
        flops=int(2 * T * Bp * (E * G + Hp * G + Hp * S_pad)
                  + 2 * Bp * Hp * I_pad),
        transcendentals=int(5 * T * Bp * Hp),
        bytes_accessed=int(n_blocks * (blk_in + blk_out)),
    )

    slots_slab, intent_slab = pl.pallas_call(
        ias_lstm_kernel,
        grid=(n_blocks,),
        out_shape=(jax.ShapeDtypeStruct((T, Bp, S_pad), jnp.float32),
                   jax.ShapeDtypeStruct((Bp, I_pad), jnp.float32)),
        in_specs=in_specs,
        out_specs=out_specs,
        scratch_shapes=[pltpu.VMEM((T * Bb, G), jnp.bfloat16)],
        compiler_params=pltpu.CompilerParams(
            dimension_semantics=("parallel",),
            vmem_limit_bytes=int(vmem_limit)),
        cost_estimate=cost,
    )(emb_tm, lens2d, prep["wih"], prep["whh"], prep["b"],
      prep["wslot"], prep["bslot"], prep["wint"], prep["bint"])

    # (T, Bp, Sp) -> (B, out_slot, T), matching slots.permute(0, 2, 1).
    slots = jnp.transpose(slots_slab[:, :B, :out_slot], (1, 2, 0))
    intent = intent_slab[:B, :out_int]
    return slots, intent


def reference_forward(utterance, seq_lengths, params):
    """Plain-JAX f32 reference mirroring the PyTorch forward (eval, no dropout)."""
    emb = params["emb"][utterance].astype(jnp.float32)    # (B, T, E)
    B, T, _ = emb.shape
    H = params["whh"].shape[0]
    lens = seq_lengths.astype(jnp.int32)

    def step(carry, x_t_and_t):
        h, c = carry
        x_t, t = x_t_and_t
        gates = x_t @ params["wih"] + h @ params["whh"] + params["b"]
        i_g = jax.nn.sigmoid(gates[:, 0 * H:1 * H])
        f_g = jax.nn.sigmoid(gates[:, 1 * H:2 * H])
        g_g = jnp.tanh(gates[:, 2 * H:3 * H])
        o_g = jax.nn.sigmoid(gates[:, 3 * H:4 * H])
        c_new = f_g * c + i_g * g_g
        h_new = o_g * jnp.tanh(c_new)
        m = (t < lens)[:, None].astype(jnp.float32)
        h = m * h_new + (1 - m) * h
        c = m * c_new + (1 - m) * c
        return (h, c), m * h_new

    (h_last, _), henc = lax.scan(
        step, (jnp.zeros((B, H)), jnp.zeros((B, H))),
        (jnp.transpose(emb, (1, 0, 2)), jnp.arange(T)))
    utt_encoded = jnp.transpose(henc, (1, 0, 2))          # (B, T, H)
    slots = utt_encoded @ params["wslot"] + params["bslot"]
    intent = h_last @ params["wint"] + params["bint"]
    return jnp.transpose(slots, (0, 2, 1)), intent


def init_params(key, vocab_len, emb_size, hid_size, out_slot, out_int,
                pad_index=0):
    ks = jax.random.split(key, 8)
    scale = 0.1
    emb = scale * jax.random.normal(ks[0], (vocab_len, emb_size), jnp.float32)
    emb = emb.at[pad_index].set(0.0)                      # padding_idx row = 0
    wih = scale * jax.random.normal(ks[1], (emb_size, 4 * hid_size), jnp.float32)
    whh = scale * jax.random.normal(ks[2], (hid_size, 4 * hid_size), jnp.float32)
    b = scale * jax.random.normal(ks[3], (1, 4 * hid_size), jnp.float32)  # b_ih + b_hh
    wslot = scale * jax.random.normal(ks[4], (hid_size, out_slot), jnp.float32)
    bslot = scale * jax.random.normal(ks[5], (1, out_slot), jnp.float32)
    wint = scale * jax.random.normal(ks[6], (hid_size, out_int), jnp.float32)
    bint = scale * jax.random.normal(ks[7], (1, out_int), jnp.float32)
    return dict(emb=emb, wih=wih, whh=whh, b=b,
                wslot=wslot, bslot=bslot, wint=wint, bint=bint)


if __name__ == "__main__":
    # Small, deterministic configuration (n_layer=1, unidirectional, no dropout).
    B, T = 12, 8
    vocab_len, emb_size, hid_size = 50, 32, 32
    out_slot, out_int = 10, 6
    pad_index = 0

    key = jax.random.PRNGKey(0)
    k_par, k_tok = jax.random.split(key)
    params = init_params(k_par, vocab_len, emb_size, hid_size, out_slot,
                         out_int, pad_index)
    prep = prepare_params(params)

    # Sorted-descending lengths (pack_padded_sequence enforce_sorted=True).
    seq_lengths = jnp.array([8, 8, 7, 7, 6, 5, 5, 4, 3, 3, 2, 1], dtype=jnp.int32)
    tokens = jax.random.randint(k_tok, (B, T), 1, vocab_len, dtype=jnp.int32)
    pad_mask = jnp.arange(T)[None, :] < seq_lengths[:, None]
    utterance = jnp.where(pad_mask, tokens, pad_index)

    # batch_block=8 -> Bp=16, grid of 2 blocks (exercises the parallel axis).
    fwd = jax.jit(lambda u, s: model_ias_forward(u, s, prep, out_slot, out_int,
                                                 batch_block=8))
    slots, intent = fwd(utterance, seq_lengths)
    slots = jax.block_until_ready(slots)
    intent = jax.block_until_ready(intent)

    assert slots.shape == (B, out_slot, T)
    assert intent.shape == (B, out_int)

    slots_ref, intent_ref = reference_forward(utterance, seq_lengths, params)
    # bf16 MXU operands -> tolerance loosened vs. the pure-f32 path.
    assert jnp.allclose(slots, slots_ref, atol=2e-2, rtol=2e-2)
    assert jnp.allclose(intent, intent_ref, atol=2e-2, rtol=2e-2)

    print("KERNEL_OK")
</pallas_src>

<mosaic_0001>
module attributes {stable_mosaic.version = 11 : i64} {
  func.func @ias_lstm_kernel(%arg0: i32, %arg1: memref<8x8x32xbf16, #tpu.memory_space<vmem>>, %arg2: memref<8x1xi32, #tpu.memory_space<vmem>>, %arg3: memref<32x512xbf16, #tpu.memory_space<vmem>>, %arg4: memref<128x512xbf16, #tpu.memory_space<vmem>>, %arg5: memref<1x512xf32, #tpu.memory_space<vmem>>, %arg6: memref<128x128xbf16, #tpu.memory_space<vmem>>, %arg7: memref<1x128xf32, #tpu.memory_space<vmem>>, %arg8: memref<128x128xbf16, #tpu.memory_space<vmem>>, %arg9: memref<1x128xf32, #tpu.memory_space<vmem>>, %arg10: memref<8x8x128xf32, #tpu.memory_space<vmem>>, %arg11: memref<8x128xf32, #tpu.memory_space<vmem>>, %arg12: memref<64x512xbf16, #tpu.memory_space<vmem>>) attributes {dimension_semantics = [#tpu.dimension_semantics<parallel>], iteration_bounds = array<i64: 2>, scalar_prefetch = 0 : i64, scratch_operands = 1 : i64, tpu.core_type = #tpu.core_type<tc>, window_params = [{transform_indices = @transform_0, window_bounds = array<i64: 8, 8, 32>}, {transform_indices = @transform_1, window_bounds = array<i64: 8, 1>}, {pipeline_mode = #tpu.pipeline_mode<synchronous>, transform_indices = @transform_2, window_bounds = array<i64: 32, 512>}, {pipeline_mode = #tpu.pipeline_mode<synchronous>, transform_indices = @transform_3, window_bounds = array<i64: 128, 512>}, {pipeline_mode = #tpu.pipeline_mode<synchronous>, transform_indices = @transform_4, window_bounds = array<i64: 1, 512>}, {pipeline_mode = #tpu.pipeline_mode<synchronous>, transform_indices = @transform_5, window_bounds = array<i64: 128, 128>}, {pipeline_mode = #tpu.pipeline_mode<synchronous>, transform_indices = @transform_6, window_bounds = array<i64: 1, 128>}, {pipeline_mode = #tpu.pipeline_mode<synchronous>, transform_indices = @transform_7, window_bounds = array<i64: 128, 128>}, {pipeline_mode = #tpu.pipeline_mode<synchronous>, transform_indices = @transform_8, window_bounds = array<i64: 1, 128>}, {transform_indices = @transform_9, window_bounds = array<i64: 8, 8, 128>}, {transform_indices = @transform_10, window_bounds = array<i64: 8, 128>}]} {
    %c0 = arith.constant 0 : index
    %c0_0 = arith.constant 0 : index
    %c0_1 = arith.constant 0 : index
    %0 = vector.load %arg1[%c0, %c0_0, %c0_1] : memref<8x8x32xbf16, #tpu.memory_space<vmem>>, vector<8x8x32xbf16>
    %1 = vector.shape_cast %0 : vector<8x8x32xbf16> to vector<64x32xbf16>
    %c0_2 = arith.constant 0 : index
    %c0_3 = arith.constant 0 : index
    %2 = vector.load %arg3[%c0_2, %c0_3] : memref<32x512xbf16, #tpu.memory_space<vmem>>, vector<32x512xbf16>
    %cst = arith.constant dense<0.000000e+00> : vector<64x512xf32>
    %3 = tpu.matmul %1, %2, %cst {dimension_numbers = #tpu.dot_dimension_numbers<[1], [0], [0], [1], [0, 0, 1, 1], [], []>} : vector<64x32xbf16>, vector<32x512xbf16>, vector<64x512xf32> -> vector<64x512xf32>
    %4 = arith.truncf %3 : vector<64x512xf32> to vector<64x512xbf16>
    %c0_4 = arith.constant 0 : index
    %c0_5 = arith.constant 0 : index
    %5 = vector.load %arg12[%c0_4, %c0_5] : memref<64x512xbf16, #tpu.memory_space<vmem>>, vector<64x512xbf16>
    tpu.vector_store %arg12[%c0_4, %c0_5], %4 {strides = array<i32>} : memref<64x512xbf16, #tpu.memory_space<vmem>>, vector<64x512xbf16>,
    %c0_6 = arith.constant 0 : index
    %c0_7 = arith.constant 0 : index
    %6 = vector.load %arg2[%c0_6, %c0_7] : memref<8x1xi32, #tpu.memory_space<vmem>>, vector<8x1xi32>
    %c0_8 = arith.constant 0 : index
    %c0_9 = arith.constant 0 : index
    %7 = vector.load %arg4[%c0_8, %c0_9] : memref<128x512xbf16, #tpu.memory_space<vmem>>, vector<128x512xbf16>
    %c0_10 = arith.constant 0 : index
    %c0_11 = arith.constant 0 : index
    %8 = vector.load %arg5[%c0_10, %c0_11] : memref<1x512xf32, #tpu.memory_space<vmem>>, vector<1x512xf32>
    %c0_12 = arith.constant 0 : index
    %c0_13 = arith.constant 0 : index
    %9 = vector.load %arg6[%c0_12, %c0_13] : memref<128x128xbf16, #tpu.memory_space<vmem>>, vector<128x128xbf16>
    %c0_14 = arith.constant 0 : index
    %c0_15 = arith.constant 0 : index
    %10 = vector.load %arg7[%c0_14, %c0_15] : memref<1x128xf32, #tpu.memory_space<vmem>>, vector<1x128xf32>
    %cst_16 = arith.constant 0.000000e+00 : f32
    %11 = vector.broadcast %cst_16 : f32 to vector<8x128xf32>
    %cst_17 = arith.constant 0.000000e+00 : f32
    %12 = vector.broadcast %cst_17 : f32 to vector<8x128xf32>
    %c0_18 = arith.constant 0 : index
    %c0_19 = arith.constant 0 : index
    %13 = vector.load %arg12[%c0_18, %c0_19] : memref<64x512xbf16, #tpu.memory_space<vmem>>, vector<8x512xbf16>
    %14 = arith.extf %13 : vector<8x512xbf16> to vector<8x512xf32>
    %15 = vector.broadcast %8 : vector<1x512xf32> to vector<8x512xf32>
    %16 = arith.addf %14, %15 : vector<8x512xf32>
    %17 = arith.truncf %11 : vector<8x128xf32> to vector<8x128xbf16>
    %cst_20 = arith.constant dense<0.000000e+00> : vector<8x512xf32>
    %18 = tpu.matmul %17, %7, %cst_20 {dimension_numbers = #tpu.dot_dimension_numbers<[1], [0], [0], [1], [0, 0, 1, 1], [], []>} : vector<8x128xbf16>, vector<128x512xbf16>, vector<8x512xf32> -> vector<8x512xf32>
    %19 = arith.addf %16, %18 : vector<8x512xf32>
    %20 = vector.extract_strided_slice %19 {offsets = [0, 0], sizes = [8, 384], strides = [1, 1]} : vector<8x512xf32> to vector<8x384xf32>
    %21 = arith.negf %20 : vector<8x384xf32>
    %22 = math.exp %21 : vector<8x384xf32>
    %cst_21 = arith.constant 1.000000e+00 : f32
    %23 = vector.broadcast %cst_21 : f32 to vector<8x384xf32>
    %24 = arith.addf %23, %22 : vector<8x384xf32>
    %25 = arith.divf %23, %24 : vector<8x384xf32>
    %26 = vector.extract_strided_slice %19 {offsets = [0, 384], sizes = [8, 128], strides = [1, 1]} : vector<8x512xf32> to vector<8x128xf32>
    %27 = math.tanh %26 : vector<8x128xf32>
    %28 = vector.extract_strided_slice %25 {offsets = [0, 0], sizes = [8, 128], strides = [1, 1]} : vector<8x384xf32> to vector<8x128xf32>
    %29 = vector.extract_strided_slice %25 {offsets = [0, 128], sizes = [8, 128], strides = [1, 1]} : vector<8x384xf32> to vector<8x128xf32>
    %30 = vector.extract_strided_slice %25 {offsets = [0, 256], sizes = [8, 128], strides = [1, 1]} : vector<8x384xf32> to vector<8x128xf32>
    %31 = arith.mulf %29, %12 : vector<8x128xf32>
    %32 = arith.mulf %28, %27 : vector<8x128xf32>
    %33 = arith.addf %31, %32 : vector<8x128xf32>
    %34 = math.tanh %33 : vector<8x128xf32>
    %35 = arith.mulf %30, %34 : vector<8x128xf32>
    %c0_i32 = arith.constant 0 : i32
    %36 = vector.broadcast %c0_i32 : i32 to vector<8x1xi32>
    %37 = arith.cmpi sgt, %6, %36 : vector<8x1xi32>
    %38 = arith.extui %37 : vector<8x1xi1> to vector<8x1xi32>
    %39 = arith.sitofp %38 : vector<8x1xi32> to vector<8x1xf32>
    %40 = vector.broadcast %39 : vector<8x1xf32> to vector<8x128xf32>
    %41 = arith.mulf %40, %35 : vector<8x128xf32>
    %42 = arith.truncf %41 : vector<8x128xf32> to vector<8x128xbf16>
    %cst_22 = arith.constant dense<0.000000e+00> : vector<8x128xf32>
    %43 = tpu.matmul %42, %9, %cst_22 {dimension_numbers = #tpu.dot_dimension_numbers<[1], [0], [0], [1], [0, 0, 1, 1], [], []>} : vector<8x128xbf16>, vector<128x128xbf16>, vector<8x128xf32> -> vector<8x128xf32>
    %44 = vector.broadcast %10 : vector<1x128xf32> to vector<8x128xf32>
    %45 = arith.addf %43, %44 : vector<8x128xf32>
    %c0_23 = arith.constant 0 : index
    %c0_24 = arith.constant 0 : index
    %c0_25 = arith.constant 0 : index
    %46 = vector.load %arg10[%c0_23, %c0_24, %c0_25] : memref<8x8x128xf32, #tpu.memory_space<vmem>>, vector<1x8x128xf32>
    %47 = vector.shape_cast %46 : vector<1x8x128xf32> to vector<8x128xf32>
    %48 = vector.shape_cast %45 : vector<8x128xf32> to vector<1x8x128xf32>
    tpu.vector_store %arg10[%c0_23, %c0_24, %c0_25], %48 {strides = array<i32>} : memref<8x8x128xf32, #tpu.memory_space<vmem>>, vector<1x8x128xf32>,
    %cst_26 = arith.constant 1.000000e+00 : f32
    %49 = vector.broadcast %cst_26 : f32 to vector<8x1xf32>
    %50 = arith.subf %49, %39 : vector<8x1xf32>
    %51 = vector.broadcast %50 : vector<8x1xf32> to vector<8x128xf32>
    %52 = arith.mulf %51, %11 : vector<8x128xf32>
    %53 = arith.addf %41, %52 : vector<8x128xf32>
    %54 = vector.broadcast %39 : vector<8x1xf32> to vector<8x128xf32>
    %55 = arith.mulf %54, %33 : vector<8x128xf32>
    %56 = vector.broadcast %50 : vector<8x1xf32> to vector<8x128xf32>
    %57 = arith.mulf %56, %12 : vector<8x128xf32>
    %58 = arith.addf %55, %57 : vector<8x128xf32>
    %c8 = arith.constant 8 : index
    %c0_27 = arith.constant 0 : index
    %59 = vector.load %arg12[%c8, %c0_27] : memref<64x512xbf16, #tpu.memory_space<vmem>>, vector<8x512xbf16>
    %60 = arith.extf %59 : vector<8x512xbf16> to vector<8x512xf32>
    %61 = vector.broadcast %8 : vector<1x512xf32> to vector<8x512xf32>
    %62 = arith.addf %60, %61 : vector<8x512xf32>
    %63 = arith.truncf %53 : vector<8x128xf32> to vector<8x128xbf16>
    %cst_28 = arith.constant dense<0.000000e+00> : vector<8x512xf32>
    %64 = tpu.matmul %63, %7, %cst_28 {dimension_numbers = #tpu.dot_dimension_numbers<[1], [0], [0], [1], [0, 0, 1, 1], [], []>} : vector<8x128xbf16>, vector<128x512xbf16>, vector<8x512xf32> -> vector<8x512xf32>
    %65 = arith.addf %62, %64 : vector<8x512xf32>
    %66 = vector.extract_strided_slice %65 {offsets = [0, 0], sizes = [8, 384], strides = [1, 1]} : vector<8x512xf32> to vector<8x384xf32>
    %67 = arith.negf %66 : vector<8x384xf32>
    %68 = math.exp %67 : vector<8x384xf32>
    %cst_29 = arith.constant 1.000000e+00 : f32
    %69 = vector.broadcast %cst_29 : f32 to vector<8x384xf32>
    %70 = arith.addf %69, %68 : vector<8x384xf32>
    %71 = arith.divf %69, %70 : vector<8x384xf32>
    %72 = vector.extract_strided_slice %65 {offsets = [0, 384], sizes = [8, 128], strides = [1, 1]} : vector<8x512xf32> to vector<8x128xf32>
    %73 = math.tanh %72 : vector<8x128xf32>
    %74 = vector.extract_strided_slice %71 {offsets = [0, 0], sizes = [8, 128], strides = [1, 1]} : vector<8x384xf32> to vector<8x128xf32>
    %75 = vector.extract_strided_slice %71 {offsets = [0, 128], sizes = [8, 128], strides = [1, 1]} : vector<8x384xf32> to vector<8x128xf32>
    %76 = vector.extract_strided_slice %71 {offsets = [0, 256], sizes = [8, 128], strides = [1, 1]} : vector<8x384xf32> to vector<8x128xf32>
    %77 = arith.mulf %75, %58 : vector<8x128xf32>
    %78 = arith.mulf %74, %73 : vector<8x128xf32>
    %79 = arith.addf %77, %78 : vector<8x128xf32>
    %80 = math.tanh %79 : vector<8x128xf32>
    %81 = arith.mulf %76, %80 : vector<8x128xf32>
    %c1_i32 = arith.constant 1 : i32
    %82 = vector.broadcast %c1_i32 : i32 to vector<8x1xi32>
    %83 = arith.cmpi sgt, %6, %82 : vector<8x1xi32>
    %84 = arith.extui %83 : vector<8x1xi1> to vector<8x1xi32>
    %85 = arith.sitofp %84 : vector<8x1xi32> to vector<8x1xf32>
    %86 = vector.broadcast %85 : vector<8x1xf32> to vector<8x128xf32>
    %87 = arith.mulf %86, %81 : vector<8x128xf32>
    %88 = arith.truncf %87 : vector<8x128xf32> to vector<8x128xbf16>
    %cst_30 = arith.constant dense<0.000000e+00> : vector<8x128xf32>
    %89 = tpu.matmul %88, %9, %cst_30 {dimension_numbers = #tpu.dot_dimension_numbers<[1], [0], [0], [1], [0, 0, 1, 1], [], []>} : vector<8x128xbf16>, vector<128x128xbf16>, vector<8x128xf32> -> vector<8x128xf32>
    %90 = vector.broadcast %10 : vector<1x128xf32> to vector<8x128xf32>
    %91 = arith.addf %89, %90 : vector<8x128xf32>
    %c1 = arith.constant 1 : index
    %c0_31 = arith.constant 0 : index
    %c0_32 = arith.constant 0 : index
    %92 = vector.load %arg10[%c1, %c0_31, %c0_32] : memref<8x8x128xf32, #tpu.memory_space<vmem>>, vector<1x8x128xf32>
    %93 = vector.shape_cast %92 : vector<1x8x128xf32> to vector<8x128xf32>
    %94 = vector.shape_cast %91 : vector<8x128xf32> to vector<1x8x128xf32>
    tpu.vector_store %arg10[%c1, %c0_31, %c0_32], %94 {strides = array<i32>} : memref<8x8x128xf32, #tpu.memory_space<vmem>>, vector<1x8x128xf32>,
    %cst_33 = arith.constant 1.000000e+00 : f32
    %95 = vector.broadcast %cst_33 : f32 to vector<8x1xf32>
    %96 = arith.subf %95, %85 : vector<8x1xf32>
    %97 = vector.broadcast %96 : vector<8x1xf32> to vector<8x128xf32>
    %98 = arith.mulf %97, %53 : vector<8x128xf32>
    %99 = arith.addf %87, %98 : vector<8x128xf32>
    %100 = vector.broadcast %85 : vector<8x1xf32> to vector<8x128xf32>
    %101 = arith.mulf %100, %79 : vector<8x128xf32>
    %102 = vector.broadcast %96 : vector<8x1xf32> to vector<8x128xf32>
    %103 = arith.mulf %102, %58 : vector<8x128xf32>
    %104 = arith.addf %101, %103 : vector<8x128xf32>
    %c16 = arith.constant 16 : index
    %c0_34 = arith.constant 0 : index
    %105 = vector.load %arg12[%c16, %c0_34] : memref<64x512xbf16, #tpu.memory_space<vmem>>, vector<8x512xbf16>
    %106 = arith.extf %105 : vector<8x512xbf16> to vector<8x512xf32>
    %107 = vector.broadcast %8 : vector<1x512xf32> to vector<8x512xf32>
    %108 = arith.addf %106, %107 : vector<8x512xf32>
    %109 = arith.truncf %99 : vector<8x128xf32> to vector<8x128xbf16>
    %cst_35 = arith.constant dense<0.000000e+00> : vector<8x512xf32>
    %110 = tpu.matmul %109, %7, %cst_35 {dimension_numbers = #tpu.dot_dimension_numbers<[1], [0], [0], [1], [0, 0, 1, 1], [], []>} : vector<8x128xbf16>, vector<128x512xbf16>, vector<8x512xf32> -> vector<8x512xf32>
    %111 = arith.addf %108, %110 : vector<8x512xf32>
    %112 = vector.extract_strided_slice %111 {offsets = [0, 0], sizes = [8, 384], strides = [1, 1]} : vector<8x512xf32> to vector<8x384xf32>
    %113 = arith.negf %112 : vector<8x384xf32>
    %114 = math.exp %113 : vector<8x384xf32>
    %cst_36 = arith.constant 1.000000e+00 : f32
    %115 = vector.broadcast %cst_36 : f32 to vector<8x384xf32>
    %116 = arith.addf %115, %114 : vector<8x384xf32>
    %117 = arith.divf %115, %116 : vector<8x384xf32>
    %118 = vector.extract_strided_slice %111 {offsets = [0, 384], sizes = [8, 128], strides = [1, 1]} : vector<8x512xf32> to vector<8x128xf32>
    %119 = math.tanh %118 : vector<8x128xf32>
    %120 = vector.extract_strided_slice %117 {offsets = [0, 0], sizes = [8, 128], strides = [1, 1]} : vector<8x384xf32> to vector<8x128xf32>
    %121 = vector.extract_strided_slice %117 {offsets = [0, 128], sizes = [8, 128], strides = [1, 1]} : vector<8x384xf32> to vector<8x128xf32>
    %122 = vector.extract_strided_slice %117 {offsets = [0, 256], sizes = [8, 128], strides = [1, 1]} : vector<8x384xf32> to vector<8x128xf32>
    %123 = arith.mulf %121, %104 : vector<8x128xf32>
    %124 = arith.mulf %120, %119 : vector<8x128xf32>
    %125 = arith.addf %123, %124 : vector<8x128xf32>
    %126 = math.tanh %125 : vector<8x128xf32>
    %127 = arith.mulf %122, %126 : vector<8x128xf32>
    %c2_i32 = arith.constant 2 : i32
    %128 = vector.broadcast %c2_i32 : i32 to vector<8x1xi32>
    %129 = arith.cmpi sgt, %6, %128 : vector<8x1xi32>
    %130 = arith.extui %129 : vector<8x1xi1> to vector<8x1xi32>
    %131 = arith.sitofp %130 : vector<8x1xi32> to vector<8x1xf32>
    %132 = vector.broadcast %131 : vector<8x1xf32> to vector<8x128xf32>
    %133 = arith.mulf %132, %127 : vector<8x128xf32>
    %134 = arith.truncf %133 : vector<8x128xf32> to vector<8x128xbf16>
    %cst_37 = arith.constant dense<0.000000e+00> : vector<8x128xf32>
    %135 = tpu.matmul %134, %9, %cst_37 {dimension_numbers = #tpu.dot_dimension_numbers<[1], [0], [0], [1], [0, 0, 1, 1], [], []>} : vector<8x128xbf16>, vector<128x128xbf16>, vector<8x128xf32> -> vector<8x128xf32>
    %136 = vector.broadcast %10 : vector<1x128xf32> to vector<8x128xf32>
    %137 = arith.addf %135, %136 : vector<8x128xf32>
    %c2 = arith.constant 2 : index
    %c0_38 = arith.constant 0 : index
    %c0_39 = arith.constant 0 : index
    %138 = vector.load %arg10[%c2, %c0_38, %c0_39] : memref<8x8x128xf32, #tpu.memory_space<vmem>>, vector<1x8x128xf32>
    %139 = vector.shape_cast %138 : vector<1x8x128xf32> to vector<8x128xf32>
    %140 = vector.shape_cast %137 : vector<8x128xf32> to vector<1x8x128xf32>
    tpu.vector_store %arg10[%c2, %c0_38, %c0_39], %140 {strides = array<i32>} : memref<8x8x128xf32, #tpu.memory_space<vmem>>, vector<1x8x128xf32>,
    %cst_40 = arith.constant 1.000000e+00 : f32
    %141 = vector.broadcast %cst_40 : f32 to vector<8x1xf32>
    %142 = arith.subf %141, %131 : vector<8x1xf32>
    %143 = vector.broadcast %142 : vector<8x1xf32> to vector<8x128xf32>
    %144 = arith.mulf %143, %99 : vector<8x128xf32>
    %145 = arith.addf %133, %144 : vector<8x128xf32>
    %146 = vector.broadcast %131 : vector<8x1xf32> to vector<8x128xf32>
    %147 = arith.mulf %146, %125 : vector<8x128xf32>
    %148 = vector.broadcast %142 : vector<8x1xf32> to vector<8x128xf32>
    %149 = arith.mulf %148, %104 : vector<8x128xf32>
    %150 = arith.addf %147, %149 : vector<8x128xf32>
    %c24 = arith.constant 24 : index
    %c0_41 = arith.constant 0 : index
    %151 = vector.load %arg12[%c24, %c0_41] : memref<64x512xbf16, #tpu.memory_space<vmem>>, vector<8x512xbf16>
    %152 = arith.extf %151 : vector<8x512xbf16> to vector<8x512xf32>
    %153 = vector.broadcast %8 : vector<1x512xf32> to vector<8x512xf32>
    %154 = arith.addf %152, %153 : vector<8x512xf32>
    %155 = arith.truncf %145 : vector<8x128xf32> to vector<8x128xbf16>
    %cst_42 = arith.constant dense<0.000000e+00> : vector<8x512xf32>
    %156 = tpu.matmul %155, %7, %cst_42 {dimension_numbers = #tpu.dot_dimension_numbers<[1], [0], [0], [1], [0, 0, 1, 1], [], []>} : vector<8x128xbf16>, vector<128x512xbf16>, vector<8x512xf32> -> vector<8x512xf32>
    %157 = arith.addf %154, %156 : vector<8x512xf32>
    %158 = vector.extract_strided_slice %157 {offsets = [0, 0], sizes = [8, 384], strides = [1, 1]} : vector<8x512xf32> to vector<8x384xf32>
    %159 = arith.negf %158 : vector<8x384xf32>
    %160 = math.exp %159 : vector<8x384xf32>
    %cst_43 = arith.constant 1.000000e+00 : f32
    %161 = vector.broadcast %cst_43 : f32 to vector<8x384xf32>
    %162 = arith.addf %161, %160 : vector<8x384xf32>
    %163 = arith.divf %161, %162 : vector<8x384xf32>
    %164 = vector.extract_strided_slice %157 {offsets = [0, 384], sizes = [8, 128], strides = [1, 1]} : vector<8x512xf32> to vector<8x128xf32>
    %165 = math.tanh %164 : vector<8x128xf32>
    %166 = vector.extract_strided_slice %163 {offsets = [0, 0], sizes = [8, 128], strides = [1, 1]} : vector<8x384xf32> to vector<8x128xf32>
    %167 = vector.extract_strided_slice %163 {offsets = [0, 128], sizes = [8, 128], strides = [1, 1]} : vector<8x384xf32> to vector<8x128xf32>
    %168 = vector.extract_strided_slice %163 {offsets = [0, 256], sizes = [8, 128], strides = [1, 1]} : vector<8x384xf32> to vector<8x128xf32>
    %169 = arith.mulf %167, %150 : vector<8x128xf32>
    %170 = arith.mulf %166, %165 : vector<8x128xf32>
    %171 = arith.addf %169, %170 : vector<8x128xf32>
    %172 = math.tanh %171 : vector<8x128xf32>
    %173 = arith.mulf %168, %172 : vector<8x128xf32>
    %c3_i32 = arith.constant 3 : i32
    %174 = vector.broadcast %c3_i32 : i32 to vector<8x1xi32>
    %175 = arith.cmpi sgt, %6, %174 : vector<8x1xi32>
    %176 = arith.extui %175 : vector<8x1xi1> to vector<8x1xi32>
    %177 = arith.sitofp %176 : vector<8x1xi32> to vector<8x1xf32>
    %178 = vector.broadcast %177 : vector<8x1xf32> to vector<8x128xf32>
    %179 = arith.mulf %178, %173 : vector<8x128xf32>
    %180 = arith.truncf %179 : vector<8x128xf32> to vector<8x128xbf16>
    %cst_44 = arith.constant dense<0.000000e+00> : vector<8x128xf32>
    %181 = tpu.matmul %180, %9, %cst_44 {dimension_numbers = #tpu.dot_dimension_numbers<[1], [0], [0], [1], [0, 0, 1, 1], [], []>} : vector<8x128xbf16>, vector<128x128xbf16>, vector<8x128xf32> -> vector<8x128xf32>
    %182 = vector.broadcast %10 : vector<1x128xf32> to vector<8x128xf32>
    %183 = arith.addf %181, %182 : vector<8x128xf32>
    %c3 = arith.constant 3 : index
    %c0_45 = arith.constant 0 : index
    %c0_46 = arith.constant 0 : index
    %184 = vector.load %arg10[%c3, %c0_45, %c0_46] : memref<8x8x128xf32, #tpu.memory_space<vmem>>, vector<1x8x128xf32>
    %185 = vector.shape_cast %184 : vector<1x8x128xf32> to vector<8x128xf32>
    %186 = vector.shape_cast %183 : vector<8x128xf32> to vector<1x8x128xf32>
    tpu.vector_store %arg10[%c3, %c0_45, %c0_46], %186 {strides = array<i32>} : memref<8x8x128xf32, #tpu.memory_space<vmem>>, vector<1x8x128xf32>,
    %cst_47 = arith.constant 1.000000e+00 : f32
    %187 = vector.broadcast %cst_47 : f32 to vector<8x1xf32>
    %188 = arith.subf %187, %177 : vector<8x1xf32>
    %189 = vector.broadcast %188 : vector<8x1xf32> to vector<8x128xf32>
    %190 = arith.mulf %189, %145 : vector<8x128xf32>
    %191 = arith.addf %179, %190 : vector<8x128xf32>
    %192 = vector.broadcast %177 : vector<8x1xf32> to vector<8x128xf32>
    %193 = arith.mulf %192, %171 : vector<8x128xf32>
    %194 = vector.broadcast %188 : vector<8x1xf32> to vector<8x128xf32>
    %195 = arith.mulf %194, %150 : vector<8x128xf32>
    %196 = arith.addf %193, %195 : vector<8x128xf32>
    %c32 = arith.constant 32 : index
    %c0_48 = arith.constant 0 : index
    %197 = vector.load %arg12[%c32, %c0_48] : memref<64x512xbf16, #tpu.memory_space<vmem>>, vector<8x512xbf16>
    %198 = arith.extf %197 : vector<8x512xbf16> to vector<8x512xf32>
    %199 = vector.broadcast %8 : vector<1x512xf32> to vector<8x512xf32>
    %200 = arith.addf %198, %199 : vector<8x512xf32>
    %201 = arith.truncf %191 : vector<8x128xf32> to vector<8x128xbf16>
    %cst_49 = arith.constant dense<0.000000e+00> : vector<8x512xf32>
    %202 = tpu.matmul %201, %7, %cst_49 {dimension_numbers = #tpu.dot_dimension_numbers<[1], [0], [0], [1], [0, 0, 1, 1], [], []>} : vector<8x128xbf16>, vector<128x512xbf16>, vector<8x512xf32> -> vector<8x512xf32>
    %203 = arith.addf %200, %202 : vector<8x512xf32>
    %204 = vector.extract_strided_slice %203 {offsets = [0, 0], sizes = [8, 384], strides = [1, 1]} : vector<8x512xf32> to vector<8x384xf32>
    %205 = arith.negf %204 : vector<8x384xf32>
    %206 = math.exp %205 : vector<8x384xf32>
    %cst_50 = arith.constant 1.000000e+00 : f32
    %207 = vector.broadcast %cst_50 : f32 to vector<8x384xf32>
    %208 = arith.addf %207, %206 : vector<8x384xf32>
    %209 = arith.divf %207, %208 : vector<8x384xf32>
    %210 = vector.extract_strided_slice %203 {offsets = [0, 384], sizes = [8, 128], strides = [1, 1]} : vector<8x512xf32> to vector<8x128xf32>
    %211 = math.tanh %210 : vector<8x128xf32>
    %212 = vector.extract_strided_slice %209 {offsets = [0, 0], sizes = [8, 128], strides = [1, 1]} : vector<8x384xf32> to vector<8x128xf32>
    %213 = vector.extract_strided_slice %209 {offsets = [0, 128], sizes = [8, 128], strides = [1, 1]} : vector<8x384xf32> to vector<8x128xf32>
    %214 = vector.extract_strided_slice %209 {offsets = [0, 256], sizes = [8, 128], strides = [1, 1]} : vector<8x384xf32> to vector<8x128xf32>
    %215 = arith.mulf %213, %196 : vector<8x128xf32>
    %216 = arith.mulf %212, %211 : vector<8x128xf32>
    %217 = arith.addf %215, %216 : vector<8x128xf32>
    %218 = math.tanh %217 : vector<8x128xf32>
    %219 = arith.mulf %214, %218 : vector<8x128xf32>
    %c4_i32 = arith.constant 4 : i32
    %220 = vector.broadcast %c4_i32 : i32 to vector<8x1xi32>
    %221 = arith.cmpi sgt, %6, %220 : vector<8x1xi32>
    %222 = arith.extui %221 : vector<8x1xi1> to vector<8x1xi32>
    %223 = arith.sitofp %222 : vector<8x1xi32> to vector<8x1xf32>
    %224 = vector.broadcast %223 : vector<8x1xf32> to vector<8x128xf32>
    %225 = arith.mulf %224, %219 : vector<8x128xf32>
    %226 = arith.truncf %225 : vector<8x128xf32> to vector<8x128xbf16>
    %cst_51 = arith.constant dense<0.000000e+00> : vector<8x128xf32>
    %227 = tpu.matmul %226, %9, %cst_51 {dimension_numbers = #tpu.dot_dimension_numbers<[1], [0], [0], [1], [0, 0, 1, 1], [], []>} : vector<8x128xbf16>, vector<128x128xbf16>, vector<8x128xf32> -> vector<8x128xf32>
    %228 = vector.broadcast %10 : vector<1x128xf32> to vector<8x128xf32>
    %229 = arith.addf %227, %228 : vector<8x128xf32>
    %c4 = arith.constant 4 : index
    %c0_52 = arith.constant 0 : index
    %c0_53 = arith.constant 0 : index
    %230 = vector.load %arg10[%c4, %c0_52, %c0_53] : memref<8x8x128xf32, #tpu.memory_space<vmem>>, vector<1x8x128xf32>
    %231 = vector.shape_cast %230 : vector<1x8x128xf32> to vector<8x128xf32>
    %232 = vector.shape_cast %229 : vector<8x128xf32> to vector<1x8x128xf32>
    tpu.vector_store %arg10[%c4, %c0_52, %c0_53], %232 {strides = array<i32>} : memref<8x8x128xf32, #tpu.memory_space<vmem>>, vector<1x8x128xf32>,
    %cst_54 = arith.constant 1.000000e+00 : f32
    %233 = vector.broadcast %cst_54 : f32 to vector<8x1xf32>
    %234 = arith.subf %233, %223 : vector<8x1xf32>
    %235 = vector.broadcast %234 : vector<8x1xf32> to vector<8x128xf32>
    %236 = arith.mulf %235, %191 : vector<8x128xf32>
    %237 = arith.addf %225, %236 : vector<8x128xf32>
    %238 = vector.broadcast %223 : vector<8x1xf32> to vector<8x128xf32>
    %239 = arith.mulf %238, %217 : vector<8x128xf32>
    %240 = vector.broadcast %234 : vector<8x1xf32> to vector<8x128xf32>
    %241 = arith.mulf %240, %196 : vector<8x128xf32>
    %242 = arith.addf %239, %241 : vector<8x128xf32>
    %c40 = arith.constant 40 : index
    %c0_55 = arith.constant 0 : index
    %243 = vector.load %arg12[%c40, %c0_55] : memref<64x512xbf16, #tpu.memory_space<vmem>>, vector<8x512xbf16>
    %244 = arith.extf %243 : vector<8x512xbf16> to vector<8x512xf32>
    %245 = vector.broadcast %8 : vector<1x512xf32> to vector<8x512xf32>
    %246 = arith.addf %244, %245 : vector<8x512xf32>
    %247 = arith.truncf %237 : vector<8x128xf32> to vector<8x128xbf16>
    %cst_56 = arith.constant dense<0.000000e+00> : vector<8x512xf32>
    %248 = tpu.matmul %247, %7, %cst_56 {dimension_numbers = #tpu.dot_dimension_numbers<[1], [0], [0], [1], [0, 0, 1, 1], [], []>} : vector<8x128xbf16>, vector<128x512xbf16>, vector<8x512xf32> -> vector<8x512xf32>
    %249 = arith.addf %246, %248 : vector<8x512xf32>
    %250 = vector.extract_strided_slice %249 {offsets = [0, 0], sizes = [8, 384], strides = [1, 1]} : vector<8x512xf32> to vector<8x384xf32>
    %251 = arith.negf %250 : vector<8x384xf32>
    %252 = math.exp %251 : vector<8x384xf32>
    %cst_57 = arith.constant 1.000000e+00 : f32
    %253 = vector.broadcast %cst_57 : f32 to vector<8x384xf32>
    %254 = arith.addf %253, %252 : vector<8x384xf32>
    %255 = arith.divf %253, %254 : vector<8x384xf32>
    %256 = vector.extract_strided_slice %249 {offsets = [0, 384], sizes = [8, 128], strides = [1, 1]} : vector<8x512xf32> to vector<8x128xf32>
    %257 = math.tanh %256 : vector<8x128xf32>
    %258 = vector.extract_strided_slice %255 {offsets = [0, 0], sizes = [8, 128], strides = [1, 1]} : vector<8x384xf32> to vector<8x128xf32>
    %259 = vector.extract_strided_slice %255 {offsets = [0, 128], sizes = [8, 128], strides = [1, 1]} : vector<8x384xf32> to vector<8x128xf32>
    %260 = vector.extract_strided_slice %255 {offsets = [0, 256], sizes = [8, 128], strides = [1, 1]} : vector<8x384xf32> to vector<8x128xf32>
    %261 = arith.mulf %259, %242 : vector<8x128xf32>
    %262 = arith.mulf %258, %257 : vector<8x128xf32>
    %263 = arith.addf %261, %262 : vector<8x128xf32>
    %264 = math.tanh %263 : vector<8x128xf32>
    %265 = arith.mulf %260, %264 : vector<8x128xf32>
    %c5_i32 = arith.constant 5 : i32
    %266 = vector.broadcast %c5_i32 : i32 to vector<8x1xi32>
    %267 = arith.cmpi sgt, %6, %266 : vector<8x1xi32>
    %268 = arith.extui %267 : vector<8x1xi1> to vector<8x1xi32>
    %269 = arith.sitofp %268 : vector<8x1xi32> to vector<8x1xf32>
    %270 = vector.broadcast %269 : vector<8x1xf32> to vector<8x128xf32>
    %271 = arith.mulf %270, %265 : vector<8x128xf32>
    %272 = arith.truncf %271 : vector<8x128xf32> to vector<8x128xbf16>
    %cst_58 = arith.constant dense<0.000000e+00> : vector<8x128xf32>
    %273 = tpu.matmul %272, %9, %cst_58 {dimension_numbers = #tpu.dot_dimension_numbers<[1], [0], [0], [1], [0, 0, 1, 1], [], []>} : vector<8x128xbf16>, vector<128x128xbf16>, vector<8x128xf32> -> vector<8x128xf32>
    %274 = vector.broadcast %10 : vector<1x128xf32> to vector<8x128xf32>
    %275 = arith.addf %273, %274 : vector<8x128xf32>
    %c5 = arith.constant 5 : index
    %c0_59 = arith.constant 0 : index
    %c0_60 = arith.constant 0 : index
    %276 = vector.load %arg10[%c5, %c0_59, %c0_60] : memref<8x8x128xf32, #tpu.memory_space<vmem>>, vector<1x8x128xf32>
    %277 = vector.shape_cast %276 : vector<1x8x128xf32> to vector<8x128xf32>
    %278 = vector.shape_cast %275 : vector<8x128xf32> to vector<1x8x128xf32>
    tpu.vector_store %arg10[%c5, %c0_59, %c0_60], %278 {strides = array<i32>} : memref<8x8x128xf32, #tpu.memory_space<vmem>>, vector<1x8x128xf32>,
    %cst_61 = arith.constant 1.000000e+00 : f32
    %279 = vector.broadcast %cst_61 : f32 to vector<8x1xf32>
    %280 = arith.subf %279, %269 : vector<8x1xf32>
    %281 = vector.broadcast %280 : vector<8x1xf32> to vector<8x128xf32>
    %282 = arith.mulf %281, %237 : vector<8x128xf32>
    %283 = arith.addf %271, %282 : vector<8x128xf32>
    %284 = vector.broadcast %269 : vector<8x1xf32> to vector<8x128xf32>
    %285 = arith.mulf %284, %263 : vector<8x128xf32>
    %286 = vector.broadcast %280 : vector<8x1xf32> to vector<8x128xf32>
    %287 = arith.mulf %286, %242 : vector<8x128xf32>
    %288 = arith.addf %285, %287 : vector<8x128xf32>
    %c48 = arith.constant 48 : index
    %c0_62 = arith.constant 0 : index
    %289 = vector.load %arg12[%c48, %c0_62] : memref<64x512xbf16, #tpu.memory_space<vmem>>, vector<8x512xbf16>
    %290 = arith.extf %289 : vector<8x512xbf16> to vector<8x512xf32>
    %291 = vector.broadcast %8 : vector<1x512xf32> to vector<8x512xf32>
    %292 = arith.addf %290, %291 : vector<8x512xf32>
    %293 = arith.truncf %283 : vector<8x128xf32> to vector<8x128xbf16>
    %cst_63 = arith.constant dense<0.000000e+00> : vector<8x512xf32>
    %294 = tpu.matmul %293, %7, %cst_63 {dimension_numbers = #tpu.dot_dimension_numbers<[1], [0], [0], [1], [0, 0, 1, 1], [], []>} : vector<8x128xbf16>, vector<128x512xbf16>, vector<8x512xf32> -> vector<8x512xf32>
    %295 = arith.addf %292, %294 : vector<8x512xf32>
    %296 = vector.extract_strided_slice %295 {offsets = [0, 0], sizes = [8, 384], strides = [1, 1]} : vector<8x512xf32> to vector<8x384xf32>
    %297 = arith.negf %296 : vector<8x384xf32>
    %298 = math.exp %297 : vector<8x384xf32>
    %cst_64 = arith.constant 1.000000e+00 : f32
    %299 = vector.broadcast %cst_64 : f32 to vector<8x384xf32>
    %300 = arith.addf %299, %298 : vector<8x384xf32>
    %301 = arith.divf %299, %300 : vector<8x384xf32>
    %302 = vector.extract_strided_slice %295 {offsets = [0, 384], sizes = [8, 128], strides = [1, 1]} : vector<8x512xf32> to vector<8x128xf32>
    %303 = math.tanh %302 : vector<8x128xf32>
    %304 = vector.extract_strided_slice %301 {offsets = [0, 0], sizes = [8, 128], strides = [1, 1]} : vector<8x384xf32> to vector<8x128xf32>
    %305 = vector.extract_strided_slice %301 {offsets = [0, 128], sizes = [8, 128], strides = [1, 1]} : vector<8x384xf32> to vector<8x128xf32>
    %306 = vector.extract_strided_slice %301 {offsets = [0, 256], sizes = [8, 128], strides = [1, 1]} : vector<8x384xf32> to vector<8x128xf32>
    %307 = arith.mulf %305, %288 : vector<8x128xf32>
    %308 = arith.mulf %304, %303 : vector<8x128xf32>
    %309 = arith.addf %307, %308 : vector<8x128xf32>
    %310 = math.tanh %309 : vector<8x128xf32>
    %311 = arith.mulf %306, %310 : vector<8x128xf32>
    %c6_i32 = arith.constant 6 : i32
    %312 = vector.broadcast %c6_i32 : i32 to vector<8x1xi32>
    %313 = arith.cmpi sgt, %6, %312 : vector<8x1xi32>
    %314 = arith.extui %313 : vector<8x1xi1> to vector<8x1xi32>
    %315 = arith.sitofp %314 : vector<8x1xi32> to vector<8x1xf32>
    %316 = vector.broadcast %315 : vector<8x1xf32> to vector<8x128xf32>
    %317 = arith.mulf %316, %311 : vector<8x128xf32>
    %318 = arith.truncf %317 : vector<8x128xf32> to vector<8x128xbf16>
    %cst_65 = arith.constant dense<0.000000e+00> : vector<8x128xf32>
    %319 = tpu.matmul %318, %9, %cst_65 {dimension_numbers = #tpu.dot_dimension_numbers<[1], [0], [0], [1], [0, 0, 1, 1], [], []>} : vector<8x128xbf16>, vector<128x128xbf16>, vector<8x128xf32> -> vector<8x128xf32>
    %320 = vector.broadcast %10 : vector<1x128xf32> to vector<8x128xf32>
    %321 = arith.addf %319, %320 : vector<8x128xf32>
    %c6 = arith.constant 6 : index
    %c0_66 = arith.constant 0 : index
    %c0_67 = arith.constant 0 : index
    %322 = vector.load %arg10[%c6, %c0_66, %c0_67] : memref<8x8x128xf32, #tpu.memory_space<vmem>>, vector<1x8x128xf32>
    %323 = vector.shape_cast %322 : vector<1x8x128xf32> to vector<8x128xf32>
    %324 = vector.shape_cast %321 : vector<8x128xf32> to vector<1x8x128xf32>
    tpu.vector_store %arg10[%c6, %c0_66, %c0_67], %324 {strides = array<i32>} : memref<8x8x128xf32, #tpu.memory_space<vmem>>, vector<1x8x128xf32>,
    %cst_68 = arith.constant 1.000000e+00 : f32
    %325 = vector.broadcast %cst_68 : f32 to vector<8x1xf32>
    %326 = arith.subf %325, %315 : vector<8x1xf32>
    %327 = vector.broadcast %326 : vector<8x1xf32> to vector<8x128xf32>
    %328 = arith.mulf %327, %283 : vector<8x128xf32>
    %329 = arith.addf %317, %328 : vector<8x128xf32>
    %330 = vector.broadcast %315 : vector<8x1xf32> to vector<8x128xf32>
    %331 = arith.mulf %330, %309 : vector<8x128xf32>
    %332 = vector.broadcast %326 : vector<8x1xf32> to vector<8x128xf32>
    %333 = arith.mulf %332, %288 : vector<8x128xf32>
    %334 = arith.addf %331, %333 : vector<8x128xf32>
    %c56 = arith.constant 56 : index
    %c0_69 = arith.constant 0 : index
    %335 = vector.load %arg12[%c56, %c0_69] : memref<64x512xbf16, #tpu.memory_space<vmem>>, vector<8x512xbf16>
    %336 = arith.extf %335 : vector<8x512xbf16> to vector<8x512xf32>
    %337 = vector.broadcast %8 : vector<1x512xf32> to vector<8x512xf32>
    %338 = arith.addf %336, %337 : vector<8x512xf32>
    %339 = arith.truncf %329 : vector<8x128xf32> to vector<8x128xbf16>
    %cst_70 = arith.constant dense<0.000000e+00> : vector<8x512xf32>
    %340 = tpu.matmul %339, %7, %cst_70 {dimension_numbers = #tpu.dot_dimension_numbers<[1], [0], [0], [1], [0, 0, 1, 1], [], []>} : vector<8x128xbf16>, vector<128x512xbf16>, vector<8x512xf32> -> vector<8x512xf32>
    %341 = arith.addf %338, %340 : vector<8x512xf32>
    %342 = vector.extract_strided_slice %341 {offsets = [0, 0], sizes = [8, 384], strides = [1, 1]} : vector<8x512xf32> to vector<8x384xf32>
    %343 = arith.negf %342 : vector<8x384xf32>
    %344 = math.exp %343 : vector<8x384xf32>
    %cst_71 = arith.constant 1.000000e+00 : f32
    %345 = vector.broadcast %cst_71 : f32 to vector<8x384xf32>
    %346 = arith.addf %345, %344 : vector<8x384xf32>
    %347 = arith.divf %345, %346 : vector<8x384xf32>
    %348 = vector.extract_strided_slice %341 {offsets = [0, 384], sizes = [8, 128], strides = [1, 1]} : vector<8x512xf32> to vector<8x128xf32>
    %349 = math.tanh %348 : vector<8x128xf32>
    %350 = vector.extract_strided_slice %347 {offsets = [0, 0], sizes = [8, 128], strides = [1, 1]} : vector<8x384xf32> to vector<8x128xf32>
    %351 = vector.extract_strided_slice %347 {offsets = [0, 128], sizes = [8, 128], strides = [1, 1]} : vector<8x384xf32> to vector<8x128xf32>
    %352 = vector.extract_strided_slice %347 {offsets = [0, 256], sizes = [8, 128], strides = [1, 1]} : vector<8x384xf32> to vector<8x128xf32>
    %353 = arith.mulf %351, %334 : vector<8x128xf32>
    %354 = arith.mulf %350, %349 : vector<8x128xf32>
    %355 = arith.addf %353, %354 : vector<8x128xf32>
    %356 = math.tanh %355 : vector<8x128xf32>
    %357 = arith.mulf %352, %356 : vector<8x128xf32>
    %c7_i32 = arith.constant 7 : i32
    %358 = vector.broadcast %c7_i32 : i32 to vector<8x1xi32>
    %359 = arith.cmpi sgt, %6, %358 : vector<8x1xi32>
    %360 = arith.extui %359 : vector<8x1xi1> to vector<8x1xi32>
    %361 = arith.sitofp %360 : vector<8x1xi32> to vector<8x1xf32>
    %362 = vector.broadcast %361 : vector<8x1xf32> to vector<8x128xf32>
    %363 = arith.mulf %362, %357 : vector<8x128xf32>
    %364 = arith.truncf %363 : vector<8x128xf32> to vector<8x128xbf16>
    %cst_72 = arith.constant dense<0.000000e+00> : vector<8x128xf32>
    %365 = tpu.matmul %364, %9, %cst_72 {dimension_numbers = #tpu.dot_dimension_numbers<[1], [0], [0], [1], [0, 0, 1, 1], [], []>} : vector<8x128xbf16>, vector<128x128xbf16>, vector<8x128xf32> -> vector<8x128xf32>
    %366 = vector.broadcast %10 : vector<1x128xf32> to vector<8x128xf32>
    %367 = arith.addf %365, %366 : vector<8x128xf32>
    %c7 = arith.constant 7 : index
    %c0_73 = arith.constant 0 : index
    %c0_74 = arith.constant 0 : index
    %368 = vector.load %arg10[%c7, %c0_73, %c0_74] : memref<8x8x128xf32, #tpu.memory_space<vmem>>, vector<1x8x128xf32>
    %369 = vector.shape_cast %368 : vector<1x8x128xf32> to vector<8x128xf32>
    %370 = vector.shape_cast %367 : vector<8x128xf32> to vector<1x8x128xf32>
    tpu.vector_store %arg10[%c7, %c0_73, %c0_74], %370 {strides = array<i32>} : memref<8x8x128xf32, #tpu.memory_space<vmem>>, vector<1x8x128xf32>,
    %cst_75 = arith.constant 1.000000e+00 : f32
    %371 = vector.broadcast %cst_75 : f32 to vector<8x1xf32>
    %372 = arith.subf %371, %361 : vector<8x1xf32>
    %373 = vector.broadcast %372 : vector<8x1xf32> to vector<8x128xf32>
    %374 = arith.mulf %373, %329 : vector<8x128xf32>
    %375 = arith.addf %363, %374 : vector<8x128xf32>
    %376 = arith.truncf %375 : vector<8x128xf32> to vector<8x128xbf16>
    %c0_76 = arith.constant 0 : index
    %c0_77 = arith.constant 0 : index
    %377 = vector.load %arg8[%c0_76, %c0_77] : memref<128x128xbf16, #tpu.memory_space<vmem>>, vector<128x128xbf16>
    %cst_78 = arith.constant dense<0.000000e+00> : vector<8x128xf32>
    %378 = tpu.matmul %376, %377, %cst_78 {dimension_numbers = #tpu.dot_dimension_numbers<[1], [0], [0], [1], [0, 0, 1, 1], [], []>} : vector<8x128xbf16>, vector<128x128xbf16>, vector<8x128xf32> -> vector<8x128xf32>
    %c0_79 = arith.constant 0 : index
    %c0_80 = arith.constant 0 : index
    %379 = vector.load %arg9[%c0_79, %c0_80] : memref<1x128xf32, #tpu.memory_space<vmem>>, vector<1x128xf32>
    %380 = vector.broadcast %379 : vector<1x128xf32> to vector<8x128xf32>
    %381 = arith.addf %378, %380 : vector<8x128xf32>
    %c0_81 = arith.constant 0 : index
    %c0_82 = arith.constant 0 : index
    %382 = vector.load %arg11[%c0_81, %c0_82] : memref<8x128xf32, #tpu.memory_space<vmem>>, vector<8x128xf32>
    tpu.vector_store %arg11[%c0_81, %c0_82], %381 {strides = array<i32>} : memref<8x128xf32, #tpu.memory_space<vmem>>, vector<8x128xf32>,
    return
  }
  func.func @transform_0(%arg0: i32) -> (i32, i32, i32) {
    %c0_i32 = arith.constant 0 : i32
    %c0_i32_0 = arith.constant 0 : i32
    %c0_i32_1 = arith.constant 0 : i32
    return %c0_i32, %arg0, %c0_i32_0 : i32, i32, i32
  }
  func.func @transform_1(%arg0: i32) -> (i32, i32) {
    %c0_i32 = arith.constant 0 : i32
    %c0_i32_0 = arith.constant 0 : i32
    return %arg0, %c0_i32 : i32, i32
  }
  func.func @transform_2(%arg0: i32) -> (i32, i32) {
    %c0_i32 = arith.constant 0 : i32
    %c0_i32_0 = arith.constant 0 : i32
    %c0_i32_1 = arith.constant 0 : i32
    return %c0_i32, %c0_i32_0 : i32, i32
  }
  func.func @transform_3(%arg0: i32) -> (i32, i32) {
    %c0_i32 = arith.constant 0 : i32
    %c0_i32_0 = arith.constant 0 : i32
    %c0_i32_1 = arith.constant 0 : i32
    return %c0_i32, %c0_i32_0 : i32, i32
  }
  func.func @transform_4(%arg0: i32) -> (i32, i32) {
    %c0_i32 = arith.constant 0 : i32
    %c0_i32_0 = arith.constant 0 : i32
    %c0_i32_1 = arith.constant 0 : i32
    return %c0_i32, %c0_i32_0 : i32, i32
  }
  func.func @transform_5(%arg0: i32) -> (i32, i32) {
    %c0_i32 = arith.constant 0 : i32
    %c0_i32_0 = arith.constant 0 : i32
    %c0_i32_1 = arith.constant 0 : i32
    return %c0_i32, %c0_i32_0 : i32, i32
  }
  func.func @transform_6(%arg0: i32) -> (i32, i32) {
    %c0_i32 = arith.constant 0 : i32
    %c0_i32_0 = arith.constant 0 : i32
    %c0_i32_1 = arith.constant 0 : i32
    return %c0_i32, %c0_i32_0 : i32, i32
  }
  func.func @transform_7(%arg0: i32) -> (i32, i32) {
    %c0_i32 = arith.constant 0 : i32
    %c0_i32_0 = arith.constant 0 : i32
    %c0_i32_1 = arith.constant 0 : i32
    return %c0_i32, %c0_i32_0 : i32, i32
  }
  func.func @transform_8(%arg0: i32) -> (i32, i32) {
    %c0_i32 = arith.constant 0 : i32
    %c0_i32_0 = arith.constant 0 : i32
    %c0_i32_1 = arith.constant 0 : i32
    return %c0_i32, %c0_i32_0 : i32, i32
  }
  func.func @transform_9(%arg0: i32) -> (i32, i32, i32) {
    %c0_i32 = arith.constant 0 : i32
    %c0_i32_0 = arith.constant 0 : i32
    %c0_i32_1 = arith.constant 0 : i32
    return %c0_i32, %arg0, %c0_i32_0 : i32, i32, i32
  }
  func.func @transform_10(%arg0: i32) -> (i32, i32) {
    %c0_i32 = arith.constant 0 : i32
    %c0_i32_0 = arith.constant 0 : i32
    return %arg0, %c0_i32 : i32, i32
  }
}

</mosaic_0001>

<llo_original>
// kernel: _lambda_.1
$region0: #{_lambda_.1}
  #allocation0 [shape = 'u32[]', space=smem, size = 0x4, offset = 0x4, fixed_abs, tag = 'smem constant byte address 0x4 - core index']
  #allocation1 [shape = 'u32[144,128]{1,0:T(1,128)}', space=vmem, size = 0x12000, scoped, tag = 'internal scratch']
  #allocation2 [shape = 'bf16[64,512]{1,0:T(8,128)(2,1)}', space=vmem, size = 0x10000, scoped, tag = 'scratch operand']
  %s0 = inlined_call_operand.vmem [shape: bf16[8,16,32], index: 0, kind: input, shape index: {}]
  %s1 = inlined_call_operand.vmem [shape: s32[16,1], index: 1, kind: input, shape index: {}]
  %s2 = inlined_call_operand.vmem [shape: bf16[32,512], index: 2, kind: input, shape index: {}]
  %s3 = inlined_call_operand.vmem [shape: bf16[128,512], index: 3, kind: input, shape index: {}]
  %s4 = inlined_call_operand.vmem [shape: f32[1,512], index: 4, kind: input, shape index: {}]
  %s5 = inlined_call_operand.vmem [shape: bf16[128,128], index: 5, kind: input, shape index: {}]
  %s6 = inlined_call_operand.vmem [shape: f32[1,128], index: 6, kind: input, shape index: {}]
  %s7 = inlined_call_operand.vmem [shape: bf16[128,128], index: 7, kind: input, shape index: {}]
  %s8 = inlined_call_operand.vmem [shape: f32[1,128], index: 8, kind: input, shape index: {}]
  %s9 = inlined_call_operand.vmem [shape: f32[8,16,128], index: 9, kind: output, shape index: {0}]
  %s10 = inlined_call_operand.vmem [shape: f32[16,128], index: 10, kind: output, shape index: {1}]
  %11 = xla_tuple %s9, %s10
  %s12 = sld [smem:[#allocation0]]
  $region152: #{_lambda_.1} parent=0
    _
  %s14 = ssub.s32 1, %s12
  %s15 = scalar_select 0, %s14, %s12
  $region1: #{_lambda_.1} parent=0
    #allocation3 [shape = 'u8[32768]{0}', space=vmem, size = 0x8000, scoped, tag = 'input window, operand 0']
    #allocation4 [shape = 'u8[65536]{0}', space=vmem, size = 0x10000, scoped, tag = 'output window, operand 0']
    loop: start=0, step=1, limit=4
    $region2: #{_lambda_.1} parent=1 // loop_pre_header
      _
    $region3: #{_lambda_.1} parent=1 // loop_header
      %s17 = sphi 0, %s21
      %p18 = scmp.ge.s32.totalorder %s17, 4
      %s27 = sphi 0, %s29
      %s30 = sphi 0, %s27
      %s31 = sphi 0, %s30
      %s47 = sphi 0, %s31
      %s53 = sphi 0, %s55
      %s56 = sphi 0, %s53
      %s57 = sphi 0, %s56
      %s73 = sphi 0, %s57
      %s77 = sphi 0, %s77
      %s79 = sphi 0, %s77
      %s80 = sphi 0, %s79
      %s94 = sphi 0, %s80
      %s98 = sphi 0, %s98
      %s100 = sphi 0, %s98
      %s101 = sphi 0, %s100
      %s115 = sphi 0, %s101
      %s119 = sphi 0, %s119
      %s121 = sphi 0, %s119
      %s122 = sphi 0, %s121
      %s136 = sphi 0, %s122
      %s140 = sphi 0, %s140
      %s142 = sphi 0, %s140
      %s143 = sphi 0, %s142
      %s157 = sphi 0, %s143
      %s161 = sphi 0, %s161
      %s163 = sphi 0, %s161
      %s164 = sphi 0, %s163
      %s178 = sphi 0, %s164
      %s182 = sphi 0, %s182
      %s184 = sphi 0, %s182
      %s185 = sphi 0, %s184
      %s199 = sphi 0, %s185
      %s203 = sphi 0, %s203
      %s205 = sphi 0, %s203
      %s206 = sphi 0, %s205
      %s220 = sphi 0, %s206
      %s226 = sphi 0, %s228
      %s229 = sphi 0, %s226
      %s230 = sphi 0, %s229
      %s246 = sphi 0, %s230
      %s252 = sphi 0, %s254
      %s255 = sphi 0, %s252
      %s256 = sphi 0, %s255
      %s272 = sphi 0, %s256
    $region4: #{_lambda_.1} parent=1 // loop_header_branch
      %20 = sbr.rel (%p18) target = $region8
    $region5: #{_lambda_.1} parent=1 // loop_body
      %s22 = ssub.s32 %s17, 1
      %s23 = ssub.s32 %s17, 2
      %s24 = sadd.s32 %s17, 1
      %s25 = ssub.s32 %s17, %s24
      %p26 = scmp.eq.s32.totalorder %s25, 0
      %s28 = sadd.s32 %s27, 1
      %s29 = scalar_select %p26, %s27, %s28
      %p32 = pneg %p26
      %p33 = scmp.eq.s32.totalorder %s17, 1
      %p34 = por %p32, %p33
      %p35 = scmp.ne.s32.totalorder %s27, %s30
      %p36 = scmp.eq.s32.totalorder %s17, 0
      %p37 = por %p35, %p36
      %p38 = scmp.ne.s32.totalorder %s27, %s30
      %p39 = scmp.eq.s32.totalorder %s22, 1
      %p40 = por %p38, %p39
      %p41 = scmp.ne.s32.totalorder %s30, %s31
      %p42 = scmp.eq.s32.totalorder %s22, 0
      %p43 = por %p41, %p42
      %p44 = scmp.ne.s32.totalorder %s30, %s31
      %p45 = scmp.eq.s32.totalorder %s23, 1
      %p46 = por %p44, %p45
      %p48 = scmp.ne.s32.totalorder %s31, %s47
      %p49 = scmp.eq.s32.totalorder %s23, 0
      %p50 = por %p48, %p49
      %s51 = ssub.s32 %s17, %s24
      %p52 = scmp.eq.s32.totalorder %s51, 0
      %s54 = sadd.s32 %s53, 1
      %s55 = scalar_select %p52, %s53, %s54
      %p58 = pneg %p52
      %p59 = scmp.eq.s32.totalorder %s17, 1
      %p60 = por %p58, %p59
      %p61 = scmp.ne.s32.totalorder %s53, %s56
      %p62 = scmp.eq.s32.totalorder %s17, 0
      %p63 = por %p61, %p62
      %p64 = scmp.ne.s32.totalorder %s53, %s56
      %p65 = scmp.eq.s32.totalorder %s22, 1
      %p66 = por %p64, %p65
      %p67 = scmp.ne.s32.totalorder %s56, %s57
      %p68 = scmp.eq.s32.totalorder %s22, 0
      %p69 = por %p67, %p68
      %p70 = scmp.ne.s32.totalorder %s56, %s57
      %p71 = scmp.eq.s32.totalorder %s23, 1
      %p72 = por %p70, %p71
      %p74 = scmp.ne.s32.totalorder %s57, %s73
      %p75 = scmp.eq.s32.totalorder %s23, 0
      %p76 = por %p74, %p75
      %s78 = sadd.s32 %s77, 1
      %p81 = scmp.eq.s32.totalorder %s17, 1
      %p82 = scmp.ne.s32.totalorder %s77, %s79
      %p83 = scmp.eq.s32.totalorder %s17, 0
      %p84 = por %p82, %p83
      %p85 = scmp.ne.s32.totalorder %s77, %s79
      %p86 = scmp.eq.s32.totalorder %s22, 1
      %p87 = por %p85, %p86
      %p88 = scmp.ne.s32.totalorder %s79, %s80
      %p89 = scmp.eq.s32.totalorder %s22, 0
      %p90 = por %p88, %p89
      %p91 = scmp.ne.s32.totalorder %s79, %s80
      %p92 = scmp.eq.s32.totalorder %s23, 1
      %p93 = por %p91, %p92
      %p95 = scmp.ne.s32.totalorder %s80, %s94
      %p96 = scmp.eq.s32.totalorder %s23, 0
      %p97 = por %p95, %p96
      %s99 = sadd.s32 %s98, 1
      %p102 = scmp.eq.s32.totalorder %s17, 1
      %p103 = scmp.ne.s32.totalorder %s98, %s100
      %p104 = scmp.eq.s32.totalorder %s17, 0
      %p105 = por %p103, %p104
      %p106 = scmp.ne.s32.totalorder %s98, %s100
      %p107 = scmp.eq.s32.totalorder %s22, 1
      %p108 = por %p106, %p107
      %p109 = scmp.ne.s32.totalorder %s100, %s101
      %p110 = scmp.eq.s32.totalorder %s22, 0
      %p111 = por %p109, %p110
      %p112 = scmp.ne.s32.totalorder %s100, %s101
      %p113 = scmp.eq.s32.totalorder %s23, 1
      %p114 = por %p112, %p113
      %p116 = scmp.ne.s32.totalorder %s101, %s115
      %p117 = scmp.eq.s32.totalorder %s23, 0
      %p118 = por %p116, %p117
      %s120 = sadd.s32 %s119, 1
      %p123 = scmp.eq.s32.totalorder %s17, 1
      %p124 = scmp.ne.s32.totalorder %s119, %s121
      %p125 = scmp.eq.s32.totalorder %s17, 0
      %p126 = por %p124, %p125
      %p127 = scmp.ne.s32.totalorder %s119, %s121
      %p128 = scmp.eq.s32.totalorder %s22, 1
      %p129 = por %p127, %p128
      %p130 = scmp.ne.s32.totalorder %s121, %s122
      %p131 = scmp.eq.s32.totalorder %s22, 0
      %p132 = por %p130, %p131
      %p133 = scmp.ne.s32.totalorder %s121, %s122
      %p134 = scmp.eq.s32.totalorder %s23, 1
      %p135 = por %p133, %p134
      %p137 = scmp.ne.s32.totalorder %s122, %s136
      %p138 = scmp.eq.s32.totalorder %s23, 0
      %p139 = por %p137, %p138
      %s141 = sadd.s32 %s140, 1
      %p144 = scmp.eq.s32.totalorder %s17, 1
      %p145 = scmp.ne.s32.totalorder %s140, %s142
      %p146 = scmp.eq.s32.totalorder %s17, 0
      %p147 = por %p145, %p146
      %p148 = scmp.ne.s32.totalorder %s140, %s142
      %p149 = scmp.eq.s32.totalorder %s22, 1
      %p150 = por %p148, %p149
      %p151 = scmp.ne.s32.totalorder %s142, %s143
      %p152 = scmp.eq.s32.totalorder %s22, 0
      %p153 = por %p151, %p152
      %p154 = scmp.ne.s32.totalorder %s142, %s143
      %p155 = scmp.eq.s32.totalorder %s23, 1
      %p156 = por %p154, %p155
      %p158 = scmp.ne.s32.totalorder %s143, %s157
      %p159 = scmp.eq.s32.totalorder %s23, 0
      %p160 = por %p158, %p159
      %s162 = sadd.s32 %s161, 1
      %p165 = scmp.eq.s32.totalorder %s17, 1
      %p166 = scmp.ne.s32.totalorder %s161, %s163
      %p167 = scmp.eq.s32.totalorder %s17, 0
      %p168 = por %p166, %p167
      %p169 = scmp.ne.s32.totalorder %s161, %s163
      %p170 = scmp.eq.s32.totalorder %s22, 1
      %p171 = por %p169, %p170
      %p172 = scmp.ne.s32.totalorder %s163, %s164
      %p173 = scmp.eq.s32.totalorder %s22, 0
      %p174 = por %p172, %p173
      %p175 = scmp.ne.s32.totalorder %s163, %s164
      %p176 = scmp.eq.s32.totalorder %s23, 1
      %p177 = por %p175, %p176
      %p179 = scmp.ne.s32.totalorder %s164, %s178
      %p180 = scmp.eq.s32.totalorder %s23, 0
      %p181 = por %p179, %p180
      %s183 = sadd.s32 %s182, 1
      %p186 = scmp.eq.s32.totalorder %s17, 1
      %p187 = scmp.ne.s32.totalorder %s182, %s184
      %p188 = scmp.eq.s32.totalorder %s17, 0
      %p189 = por %p187, %p188
      %p190 = scmp.ne.s32.totalorder %s182, %s184
      %p191 = scmp.eq.s32.totalorder %s22, 1
      %p192 = por %p190, %p191
      %p193 = scmp.ne.s32.totalorder %s184, %s185
      %p194 = scmp.eq.s32.totalorder %s22, 0
      %p195 = por %p193, %p194
      %p196 = scmp.ne.s32.totalorder %s184, %s185
      %p197 = scmp.eq.s32.totalorder %s23, 1
      %p198 = por %p196, %p197
      %p200 = scmp.ne.s32.totalorder %s185, %s199
      %p201 = scmp.eq.s32.totalorder %s23, 0
      %p202 = por %p200, %p201
      %s204 = sadd.s32 %s203, 1
      %p207 = scmp.eq.s32.totalorder %s17, 1
      %p208 = scmp.ne.s32.totalorder %s203, %s205
      %p209 = scmp.eq.s32.totalorder %s17, 0
      %p210 = por %p208, %p209
      %p211 = scmp.ne.s32.totalorder %s203, %s205
      %p212 = scmp.eq.s32.totalorder %s22, 1
      %p213 = por %p211, %p212
      %p214 = scmp.ne.s32.totalorder %s205, %s206
      %p215 = scmp.eq.s32.totalorder %s22, 0
      %p216 = por %p214, %p215
      %p217 = scmp.ne.s32.totalorder %s205, %s206
      %p218 = scmp.eq.s32.totalorder %s23, 1
      %p219 = por %p217, %p218
      %p221 = scmp.ne.s32.totalorder %s206, %s220
      %p222 = scmp.eq.s32.totalorder %s23, 0
      %p223 = por %p221, %p222
      %s224 = ssub.s32 %s17, %s24
      %p225 = scmp.eq.s32.totalorder %s224, 0
      %s227 = sadd.s32 %s226, 1
      %s228 = scalar_select %p225, %s226, %s227
      %p231 = pneg %p225
      %p232 = scmp.eq.s32.totalorder %s17, 1
      %p233 = por %p231, %p232
      %p234 = scmp.ne.s32.totalorder %s226, %s229
      %p235 = scmp.eq.s32.totalorder %s17, 0
      %p236 = por %p234, %p235
      %p237 = scmp.ne.s32.totalorder %s226, %s229
      %p238 = scmp.eq.s32.totalorder %s22, 1
      %p239 = por %p237, %p238
      %p240 = scmp.ne.s32.totalorder %s229, %s230
      %p241 = scmp.eq.s32.totalorder %s22, 0
      %p242 = por %p240, %p241
      %p243 = scmp.ne.s32.totalorder %s229, %s230
      %p244 = scmp.eq.s32.totalorder %s23, 1
      %p245 = por %p243, %p244
      %p247 = scmp.ne.s32.totalorder %s230, %s246
      %p248 = scmp.eq.s32.totalorder %s23, 0
      %p249 = por %p247, %p248
      %s250 = ssub.s32 %s17, %s24
      %p251 = scmp.eq.s32.totalorder %s250, 0
      %s253 = sadd.s32 %s252, 1
      %s254 = scalar_select %p251, %s252, %s253
      %p257 = pneg %p251
      %p258 = scmp.eq.s32.totalorder %s17, 1
      %p259 = por %p257, %p258
      %p260 = scmp.ne.s32.totalorder %s252, %s255
      %p261 = scmp.eq.s32.totalorder %s17, 0
      %p262 = por %p260, %p261
      %p263 = scmp.ne.s32.totalorder %s252, %s255
      %p264 = scmp.eq.s32.totalorder %s22, 1
      %p265 = por %p263, %p264
      %p266 = scmp.ne.s32.totalorder %s255, %s256
      %p267 = scmp.eq.s32.totalorder %s22, 0
      %p268 = por %p266, %p267
      %p269 = scmp.ne.s32.totalorder %s255, %s256
      %p270 = scmp.eq.s32.totalorder %s23, 1
      %p271 = por %p269, %p270
      %p273 = scmp.ne.s32.totalorder %s256, %s272
      %p274 = scmp.eq.s32.totalorder %s23, 0
      %p275 = por %p273, %p274
      %p276 = scmp.le.s32.totalorder 1, %s17
      %p277 = scmp.lt.s32.totalorder %s17, 3
      %p278 = pnand %p276, %p277
      %p279 = pneg %p278
      // Predicated region
      $region9: #{_lambda_.1} parent=5 // pred_check
        _
      $region10: #{_lambda_.1} parent=5 // pred_check_branch
        %281 = sbr.rel (%p278) target = $region12
      $region11: #{_lambda_.1} parent=5 // pred_region
        %s282 = ssub.s32 %s17, 1
        // Predicated region
        $region13: #{_lambda_.1} parent=11 // pred_check
          %p283 = pneg %p90
        $region14: #{_lambda_.1} parent=11 // pred_check_branch
          %285 = sbr.rel (%p283) target = $region16
        $region15: #{_lambda_.1} parent=11 // pred_region
          _
        $region16: #{_lambda_.1} parent=11 // pred_fallthru
          _
        // Predicated region
        $region17: #{_lambda_.1} parent=11 // pred_check
          %p286 = pneg %p111
        $region18: #{_lambda_.1} parent=11 // pred_check_branch
          %288 = sbr.rel (%p286) target = $region20
        $region19: #{_lambda_.1} parent=11 // pred_region
          _
        $region20: #{_lambda_.1} parent=11 // pred_fallthru
          _
        // Predicated region
        $region21: #{_lambda_.1} parent=11 // pred_check
          %p289 = pneg %p132
        $region22: #{_lambda_.1} parent=11 // pred_check_branch
          %291 = sbr.rel (%p289) target = $region24
        $region23: #{_lambda_.1} parent=11 // pred_region
          _
        $region24: #{_lambda_.1} parent=11 // pred_fallthru
          _
        // Predicated region
        $region25: #{_lambda_.1} parent=11 // pred_check
          %p292 = pneg %p153
        $region26: #{_lambda_.1} parent=11 // pred_check_branch
          %294 = sbr.rel (%p292) target = $region28
        $region27: #{_lambda_.1} parent=11 // pred_region
          _
        $region28: #{_lambda_.1} parent=11 // pred_fallthru
          _
        // Predicated region
        $region29: #{_lambda_.1} parent=11 // pred_check
          %p295 = pneg %p174
        $region30: #{_lambda_.1} parent=11 // pred_check_branch
          %297 = sbr.rel (%p295) target = $region32
        $region31: #{_lambda_.1} parent=11 // pred_region
          _
        $region32: #{_lambda_.1} parent=11 // pred_fallthru
          _
        // Predicated region
        $region33: #{_lambda_.1} parent=11 // pred_check
          %p298 = pneg %p195
        $region34: #{_lambda_.1} parent=11 // pred_check_branch
          %300 = sbr.rel (%p298) target = $region36
        $region35: #{_lambda_.1} parent=11 // pred_region
          _
        $region36: #{_lambda_.1} parent=11 // pred_fallthru
          _
        // Predicated region
        $region37: #{_lambda_.1} parent=11 // pred_check
          %p301 = pneg %p216
        $region38: #{_lambda_.1} parent=11 // pred_check_branch
          %303 = sbr.rel (%p301) target = $region40
        $region39: #{_lambda_.1} parent=11 // pred_region
          _
        $region40: #{_lambda_.1} parent=11 // pred_fallthru
          _
      $region12: #{_lambda_.1} parent=5 // pred_fallthru
        _
      %p304 = scmp.lt.s32.totalorder %s17, 2
      // Predicated region
      $region41: #{_lambda_.1} parent=5 // pred_check
        %p305 = pneg %p304
      $region42: #{_lambda_.1} parent=5 // pred_check_branch
        %307 = sbr.rel (%p305) target = $region44
      $region43: #{_lambda_.1} parent=5 // pred_region
        // Predicated region
        $region45: #{_lambda_.1} parent=43 // pred_check
          %p308 = pneg %p37
        $region46: #{_lambda_.1} parent=43 // pred_check_branch
          %310 = sbr.rel (%p308) target = $region48
        $region47: #{_lambda_.1} parent=43 // pred_region
          %s311 = sand.u32 %s27, 1
          %s312 = sand.u32 %s27, 1
          %s313 = smul.addr %s312, 32
          %s314 = scalar_lea.vmem [#allocation3], %s313
          %s315 = smul.addr %s17, 4
          %s316 = scalar_lea.vmem %s0, %s315
          // Predicated region
          $region49: #{_lambda_.1} parent=47 // pred_check
            _
          $region50: #{_lambda_.1} parent=47 // pred_check_branch
            %318 = sbr.rel (0) target = $region52
          $region51: #{_lambda_.1} parent=47 // pred_region
            // Predicated region
            $region53: #{_lambda_.1} parent=51 // pred_check
              _
            $region54: #{_lambda_.1} parent=51 // pred_check_branch
              %320 = sbr.rel target = $region56
            $region55: #{_lambda_.1} parent=51 // pred_region
              // Predicated region
              $region68: #{_lambda_.1} parent=55 // pred_check
                _
              $region69: #{_lambda_.1} parent=55 // pred_check_branch
                %350 = sbr.rel (0) target = $region71
              $region70: #{_lambda_.1} parent=55 // pred_region
                loop: start=0, step=1, limit=1
                $region72: #{_lambda_.1} parent=70 // loop_pre_header
                  _
                $region73: #{_lambda_.1} parent=70 // loop_header
                  %s352 = sphi 0, %s356
                  %p353 = scmp.ge.s32.totalorder %s352, 1
                  %s357 = sphi %s316, %s316
                  %s358 = sphi %s314, %s314
                $region74: #{_lambda_.1} parent=70 // loop_header_branch
                  %355 = sbr.rel (%p353) target = $region78
                $region75: #{_lambda_.1} parent=70 // loop_body
                  _
                $region76: #{_lambda_.1} parent=70 // loop_footer
                  %s356 = sadd.s32 1, %s352
                $region77: #{_lambda_.1} parent=70 // loop_footer_branch
                  %351 = sbr.rel target = $region73
                $region78: #{_lambda_.1} parent=70 // loop_exit
                  _
                %s360 = ssub.s32 16, 1
                loop: start=0, step=1, limit=1
                $region79: #{_lambda_.1} parent=70 // loop_pre_header
                  _
                $region80: #{_lambda_.1} parent=70 // loop_header
                  %s362 = sphi 0, %s366
                  %p363 = scmp.ge.s32.totalorder %s362, 1
                  %s367 = sphi %s316, %s316
                  %s368 = sphi %s314, %s314
                $region81: #{_lambda_.1} parent=70 // loop_header_branch
                  %365 = sbr.rel (%p363) target = $region85
                $region82: #{_lambda_.1} parent=70 // loop_body
                  %v369 = vld [vmem:[%s367] sm:%s360]
                  %370 = vst [vmem:[%s368] sm:%s360] %v369
                  %v371 = vld [vmem:[%s367 + $0x8] sm:%s360]
                  %372 = vst [vmem:[%s368 + $0x4] sm:%s360] %v371
                  %v373 = vld [vmem:[%s367 + $0x10] sm:%s360]
                  %374 = vst [vmem:[%s368 + $0x8] sm:%s360] %v373
                  %v375 = vld [vmem:[%s367 + $0x18] sm:%s360]
                  %376 = vst [vmem:[%s368 + $0xc] sm:%s360] %v375
                  %v377 = vld [vmem:[%s367 + $0x20] sm:%s360]
                  %378 = vst [vmem:[%s368 + $0x10] sm:%s360] %v377
                  %v379 = vld [vmem:[%s367 + $0x28] sm:%s360]
                  %380 = vst [vmem:[%s368 + $0x14] sm:%s360] %v379
                  %v381 = vld [vmem:[%s367 + $0x30] sm:%s360]
                  %382 = vst [vmem:[%s368 + $0x18] sm:%s360] %v381
                  %v383 = vld [vmem:[%s367 + $0x38] sm:%s360]
                  %384 = vst [vmem:[%s368 + $0x1c] sm:%s360] %v383
                $region83: #{_lambda_.1} parent=70 // loop_footer
                  %s366 = sadd.s32 1, %s362
                $region84: #{_lambda_.1} parent=70 // loop_footer_branch
                  %361 = sbr.rel target = $region80
                $region85: #{_lambda_.1} parent=70 // loop_exit
                  _
              $region71: #{_lambda_.1} parent=55 // pred_fallthru
                _
            $region56: #{_lambda_.1} parent=51 // pred_fallthru
              _
            // Predicated region
            $region57: #{_lambda_.1} parent=51 // pred_check
              _
            $region58: #{_lambda_.1} parent=51 // pred_check_branch
              %322 = sbr.rel (0) target = $region60
            $region59: #{_lambda_.1} parent=51 // pred_region
              %s324 = ssub.s32 16, 1
              loop: start=0, step=1, limit=1
              $region61: #{_lambda_.1} parent=59 // loop_pre_header
                _
              $region62: #{_lambda_.1} parent=59 // loop_header
                %s326 = sphi 0, %s330
                %p327 = scmp.ge.s32.totalorder %s326, 1
                %s331 = sphi %s316, %s316
                %s332 = sphi %s314, %s314
              $region63: #{_lambda_.1} parent=59 // loop_header_branch
                %329 = sbr.rel (%p327) target = $region67
              $region64: #{_lambda_.1} parent=59 // loop_body
                %v333 = vld [vmem:[%s331] sm:%s324]
                %334 = vst [vmem:[%s332] sm:%s324] %v333
                %v335 = vld [vmem:[%s331 + $0x8] sm:%s324]
                %336 = vst [vmem:[%s332 + $0x4] sm:%s324] %v335
                %v337 = vld [vmem:[%s331 + $0x10] sm:%s324]
                %338 = vst [vmem:[%s332 + $0x8] sm:%s324] %v337
                %v339 = vld [vmem:[%s331 + $0x18] sm:%s324]
                %340 = vst [vmem:[%s332 + $0xc] sm:%s324] %v339
                %v341 = vld [vmem:[%s331 + $0x20] sm:%s324]
                %342 = vst [vmem:[%s332 + $0x10] sm:%s324] %v341
                %v343 = vld [vmem:[%s331 + $0x28] sm:%s324]
                %344 = vst [vmem:[%s332 + $0x14] sm:%s324] %v343
                %v345 = vld [vmem:[%s331 + $0x30] sm:%s324]
                %346 = vst [vmem:[%s332 + $0x18] sm:%s324] %v345
                %v347 = vld [vmem:[%s331 + $0x38] sm:%s324]
                %348 = vst [vmem:[%s332 + $0x1c] sm:%s324] %v347
              $region65: #{_lambda_.1} parent=59 // loop_footer
                %s330 = sadd.s32 1, %s326
              $region66: #{_lambda_.1} parent=59 // loop_footer_branch
                %325 = sbr.rel target = $region62
              $region67: #{_lambda_.1} parent=59 // loop_exit
                _
            $region60: #{_lambda_.1} parent=51 // pred_fallthru
              _
          $region52: #{_lambda_.1} parent=47 // pred_fallthru
            _
          %385 = vnop
        $region48: #{_lambda_.1} parent=43 // pred_fallthru
          _
        // Predicated region
        $region86: #{_lambda_.1} parent=43 // pred_check
          %p386 = pneg %p63
        $region87: #{_lambda_.1} parent=43 // pred_check_branch
          %388 = sbr.rel (%p386) target = $region89
        $region88: #{_lambda_.1} parent=43 // pred_region
          %p389 = scmp.lt.s32.totalorder %s17, 1
          %s390 = scalar_select %p389, %s17, 1
          %s391 = smul.addr %s390, 8
          %s392 = scalar_lea.vmem %s1, %s391
        $region89: #{_lambda_.1} parent=43 // pred_fallthru
          _
      $region44: #{_lambda_.1} parent=5 // pred_fallthru
        _
      %p393 = scmp.le.s32.totalorder 1, %s17
      %p394 = scmp.lt.s32.totalorder %s17, 3
      %p395 = pnand %p393, %p394
      %p396 = pneg %p395
      // Predicated region
      $region90: #{_lambda_.1} parent=5 // pred_check
        _
      $region91: #{_lambda_.1} parent=5 // pred_check_branch
        %398 = sbr.rel (%p395) target = $region93
      $region92: #{_lambda_.1} parent=5 // pred_region
        %s399 = ssub.s32 %s17, 1
        %s400 = sand.u32 %s30, 1
        %s401 = sand.u32 %s30, 1
        %s402 = smul.addr %s401, 32
        %s403 = scalar_lea.vmem [#allocation3], %s402
        // Predicated region
        $region94: #{_lambda_.1} parent=92 // pred_check
          %p404 = pneg %p43
        $region95: #{_lambda_.1} parent=92 // pred_check_branch
          %406 = sbr.rel (%p404) target = $region97
        $region96: #{_lambda_.1} parent=92 // pred_region
          _
        $region97: #{_lambda_.1} parent=92 // pred_fallthru
          _
        %s407 = sand.u32 %s30, 1
        %s408 = sand.u32 %s30, 1
        %s409 = smul.addr %s408, 32
        %s410 = scalar_lea.vmem [#allocation3], %s409
        %p411 = pneg %p43
        %p412 = pneg %p40
        %p413 = scmp.lt.s32.totalorder %s22, 1
        %s414 = scalar_select %p413, %s22, 1
        %s415 = smul.addr %s414, 8
        %s416 = scalar_lea.vmem %s1, %s415
        %p417 = pneg %p69
        %p418 = pneg %p66
        %p419 = pneg %p90
        %p420 = pneg %p87
        %p421 = pneg %p111
        %p422 = pneg %p108
        %p423 = pneg %p132
        %p424 = pneg %p129
        %p425 = pneg %p153
        %p426 = pneg %p150
        %p427 = pneg %p174
        %p428 = pneg %p171
        %p429 = pneg %p195
        %p430 = pneg %p192
        %p431 = pneg %p216
        %p432 = pneg %p213
        %p433 = pneg %p242
        %p434 = pneg %p239
        %s435 = sand.u32 %s229, 1
        %s436 = sand.u32 %s229, 1
        %s437 = smul.addr %s436, 64
        %s438 = scalar_lea.vmem [#allocation4], %s437
        %p439 = pneg %p268
        %p440 = pneg %p265
        %p441 = scmp.lt.s32.totalorder %s22, 1
        %s442 = scalar_select %p441, %s22, 1
        %s443 = smul.addr %s442, 8
        %s444 = scalar_lea.vmem %s10, %s443
        %p445 = scmp.lt.s32.totalorder %s22, 1
        %s446 = scalar_select %p445, %s22, 1
        %s447 = smul.addr %s446, 8
        %s448 = scalar_lea.vmem %s1, %s447
        %p449 = scmp.lt.s32.totalorder %s22, 1
        %s450 = scalar_select %p449, %s22, 1
        %s451 = smul.addr %s450, 8
        %s452 = scalar_lea.vmem %s10, %s451
        %v454 = vld [vmem:[%s403] sm:$0xf]
        %v455 = vld [vmem:[%s403 + $0x4] sm:$0xf]
        %v456 = vld [vmem:[%s403 + $0x8] sm:$0xf]
        %v457 = vld [vmem:[%s403 + $0xc] sm:$0xf]
        %v458 = vld [vmem:[%s403 + $0x10] sm:$0xf]
        %v459 = vld [vmem:[%s403 + $0x14] sm:$0xf]
        %v460 = vld [vmem:[%s403 + $0x18] sm:$0xf]
        %v461 = vld [vmem:[%s403 + $0x1c] sm:$0xf]
        %v462 = vld [vmem:[%s2] sm:$0xff]
        %v463 = vld [vmem:[%s2 + $0x8] sm:$0xff]
        %v464 = vld [vmem:[%s2 + $0x10] sm:$0xff]
        %v465 = vld [vmem:[%s2 + $0x18] sm:$0xff]
        %v466 = vld [vmem:[%s2 + $0x20] sm:$0xff]
        %v467 = vld [vmem:[%s2 + $0x28] sm:$0xff]
        %v468 = vld [vmem:[%s2 + $0x30] sm:$0xff]
        %v469 = vld [vmem:[%s2 + $0x38] sm:$0xff]
        %v478 = vunpack.c.l.b16 %v454
        %v479 = vunpack.c.l.b16 %v455
        %v480 = vunpack.c.l.b16 %v456
        %v481 = vunpack.c.l.b16 %v457
        %v482 = vunpack.c.l.b16 %v458
        %v483 = vunpack.c.l.b16 %v459
        %v484 = vunpack.c.l.b16 %v460
        %v485 = vunpack.c.l.b16 %v461
        %v486 = vpack.c.b16 %v479, %v478
        %v487 = vpack.c.b16 %v481, %v480
        %v488 = vpack.c.b16 %v483, %v482
        %v489 = vpack.c.b16 %v485, %v484
        %v498 = vunpack.c.l.b16 %v462
        %v499 = vunpack.c.h.b16 %v462
        %v500 = vunpack.c.l.b16 %v463
        %v501 = vunpack.c.h.b16 %v463
        %v502 = vunpack.c.l.b16 %v464
        %v503 = vunpack.c.h.b16 %v464
        %v504 = vunpack.c.l.b16 %v465
        %v505 = vunpack.c.h.b16 %v465
        %v506 = vunpack.c.l.b16 %v466
        %v507 = vunpack.c.h.b16 %v466
        %v508 = vunpack.c.l.b16 %v467
        %v509 = vunpack.c.h.b16 %v467
        %v510 = vunpack.c.l.b16 %v468
        %v511 = vunpack.c.h.b16 %v468
        %v512 = vunpack.c.l.b16 %v469
        %v513 = vunpack.c.h.b16 %v469
        %v514 = vpack.c.b16 %v502, %v498
        %v515 = vpack.c.b16 %v503, %v499
        %v516 = vpack.c.b16 %v504, %v500
        %v517 = vpack.c.b16 %v505, %v501
        %v518 = vpack.c.b16 %v510, %v506
        %v519 = vpack.c.b16 %v511, %v507
        %v520 = vpack.c.b16 %v512, %v508
        %v521 = vpack.c.b16 %v513, %v509
        %vm530 = vcmask 261120
        %v532 = vsel %vm530, %v486, 0
        %v535 = vsel %vm530, %v487, 0
        %v538 = vsel %vm530, %v488, 0
        %v541 = vsel %vm530, %v489, 0
        %543 = vmatprep.subr.bf16.mxu0 0
        %544 = vmatpush1.bf16.msra.mxu0 0
        %545 = vmatprep.subr.bf16.mxu0 0
        %546 = vmatpush1.bf16.msra.mxu0 0
        %547 = vmatprep.subr.bf16.mxu0 0
        %548 = vmatpush1.bf16.msra.mxu0 0
        %549 = vmatprep.subr.bf16.mxu0 0
        %550 = vmatpush1.bf16.msra.mxu0 0
        %551 = vmatprep.subr.bf16.mxu0 0
        %552 = vmatpush1.bf16.msra.mxu0 0
        %553 = vmatprep.subr.bf16.mxu0 0
        %554 = vmatpush1.bf16.msra.mxu0 0
        %555 = vmatprep.subr.bf16.mxu0 %v519
        %556 = vmatpush1.bf16.msra.mxu0 %v518
        %557 = vmatprep.subr.bf16.mxu0 %v515
        %558 = vmatpush1.bf16.msra.mxu0 %v514
        %559 = vmatprep.subr.bf16.mxu0 0
        %560 = vmatpush2.bf16.msra.mxu0 0
        %561 = vmatprep.subr.bf16.mxu0 0
        %562 = vmatpush2.bf16.msra.mxu0 0
        %563 = vmatprep.subr.bf16.mxu0 0
        %564 = vmatpush2.bf16.msra.mxu0 0
        %565 = vmatprep.subr.bf16.mxu0 0
        %566 = vmatpush2.bf16.msra.mxu0 0
        %567 = vmatprep.subr.bf16.mxu0 0
        %568 = vmatpush2.bf16.msra.mxu0 0
        %569 = vmatprep.subr.bf16.mxu0 0
        %570 = vmatpush2.bf16.msra.mxu0 0
        %571 = vmatprep.subr.bf16.mxu0 0
        %572 = vmatpush2.bf16.msra.mxu0 0
        %573 = vmatprep.subr.bf16.mxu0 0
        %574 = vmatpush2.bf16.msra.mxu0 0
        %575 = vmatprep.mubr.bf16.mxu0 0
        %576 = vmatmul.mubr.bf16.gmra.mxu0 %v532
        %v577 = vpop.f32.mrf.mxu0
        %v578 = vadd.f32 0.0, %v577
        %v579 = vpop.f32.mrf.mxu0
        %v580 = vadd.f32 0.0, %v579
        %v581 = vpop.f32.mrf.mxu0
        %v582 = vadd.f32 0.0, %v581
        %v583 = vpop.f32.mrf.mxu0
        %v584 = vadd.f32 0.0, %v583
        %585 = vmatprep.mubr.bf16.mxu0 0
        %586 = vmatmul.mubr.bf16.gmra.mxu0 %v535
        %v587 = vpop.f32.mrf.mxu0
        %v588 = vadd.f32 0.0, %v587
        %v589 = vpop.f32.mrf.mxu0
        %v590 = vadd.f32 0.0, %v589
        %v591 = vpop.f32.mrf.mxu0
        %v592 = vadd.f32 0.0, %v591
        %v593 = vpop.f32.mrf.mxu0
        %v594 = vadd.f32 0.0, %v593
        %595 = vmatprep.mubr.bf16.mxu0 0
        %596 = vmatmul.mubr.bf16.gmra.mxu0 %v538
        %v597 = vpop.f32.mrf.mxu0
        %v598 = vadd.f32 0.0, %v597
        %v599 = vpop.f32.mrf.mxu0
        %v600 = vadd.f32 0.0, %v599
        %v601 = vpop.f32.mrf.mxu0
        %v602 = vadd.f32 0.0, %v601
        %v603 = vpop.f32.mrf.mxu0
        %v604 = vadd.f32 0.0, %v603
        %605 = vmatprep.mubr.bf16.mxu0 0
        %606 = vmatmul.mubr.bf16.gmra.mxu0 %v541
        %v607 = vpop.f32.mrf.mxu0
        %v608 = vadd.f32 0.0, %v607
        %v609 = vpop.f32.mrf.mxu0
        %v610 = vadd.f32 0.0, %v609
        %v611 = vpop.f32.mrf.mxu0
        %v612 = vadd.f32 0.0, %v611
        %v613 = vpop.f32.mrf.mxu0
        %v614 = vadd.f32 0.0, %v613
        %615 = vdwg.mxu0
        %616 = vmatprep.subr.bf16.mxu0 0
        %617 = vmatpush1.bf16.msra.mxu0 0
        %618 = vmatprep.subr.bf16.mxu0 0
        %619 = vmatpush1.bf16.msra.mxu0 0
        %620 = vmatprep.subr.bf16.mxu0 0
        %621 = vmatpush1.bf16.msra.mxu0 0
        %622 = vmatprep.subr.bf16.mxu0 0
        %623 = vmatpush1.bf16.msra.mxu0 0
        %624 = vmatprep.subr.bf16.mxu0 0
        %625 = vmatpush1.bf16.msra.mxu0 0
        %626 = vmatprep.subr.bf16.mxu0 0
        %627 = vmatpush1.bf16.msra.mxu0 0
        %628 = vmatprep.subr.bf16.mxu0 %v521
        %629 = vmatpush1.bf16.msra.mxu0 %v520
        %630 = vmatprep.subr.bf16.mxu0 %v517
        %631 = vmatpush1.bf16.msra.mxu0 %v516
        %632 = vmatprep.subr.bf16.mxu0 0
        %633 = vmatpush2.bf16.msra.mxu0 0
        %634 = vmatprep.subr.bf16.mxu0 0
        %635 = vmatpush2.bf16.msra.mxu0 0
        %636 = vmatprep.subr.bf16.mxu0 0
        %637 = vmatpush2.bf16.msra.mxu0 0
        %638 = vmatprep.subr.bf16.mxu0 0
        %639 = vmatpush2.bf16.msra.mxu0 0
        %640 = vmatprep.subr.bf16.mxu0 0
        %641 = vmatpush2.bf16.msra.mxu0 0
        %642 = vmatprep.subr.bf16.mxu0 0
        %643 = vmatpush2.bf16.msra.mxu0 0
        %644 = vmatprep.subr.bf16.mxu0 0
        %645 = vmatpush2.bf16.msra.mxu0 0
        %646 = vmatprep.subr.bf16.mxu0 0
        %647 = vmatpush2.bf16.msra.mxu0 0
        %648 = vmatprep.mubr.bf16.mxu0 0
        %649 = vmatmul.mubr.bf16.gmra.mxu0 %v532
        %v650 = vpop.f32.mrf.mxu0
        %v651 = vadd.f32 0.0, %v650
        %v652 = vpop.f32.mrf.mxu0
        %v653 = vadd.f32 0.0, %v652
        %v654 = vpop.f32.mrf.mxu0
        %v655 = vadd.f32 0.0, %v654
        %v656 = vpop.f32.mrf.mxu0
        %v657 = vadd.f32 0.0, %v656
        %658 = vmatprep.mubr.bf16.mxu0 0
        %659 = vmatmul.mubr.bf16.gmra.mxu0 %v535
        %v660 = vpop.f32.mrf.mxu0
        %v661 = vadd.f32 0.0, %v660
        %v662 = vpop.f32.mrf.mxu0
        %v663 = vadd.f32 0.0, %v662
        %v664 = vpop.f32.mrf.mxu0
        %v665 = vadd.f32 0.0, %v664
        %v666 = vpop.f32.mrf.mxu0
        %v667 = vadd.f32 0.0, %v666
        %668 = vmatprep.mubr.bf16.mxu0 0
        %669 = vmatmul.mubr.bf16.gmra.mxu0 %v538
        %v670 = vpop.f32.mrf.mxu0
        %v671 = vadd.f32 0.0, %v670
        %v672 = vpop.f32.mrf.mxu0
        %v673 = vadd.f32 0.0, %v672
        %v674 = vpop.f32.mrf.mxu0
        %v675 = vadd.f32 0.0, %v674
        %v676 = vpop.f32.mrf.mxu0
        %v677 = vadd.f32 0.0, %v676
        %678 = vmatprep.mubr.bf16.mxu0 0
        %679 = vmatmul.mubr.bf16.gmra.mxu0 %v541
        %v680 = vpop.f32.mrf.mxu0
        %v681 = vadd.f32 0.0, %v680
        %v682 = vpop.f32.mrf.mxu0
        %v683 = vadd.f32 0.0, %v682
        %v684 = vpop.f32.mrf.mxu0
        %v685 = vadd.f32 0.0, %v684
        %v686 = vpop.f32.mrf.mxu0
        %v687 = vadd.f32 0.0, %v686
        %688 = vdwg.mxu0
        %v689 = vpack.c.bf16 %v582, %v578
        %v690 = vpack.c.bf16 %v584, %v580
        %v691 = vpack.c.bf16 %v655, %v651
        %v692 = vpack.c.bf16 %v657, %v653
        %v693 = vpack.c.bf16 %v592, %v588
        %v694 = vpack.c.bf16 %v594, %v590
        %v695 = vpack.c.bf16 %v665, %v661
        %v696 = vpack.c.bf16 %v667, %v663
        %v697 = vpack.c.bf16 %v602, %v598
        %v698 = vpack.c.bf16 %v604, %v600
        %v699 = vpack.c.bf16 %v675, %v671
        %v700 = vpack.c.bf16 %v677, %v673
        %v701 = vpack.c.bf16 %v612, %v608
        %v702 = vpack.c.bf16 %v614, %v610
        %v703 = vpack.c.bf16 %v685, %v681
        %v704 = vpack.c.bf16 %v687, %v683
        %v721 = vunpack.c.l.b16 %v689
        %v722 = vunpack.c.l.b16 %v690
        %v723 = vunpack.c.l.b16 %v691
        %v724 = vunpack.c.l.b16 %v692
        %v725 = vunpack.c.h.b16 %v689
        %v726 = vunpack.c.h.b16 %v690
        %v727 = vunpack.c.h.b16 %v691
        %v728 = vunpack.c.h.b16 %v692
        %v729 = vunpack.c.l.b16 %v693
        %v730 = vunpack.c.l.b16 %v694
        %v731 = vunpack.c.l.b16 %v695
        %v732 = vunpack.c.l.b16 %v696
        %v733 = vunpack.c.h.b16 %v693
        %v734 = vunpack.c.h.b16 %v694
        %v735 = vunpack.c.h.b16 %v695
        %v736 = vunpack.c.h.b16 %v696
        %v737 = vunpack.c.l.b16 %v697
        %v738 = vunpack.c.l.b16 %v698
        %v739 = vunpack.c.l.b16 %v699
        %v740 = vunpack.c.l.b16 %v700
        %v741 = vunpack.c.h.b16 %v697
        %v742 = vunpack.c.h.b16 %v698
        %v743 = vunpack.c.h.b16 %v699
        %v744 = vunpack.c.h.b16 %v700
        %v745 = vunpack.c.l.b16 %v701
        %v746 = vunpack.c.l.b16 %v702
        %v747 = vunpack.c.l.b16 %v703
        %v748 = vunpack.c.l.b16 %v704
        %v749 = vunpack.c.h.b16 %v701
        %v750 = vunpack.c.h.b16 %v702
        %v751 = vunpack.c.h.b16 %v703
        %v752 = vunpack.c.h.b16 %v704
        %v753 = vpack.c.b16 %v722, %v721
        %v754 = vpack.c.b16 %v724, %v723
        %v755 = vpack.c.b16 %v726, %v725
        %v756 = vpack.c.b16 %v728, %v727
        %v757 = vpack.c.b16 %v730, %v729
        %v758 = vpack.c.b16 %v732, %v731
        %v759 = vpack.c.b16 %v734, %v733
        %v760 = vpack.c.b16 %v736, %v735
        %v761 = vpack.c.b16 %v738, %v737
        %v762 = vpack.c.b16 %v740, %v739
        %v763 = vpack.c.b16 %v742, %v741
        %v764 = vpack.c.b16 %v744, %v743
        %v765 = vpack.c.b16 %v746, %v745
        %v766 = vpack.c.b16 %v748, %v747
        %v767 = vpack.c.b16 %v750, %v749
        %v768 = vpack.c.b16 %v752, %v751
        %785 = vst [vmem:[#allocation2] sm:$0xff] %v753
        %786 = vst [vmem:[#allocation2 + $0x8] sm:$0xff] %v754
        %787 = vst [vmem:[#allocation2 + $0x10] sm:$0xff] %v755
        %788 = vst [vmem:[#allocation2 + $0x18] sm:$0xff] %v756
        %789 = vst [vmem:[#allocation2 + $0x20] sm:$0xff] %v757
        %790 = vst [vmem:[#allocation2 + $0x28] sm:$0xff] %v758
        %791 = vst [vmem:[#allocation2 + $0x30] sm:$0xff] %v759
        %792 = vst [vmem:[#allocation2 + $0x38] sm:$0xff] %v760
        %793 = vst [vmem:[#allocation2 + $0x40] sm:$0xff] %v761
        %794 = vst [vmem:[#allocation2 + $0x48] sm:$0xff] %v762
        %795 = vst [vmem:[#allocation2 + $0x50] sm:$0xff] %v763
        %796 = vst [vmem:[#allocation2 + $0x58] sm:$0xff] %v764
        %797 = vst [vmem:[#allocation2 + $0x60] sm:$0xff] %v765
        %798 = vst [vmem:[#allocation2 + $0x68] sm:$0xff] %v766
        %799 = vst [vmem:[#allocation2 + $0x70] sm:$0xff] %v767
        %800 = vst [vmem:[#allocation2 + $0x78] sm:$0xff] %v768
        %v801 = vld [vmem:[%s448] sm:$0xff]
        %v802 = vld [vmem:[%s3] sm:$0xff]
        %v803 = vld [vmem:[%s3 + $0x8] sm:$0xff]
        %v804 = vld [vmem:[%s3 + $0x10] sm:$0xff]
        %v805 = vld [vmem:[%s3 + $0x18] sm:$0xff]
        %v806 = vld [vmem:[%s3 + $0x20] sm:$0xff]
        %v807 = vld [vmem:[%s3 + $0x28] sm:$0xff]
        %v808 = vld [vmem:[%s3 + $0x30] sm:$0xff]
        %v809 = vld [vmem:[%s3 + $0x38] sm:$0xff]
        %v810 = vld [vmem:[%s3 + $0x40] sm:$0xff]
        %v811 = vld [vmem:[%s3 + $0x48] sm:$0xff]
        %v812 = vld [vmem:[%s3 + $0x50] sm:$0xff]
        %v813 = vld [vmem:[%s3 + $0x58] sm:$0xff]
        %v814 = vld [vmem:[%s3 + $0x60] sm:$0xff]
        %v815 = vld [vmem:[%s3 + $0x68] sm:$0xff]
        %v816 = vld [vmem:[%s3 + $0x70] sm:$0xff]
        %v817 = vld [vmem:[%s3 + $0x78] sm:$0xff]
        %v818 = vld [vmem:[%s3 + $0x80] sm:$0xff]
        %v819 = vld [vmem:[%s3 + $0x88] sm:$0xff]
        %v820 = vld [vmem:[%s3 + $0x90] sm:$0xff]
        %v821 = vld [vmem:[%s3 + $0x98] sm:$0xff]
        %v822 = vld [vmem:[%s3 + $0xa0] sm:$0xff]
        %v823 = vld [vmem:[%s3 + $0xa8] sm:$0xff]
        %v824 = vld [vmem:[%s3 + $0xb0] sm:$0xff]
        %v825 = vld [vmem:[%s3 + $0xb8] sm:$0xff]
        %v826 = vld [vmem:[%s3 + $0xc0] sm:$0xff]
        %v827 = vld [vmem:[%s3 + $0xc8] sm:$0xff]
        %v828 = vld [vmem:[%s3 + $0xd0] sm:$0xff]
        %v829 = vld [vmem:[%s3 + $0xd8] sm:$0xff]
        %v830 = vld [vmem:[%s3 + $0xe0] sm:$0xff]
        %v831 = vld [vmem:[%s3 + $0xe8] sm:$0xff]
        %v832 = vld [vmem:[%s3 + $0xf0] sm:$0xff]
        %v833 = vld [vmem:[%s3 + $0xf8] sm:$0xff]
        %v834 = vld [vmem:[%s4] sm:$0xf]
        %v835 = vld [vmem:[%s5] sm:$0xf]
        %v836 = vld [vmem:[%s5 + $0x4] sm:$0xf]
        %v837 = vld [vmem:[%s5 + $0x8] sm:$0xf]
        %v838 = vld [vmem:[%s5 + $0xc] sm:$0xf]
        %v839 = vld [vmem:[%s5 + $0x10] sm:$0xf]
        %v840 = vld [vmem:[%s5 + $0x14] sm:$0xf]
        %v841 = vld [vmem:[%s5 + $0x18] sm:$0xf]
        %v842 = vld [vmem:[%s5 + $0x1c] sm:$0xf]
        %v843 = vld [vmem:[%s5 + $0x20] sm:$0xf]
        %v844 = vld [vmem:[%s5 + $0x24] sm:$0xf]
        %v845 = vld [vmem:[%s5 + $0x28] sm:$0xf]
        %v846 = vld [vmem:[%s5 + $0x2c] sm:$0xf]
        %v847 = vld [vmem:[%s5 + $0x30] sm:$0xf]
        %v848 = vld [vmem:[%s5 + $0x34] sm:$0xf]
        %v849 = vld [vmem:[%s5 + $0x38] sm:$0xf]
        %v850 = vld [vmem:[%s5 + $0x3c] sm:$0xf]
        %v851 = vld [vmem:[%s6] sm:$0x1]
        %v852 = vld [vmem:[#allocation2] sm:$0xff]
        %v853 = vld [vmem:[#allocation2 + $0x8] sm:$0xff]
        %v854 = vunpack.c.l.bf16 %v852
        %v855 = vunpack.c.h.bf16 %v852
        %v856 = vunpack.c.l.bf16 %v853
        %v857 = vunpack.c.h.bf16 %v853
        %v859 = vlaneseq
        %v860 = vshrl.u32 %v859, 7
        %v861 = vsub.s32 0, %v860
        %v862 = vrot.slane %v834, %v861
        %v863 = vlaneseq
        %v864 = vshrl.u32 %v863, 7
        %v865 = vsub.s32 1, %v864
        %v866 = vrot.slane %v834, %v865
        %v867 = vlaneseq
        %v868 = vshrl.u32 %v867, 7
        %v869 = vsub.s32 2, %v868
        %v870 = vrot.slane %v834, %v869
        %v871 = vlaneseq
        %v872 = vshrl.u32 %v871, 7
        %v873 = vsub.s32 3, %v872
        %v874 = vrot.slane %v834, %v873
        %v879 = vadd.f32 %v854, %v862
        %v880 = vadd.f32 %v855, %v866
        %v881 = vadd.f32 %v856, %v870
        %v882 = vadd.f32 %v857, %v874
        %v915 = vunpack.c.l.b16 %v802
        %v916 = vunpack.c.h.b16 %v802
        %v917 = vunpack.c.l.b16 %v803
        %v918 = vunpack.c.h.b16 %v803
        %v919 = vunpack.c.l.b16 %v804
        %v920 = vunpack.c.h.b16 %v804
        %v921 = vunpack.c.l.b16 %v805
        %v922 = vunpack.c.h.b16 %v805
        %v923 = vunpack.c.l.b16 %v806
        %v924 = vunpack.c.h.b16 %v806
        %v925 = vunpack.c.l.b16 %v807
        %v926 = vunpack.c.h.b16 %v807
        %v927 = vunpack.c.l.b16 %v808
        %v928 = vunpack.c.h.b16 %v808
        %v929 = vunpack.c.l.b16 %v809
        %v930 = vunpack.c.h.b16 %v809
        %v931 = vunpack.c.l.b16 %v810
        %v932 = vunpack.c.h.b16 %v810
        %v933 = vunpack.c.l.b16 %v811
        %v934 = vunpack.c.h.b16 %v811
        %v935 = vunpack.c.l.b16 %v812
        %v936 = vunpack.c.h.b16 %v812
        %v937 = vunpack.c.l.b16 %v813
        %v938 = vunpack.c.h.b16 %v813
        %v939 = vunpack.c.l.b16 %v814
        %v940 = vunpack.c.h.b16 %v814
        %v941 = vunpack.c.l.b16 %v815
        %v942 = vunpack.c.h.b16 %v815
        %v943 = vunpack.c.l.b16 %v816
        %v944 = vunpack.c.h.b16 %v816
        %v945 = vunpack.c.l.b16 %v817
        %v946 = vunpack.c.h.b16 %v817
        %v947 = vunpack.c.l.b16 %v818
        %v948 = vunpack.c.h.b16 %v818
        %v949 = vunpack.c.l.b16 %v819
        %v950 = vunpack.c.h.b16 %v819
        %v951 = vunpack.c.l.b16 %v820
        %v952 = vunpack.c.h.b16 %v820
        %v953 = vunpack.c.l.b16 %v821
        %v954 = vunpack.c.h.b16 %v821
        %v955 = vunpack.c.l.b16 %v822
        %v956 = vunpack.c.h.b16 %v822
        %v957 = vunpack.c.l.b16 %v823
        %v958 = vunpack.c.h.b16 %v823
        %v959 = vunpack.c.l.b16 %v824
        %v960 = vunpack.c.h.b16 %v824
        %v961 = vunpack.c.l.b16 %v825
        %v962 = vunpack.c.h.b16 %v825
        %v963 = vunpack.c.l.b16 %v826
        %v964 = vunpack.c.h.b16 %v826
        %v965 = vunpack.c.l.b16 %v827
        %v966 = vunpack.c.h.b16 %v827
        %v967 = vunpack.c.l.b16 %v828
        %v968 = vunpack.c.h.b16 %v828
        %v969 = vunpack.c.l.b16 %v829
        %v970 = vunpack.c.h.b16 %v829
        %v971 = vunpack.c.l.b16 %v830
        %v972 = vunpack.c.h.b16 %v830
        %v973 = vunpack.c.l.b16 %v831
        %v974 = vunpack.c.h.b16 %v831
        %v975 = vunpack.c.l.b16 %v832
        %v976 = vunpack.c.h.b16 %v832
        %v977 = vunpack.c.l.b16 %v833
        %v978 = vunpack.c.h.b16 %v833
        %v979 = vpack.c.b16 %v919, %v915
        %v980 = vpack.c.b16 %v920, %v916
        %v981 = vpack.c.b16 %v921, %v917
        %v982 = vpack.c.b16 %v922, %v918
        %v983 = vpack.c.b16 %v927, %v923
        %v984 = vpack.c.b16 %v928, %v924
        %v985 = vpack.c.b16 %v929, %v925
        %v986 = vpack.c.b16 %v930, %v926
        %v987 = vpack.c.b16 %v935, %v931
        %v988 = vpack.c.b16 %v936, %v932
        %v989 = vpack.c.b16 %v937, %v933
        %v990 = vpack.c.b16 %v938, %v934
        %v991 = vpack.c.b16 %v943, %v939
        %v992 = vpack.c.b16 %v944, %v940
        %v993 = vpack.c.b16 %v945, %v941
        %v994 = vpack.c.b16 %v946, %v942
        %v995 = vpack.c.b16 %v951, %v947
        %v996 = vpack.c.b16 %v952, %v948
        %v997 = vpack.c.b16 %v953, %v949
        %v998 = vpack.c.b16 %v954, %v950
        %v999 = vpack.c.b16 %v959, %v955
        %v1000 = vpack.c.b16 %v960, %v956
        %v1001 = vpack.c.b16 %v961, %v957
        %v1002 = vpack.c.b16 %v962, %v958
        %v1003 = vpack.c.b16 %v967, %v963
        %v1004 = vpack.c.b16 %v968, %v964
        %v1005 = vpack.c.b16 %v969, %v965
        %v1006 = vpack.c.b16 %v970, %v966
        %v1007 = vpack.c.b16 %v975, %v971
        %v1008 = vpack.c.b16 %v976, %v972
        %v1009 = vpack.c.b16 %v977, %v973
        %v1010 = vpack.c.b16 %v978, %v974
        %1043 = vmatprep.subr.bf16.mxu0 %v1008
        %1044 = vmatpush1.bf16.msra.mxu0 %v1007
        %1045 = vmatprep.subr.bf16.mxu0 %v1004
        %1046 = vmatpush1.bf16.msra.mxu0 %v1003
        %1047 = vmatprep.subr.bf16.mxu0 %v1000
        %1048 = vmatpush1.bf16.msra.mxu0 %v999
        %1049 = vmatprep.subr.bf16.mxu0 %v996
        %1050 = vmatpush1.bf16.msra.mxu0 %v995
        %1051 = vmatprep.subr.bf16.mxu0 %v992
        %1052 = vmatpush1.bf16.msra.mxu0 %v991
        %1053 = vmatprep.subr.bf16.mxu0 %v988
        %1054 = vmatpush1.bf16.msra.mxu0 %v987
        %1055 = vmatprep.subr.bf16.mxu0 %v984
        %1056 = vmatpush1.bf16.msra.mxu0 %v983
        %1057 = vmatprep.subr.bf16.mxu0 %v980
        %1058 = vmatpush1.bf16.msra.mxu0 %v979
        %1059 = vmatprep.subr.bf16.mxu0 0
        %1060 = vmatpush2.bf16.msra.mxu0 0
        %1061 = vmatprep.subr.bf16.mxu0 0
        %1062 = vmatpush2.bf16.msra.mxu0 0
        %1063 = vmatprep.subr.bf16.mxu0 0
        %1064 = vmatpush2.bf16.msra.mxu0 0
        %1065 = vmatprep.subr.bf16.mxu0 0
        %1066 = vmatpush2.bf16.msra.mxu0 0
        %1067 = vmatprep.subr.bf16.mxu0 0
        %1068 = vmatpush2.bf16.msra.mxu0 0
        %1069 = vmatprep.subr.bf16.mxu0 0
        %1070 = vmatpush2.bf16.msra.mxu0 0
        %1071 = vmatprep.subr.bf16.mxu0 0
        %1072 = vmatpush2.bf16.msra.mxu0 0
        %1073 = vmatprep.subr.bf16.mxu0 0
        %1074 = vmatpush2.bf16.msra.mxu0 0
        %1075 = vmatprep.mubr.bf16.mxu0 0
        %1076 = vmatmul.mubr.bf16.gmra.mxu0 0
        %v1077 = vpop.f32.mrf.mxu0
        %v1078 = vadd.f32 0.0, %v1077
        %v1079 = vpop.f32.mrf.mxu0
        %v1080 = vadd.f32 0.0, %v1079
        %v1081 = vpop.f32.mrf.mxu0
        %v1082 = vpop.f32.mrf.mxu0
        %1083 = vdwg.mxu0
        %1084 = vmatprep.subr.bf16.mxu0 %v1010
        %1085 = vmatpush1.bf16.msra.mxu0 %v1009
        %1086 = vmatprep.subr.bf16.mxu0 %v1006
        %1087 = vmatpush1.bf16.msra.mxu0 %v1005
        %1088 = vmatprep.subr.bf16.mxu0 %v1002
        %1089 = vmatpush1.bf16.msra.mxu0 %v1001
        %1090 = vmatprep.subr.bf16.mxu0 %v998
        %1091 = vmatpush1.bf16.msra.mxu0 %v997
        %1092 = vmatprep.subr.bf16.mxu0 %v994
        %1093 = vmatpush1.bf16.msra.mxu0 %v993
        %1094 = vmatprep.subr.bf16.mxu0 %v990
        %1095 = vmatpush1.bf16.msra.mxu0 %v989
        %1096 = vmatprep.subr.bf16.mxu0 %v986
        %1097 = vmatpush1.bf16.msra.mxu0 %v985
        %1098 = vmatprep.subr.bf16.mxu0 %v982
        %1099 = vmatpush1.bf16.msra.mxu0 %v981
        %1100 = vmatprep.subr.bf16.mxu0 0
        %1101 = vmatpush2.bf16.msra.mxu0 0
        %1102 = vmatprep.subr.bf16.mxu0 0
        %1103 = vmatpush2.bf16.msra.mxu0 0
        %1104 = vmatprep.subr.bf16.mxu0 0
        %1105 = vmatpush2.bf16.msra.mxu0 0
        %1106 = vmatprep.subr.bf16.mxu0 0
        %1107 = vmatpush2.bf16.msra.mxu0 0
        %1108 = vmatprep.subr.bf16.mxu0 0
        %1109 = vmatpush2.bf16.msra.mxu0 0
        %1110 = vmatprep.subr.bf16.mxu0 0
        %1111 = vmatpush2.bf16.msra.mxu0 0
        %1112 = vmatprep.subr.bf16.mxu0 0
        %1113 = vmatpush2.bf16.msra.mxu0 0
        %1114 = vmatprep.subr.bf16.mxu0 0
        %1115 = vmatpush2.bf16.msra.mxu0 0
        %1116 = vmatprep.mubr.bf16.mxu0 0
        %1117 = vmatmul.mubr.bf16.gmra.mxu0 0
        %v1118 = vpop.f32.mrf.mxu0
        %v1119 = vadd.f32 0.0, %v1118
        %v1120 = vpop.f32.mrf.mxu0
        %v1121 = vadd.f32 0.0, %v1120
        %v1122 = vpop.f32.mrf.mxu0
        %v1123 = vpop.f32.mrf.mxu0
        %1124 = vdwg.mxu0
        %v1125 = vadd.f32 %v879, %v1078
        %v1126 = vadd.f32 %v880, %v1080
        %v1127 = vadd.f32 %v881, %v1119
        %v1128 = vadd.f32 %v882, %v1121
        %v1129 = vxor.u32 %v1125, 2147483648
        %v1130 = vxor.u32 %v1126, 2147483648
        %v1131 = vxor.u32 %v1127, 2147483648
        %v1132 = vmul.f32 %v1129, 1.442695
        %v1133 = vpow.pop %v1132
        %v1134 = vmul.f32 %v1130, 1.442695
        %v1135 = vpow.pop %v1134
        %v1136 = vmul.f32 %v1131, 1.442695
        %v1137 = vpow.pop %v1136
        %v1138 = vadd.f32 %v1133, 1.0
        %v1139 = vadd.f32 %v1135, 1.0
        %v1140 = vadd.f32 %v1137, 1.0
        %v1141 = vrcp.pop %v1138
        %v1142 = vmul.f32 1.0, %v1141
        %v1143 = vrcp.pop %v1139
        %v1144 = vmul.f32 1.0, %v1143
        %v1145 = vrcp.pop %v1140
        %v1146 = vmul.f32 1.0, %v1145
        %v1147 = vtanh.pop %v1128
        %v1148 = vmul.f32 %v1144, 0.0
        %v1149 = vmul.f32 %v1142, %v1147
        %v1150 = vadd.f32 %v1148, %v1149
        %v1151 = vtanh.pop %v1150
        %v1152 = vmul.f32 %v1146, %v1151
        %vm1153 = vcmp.gt.s32.totalorder %v801, 0
        %v1154 = vsel %vm1153, 1, 0
        %v1155 = vcvt.s32.f32 %v1154
        %1157 = vset.pattern.permute.xlu0 0
        %1158 = vperm.xlu0 %1157, %v1155
        %v1159 = vpop.permute.xlu0 %1158
        %v1161 = vmul.f32 %v1159, %v1152
        %v1162 = vpack.c.bf16 %v1161, %v1161
        %v1164 = vlaneseq
        %v1165 = vshrl.u32 %v1164, 7
        %v1166 = vsub.s32 0, %v1165
        %v1167 = vrot.slane %v851, %v1166
        %v1185 = vunpack.c.l.b16 %v835
        %v1186 = vunpack.c.l.b16 %v836
        %v1187 = vunpack.c.l.b16 %v837
        %v1188 = vunpack.c.l.b16 %v838
        %v1189 = vunpack.c.l.b16 %v839
        %v1190 = vunpack.c.l.b16 %v840
        %v1191 = vunpack.c.l.b16 %v841
        %v1192 = vunpack.c.l.b16 %v842
        %v1193 = vunpack.c.l.b16 %v843
        %v1194 = vunpack.c.l.b16 %v844
        %v1195 = vunpack.c.l.b16 %v845
        %v1196 = vunpack.c.l.b16 %v846
        %v1197 = vunpack.c.l.b16 %v847
        %v1198 = vunpack.c.l.b16 %v848
        %v1199 = vunpack.c.l.b16 %v849
        %v1200 = vunpack.c.l.b16 %v850
        %v1201 = vpack.c.b16 %v1186, %v1185
        %v1202 = vpack.c.b16 %v1188, %v1187
        %v1203 = vpack.c.b16 %v1190, %v1189
        %v1204 = vpack.c.b16 %v1192, %v1191
        %v1205 = vpack.c.b16 %v1194, %v1193
        %v1206 = vpack.c.b16 %v1196, %v1195
        %v1207 = vpack.c.b16 %v1198, %v1197
        %v1208 = vpack.c.b16 %v1200, %v1199
        %1217 = vmatprep.subr.bf16.mxu0 0
        %1218 = vmatpush1.bf16.msra.mxu0 %v1208
        %1219 = vmatprep.subr.bf16.mxu0 0
        %1220 = vmatpush1.bf16.msra.mxu0 %v1207
        %1221 = vmatprep.subr.bf16.mxu0 0
        %1222 = vmatpush1.bf16.msra.mxu0 %v1206
        %1223 = vmatprep.subr.bf16.mxu0 0
        %1224 = vmatpush1.bf16.msra.mxu0 %v1205
        %1225 = vmatprep.subr.bf16.mxu0 0
        %1226 = vmatpush1.bf16.msra.mxu0 %v1204
        %1227 = vmatprep.subr.bf16.mxu0 0
        %1228 = vmatpush1.bf16.msra.mxu0 %v1203
        %1229 = vmatprep.subr.bf16.mxu0 0
        %1230 = vmatpush1.bf16.msra.mxu0 %v1202
        %1231 = vmatprep.subr.bf16.mxu0 0
        %1232 = vmatpush1.bf16.msra.mxu0 %v1201
        %1233 = vmatprep.subr.bf16.mxu0 0
        %1234 = vmatpush2.bf16.msra.mxu0 0
        %1235 = vmatprep.subr.bf16.mxu0 0
        %1236 = vmatpush2.bf16.msra.mxu0 0
        %1237 = vmatprep.subr.bf16.mxu0 0
        %1238 = vmatpush2.bf16.msra.mxu0 0
        %1239 = vmatprep.subr.bf16.mxu0 0
        %1240 = vmatpush2.bf16.msra.mxu0 0
        %1241 = vmatprep.subr.bf16.mxu0 0
        %1242 = vmatpush2.bf16.msra.mxu0 0
        %1243 = vmatprep.subr.bf16.mxu0 0
        %1244 = vmatpush2.bf16.msra.mxu0 0
        %1245 = vmatprep.subr.bf16.mxu0 0
        %1246 = vmatpush2.bf16.msra.mxu0 0
        %1247 = vmatprep.subr.bf16.mxu0 0
        %1248 = vmatpush2.bf16.msra.mxu0 0
        %1249 = vmatprep.mubr.bf16.mxu0 0
        %1250 = vmatmul.mubr.bf16.gmra.mxu0 %v1162
        %v1251 = vpop.f32.mrf.mxu0
        %v1252 = vadd.f32 %v1167, %v1251
        %v1253 = vpop.f32.mrf.mxu0
        %v1254 = vpop.f32.mrf.mxu0
        %v1255 = vpop.f32.mrf.mxu0
        %1256 = vdwg.mxu0
        %1257 = vst [vmem:[%s438] sm:$0xff] %v1252
        %v1258 = vsub.f32 1.0, %v1155
        %1260 = vset.pattern.permute.xlu0 0
        %1261 = vperm.xlu0 %1260, %v1258
        %v1262 = vpop.permute.xlu0 %1261
        %v1264 = vmul.f32 %v1262, 0.0
        %v1265 = vadd.f32 %v1161, %v1264
        %v1266 = vmul.f32 %v1159, %v1150
        %v1267 = vadd.f32 %v1266, %v1264
        %v1268 = vld [vmem:[#allocation2 + $0x10] sm:$0xff]
        %v1269 = vld [vmem:[#allocation2 + $0x18] sm:$0xff]
        %v1270 = vunpack.c.l.bf16 %v1268
        %v1271 = vunpack.c.h.bf16 %v1268
        %v1272 = vunpack.c.l.bf16 %v1269
        %v1273 = vunpack.c.h.bf16 %v1269
        %v1274 = vadd.f32 %v1270, %v862
        %v1275 = vadd.f32 %v1271, %v866
        %v1276 = vadd.f32 %v1272, %v870
        %v1277 = vadd.f32 %v1273, %v874
        %v1278 = vpack.c.bf16 %v1265, %v1265
        %1279 = vmatprep.subr.bf16.mxu0 %v1008
        %1280 = vmatpush1.bf16.msra.mxu0 %v1007
        %1281 = vmatprep.subr.bf16.mxu0 %v1004
        %1282 = vmatpush1.bf16.msra.mxu0 %v1003
        %1283 = vmatprep.subr.bf16.mxu0 %v1000
        %1284 = vmatpush1.bf16.msra.mxu0 %v999
        %1285 = vmatprep.subr.bf16.mxu0 %v996
        %1286 = vmatpush1.bf16.msra.mxu0 %v995
        %1287 = vmatprep.subr.bf16.mxu0 %v992
        %1288 = vmatpush1.bf16.msra.mxu0 %v991
        %1289 = vmatprep.subr.bf16.mxu0 %v988
        %1290 = vmatpush1.bf16.msra.mxu0 %v987
        %1291 = vmatprep.subr.bf16.mxu0 %v984
        %1292 = vmatpush1.bf16.msra.mxu0 %v983
        %1293 = vmatprep.subr.bf16.mxu0 %v980
        %1294 = vmatpush1.bf16.msra.mxu0 %v979
        %1295 = vmatprep.subr.bf16.mxu0 0
        %1296 = vmatpush2.bf16.msra.mxu0 0
        %1297 = vmatprep.subr.bf16.mxu0 0
        %1298 = vmatpush2.bf16.msra.mxu0 0
        %1299 = vmatprep.subr.bf16.mxu0 0
        %1300 = vmatpush2.bf16.msra.mxu0 0
        %1301 = vmatprep.subr.bf16.mxu0 0
        %1302 = vmatpush2.bf16.msra.mxu0 0
        %1303 = vmatprep.subr.bf16.mxu0 0
        %1304 = vmatpush2.bf16.msra.mxu0 0
        %1305 = vmatprep.subr.bf16.mxu0 0
        %1306 = vmatpush2.bf16.msra.mxu0 0
        %1307 = vmatprep.subr.bf16.mxu0 0
        %1308 = vmatpush2.bf16.msra.mxu0 0
        %1309 = vmatprep.subr.bf16.mxu0 0
        %1310 = vmatpush2.bf16.msra.mxu0 0
        %1311 = vmatprep.mubr.bf16.mxu0 0
        %1312 = vmatmul.mubr.bf16.gmra.mxu0 %v1278
        %v1313 = vpop.f32.mrf.mxu0
        %v1314 = vadd.f32 0.0, %v1313
        %v1315 = vpop.f32.mrf.mxu0
        %v1316 = vadd.f32 0.0, %v1315
        %v1317 = vpop.f32.mrf.mxu0
        %v1318 = vpop.f32.mrf.mxu0
        %1319 = vdwg.mxu0
        %1320 = vmatprep.subr.bf16.mxu0 %v1010
        %1321 = vmatpush1.bf16.msra.mxu0 %v1009
        %1322 = vmatprep.subr.bf16.mxu0 %v1006
        %1323 = vmatpush1.bf16.msra.mxu0 %v1005
        %1324 = vmatprep.subr.bf16.mxu0 %v1002
        %1325 = vmatpush1.bf16.msra.mxu0 %v1001
        %1326 = vmatprep.subr.bf16.mxu0 %v998
        %1327 = vmatpush1.bf16.msra.mxu0 %v997
        %1328 = vmatprep.subr.bf16.mxu0 %v994
        %1329 = vmatpush1.bf16.msra.mxu0 %v993
        %1330 = vmatprep.subr.bf16.mxu0 %v990
        %1331 = vmatpush1.bf16.msra.mxu0 %v989
        %1332 = vmatprep.subr.bf16.mxu0 %v986
        %1333 = vmatpush1.bf16.msra.mxu0 %v985
        %1334 = vmatprep.subr.bf16.mxu0 %v982
        %1335 = vmatpush1.bf16.msra.mxu0 %v981
        %1336 = vmatprep.subr.bf16.mxu0 0
        %1337 = vmatpush2.bf16.msra.mxu0 0
        %1338 = vmatprep.subr.bf16.mxu0 0
        %1339 = vmatpush2.bf16.msra.mxu0 0
        %1340 = vmatprep.subr.bf16.mxu0 0
        %1341 = vmatpush2.bf16.msra.mxu0 0
        %1342 = vmatprep.subr.bf16.mxu0 0
        %1343 = vmatpush2.bf16.msra.mxu0 0
        %1344 = vmatprep.subr.bf16.mxu0 0
        %1345 = vmatpush2.bf16.msra.mxu0 0
        %1346 = vmatprep.subr.bf16.mxu0 0
        %1347 = vmatpush2.bf16.msra.mxu0 0
        %1348 = vmatprep.subr.bf16.mxu0 0
        %1349 = vmatpush2.bf16.msra.mxu0 0
        %1350 = vmatprep.subr.bf16.mxu0 0
        %1351 = vmatpush2.bf16.msra.mxu0 0
        %1352 = vmatprep.mubr.bf16.mxu0 0
        %1353 = vmatmul.mubr.bf16.gmra.mxu0 %v1278
        %v1354 = vpop.f32.mrf.mxu0
        %v1355 = vadd.f32 0.0, %v1354
        %v1356 = vpop.f32.mrf.mxu0
        %v1357 = vadd.f32 0.0, %v1356
        %v1358 = vpop.f32.mrf.mxu0
        %v1359 = vpop.f32.mrf.mxu0
        %1360 = vdwg.mxu0
        %v1361 = vadd.f32 %v1274, %v1314
        %v1362 = vadd.f32 %v1275, %v1316
        %v1363 = vadd.f32 %v1276, %v1355
        %v1364 = vadd.f32 %v1277, %v1357
        %v1365 = vxor.u32 %v1361, 2147483648
        %v1366 = vxor.u32 %v1362, 2147483648
        %v1367 = vxor.u32 %v1363, 2147483648
        %v1368 = vmul.f32 %v1365, 1.442695
        %v1369 = vpow.pop %v1368
        %v1370 = vmul.f32 %v1366, 1.442695
        %v1371 = vpow.pop %v1370
        %v1372 = vmul.f32 %v1367, 1.442695
        %v1373 = vpow.pop %v1372
        %v1374 = vadd.f32 %v1369, 1.0
        %v1375 = vadd.f32 %v1371, 1.0
        %v1376 = vadd.f32 %v1373, 1.0
        %v1377 = vrcp.pop %v1374
        %v1378 = vmul.f32 1.0, %v1377
        %v1379 = vrcp.pop %v1375
        %v1380 = vmul.f32 1.0, %v1379
        %v1381 = vrcp.pop %v1376
        %v1382 = vmul.f32 1.0, %v1381
        %v1383 = vtanh.pop %v1364
        %v1384 = vmul.f32 %v1380, %v1267
        %v1385 = vmul.f32 %v1378, %v1383
        %v1386 = vadd.f32 %v1384, %v1385
        %v1387 = vtanh.pop %v1386
        %v1388 = vmul.f32 %v1382, %v1387
        %vm1389 = vcmp.gt.s32.totalorder %v801, 1
        %v1390 = vsel %vm1389, 1, 0
        %v1391 = vcvt.s32.f32 %v1390
        %1393 = vset.pattern.permute.xlu0 0
        %1394 = vperm.xlu0 %1393, %v1391
        %v1395 = vpop.permute.xlu0 %1394
        %v1397 = vmul.f32 %v1395, %v1388
        %v1398 = vpack.c.bf16 %v1397, %v1397
        %1399 = vmatprep.subr.bf16.mxu0 0
        %1400 = vmatpush1.bf16.msra.mxu0 %v1208
        %1401 = vmatprep.subr.bf16.mxu0 0
        %1402 = vmatpush1.bf16.msra.mxu0 %v1207
        %1403 = vmatprep.subr.bf16.mxu0 0
        %1404 = vmatpush1.bf16.msra.mxu0 %v1206
        %1405 = vmatprep.subr.bf16.mxu0 0
        %1406 = vmatpush1.bf16.msra.mxu0 %v1205
        %1407 = vmatprep.subr.bf16.mxu0 0
        %1408 = vmatpush1.bf16.msra.mxu0 %v1204
        %1409 = vmatprep.subr.bf16.mxu0 0
        %1410 = vmatpush1.bf16.msra.mxu0 %v1203
        %1411 = vmatprep.subr.bf16.mxu0 0
        %1412 = vmatpush1.bf16.msra.mxu0 %v1202
        %1413 = vmatprep.subr.bf16.mxu0 0
        %1414 = vmatpush1.bf16.msra.mxu0 %v1201
        %1415 = vmatprep.subr.bf16.mxu0 0
        %1416 = vmatpush2.bf16.msra.mxu0 0
        %1417 = vmatprep.subr.bf16.mxu0 0
        %1418 = vmatpush2.bf16.msra.mxu0 0
        %1419 = vmatprep.subr.bf16.mxu0 0
        %1420 = vmatpush2.bf16.msra.mxu0 0
        %1421 = vmatprep.subr.bf16.mxu0 0
        %1422 = vmatpush2.bf16.msra.mxu0 0
        %1423 = vmatprep.subr.bf16.mxu0 0
        %1424 = vmatpush2.bf16.msra.mxu0 0
        %1425 = vmatprep.subr.bf16.mxu0 0
        %1426 = vmatpush2.bf16.msra.mxu0 0
        %1427 = vmatprep.subr.bf16.mxu0 0
        %1428 = vmatpush2.bf16.msra.mxu0 0
        %1429 = vmatprep.subr.bf16.mxu0 0
        %1430 = vmatpush2.bf16.msra.mxu0 0
        %1431 = vmatprep.mubr.bf16.mxu0 0
        %1432 = vmatmul.mubr.bf16.gmra.mxu0 %v1398
        %v1433 = vpop.f32.mrf.mxu0
        %v1434 = vadd.f32 %v1167, %v1433
        %v1435 = vpop.f32.mrf.mxu0
        %v1436 = vpop.f32.mrf.mxu0
        %v1437 = vpop.f32.mrf.mxu0
        %1438 = vdwg.mxu0
        %s1439 = scalar_lea.vmem %s438, 8 [#allocation4]
        %1440 = vst [vmem:[%s1439] sm:$0xff] %v1434
        %v1441 = vsub.f32 1.0, %v1391
        %1443 = vset.pattern.permute.xlu0 0
        %1444 = vperm.xlu0 %1443, %v1441
        %v1445 = vpop.permute.xlu0 %1444
        %v1447 = vmul.f32 %v1445, %v1265
        %v1448 = vadd.f32 %v1397, %v1447
        %v1449 = vmul.f32 %v1395, %v1386
        %v1450 = vmul.f32 %v1445, %v1267
        %v1451 = vadd.f32 %v1449, %v1450
        %v1452 = vld [vmem:[#allocation2 + $0x20] sm:$0xff]
        %v1453 = vld [vmem:[#allocation2 + $0x28] sm:$0xff]
        %v1454 = vunpack.c.l.bf16 %v1452
        %v1455 = vunpack.c.h.bf16 %v1452
        %v1456 = vunpack.c.l.bf16 %v1453
        %v1457 = vunpack.c.h.bf16 %v1453
        %v1458 = vadd.f32 %v1454, %v862
        %v1459 = vadd.f32 %v1455, %v866
        %v1460 = vadd.f32 %v1456, %v870
        %v1461 = vadd.f32 %v1457, %v874
        %v1462 = vpack.c.bf16 %v1448, %v1448
        %1463 = vmatprep.subr.bf16.mxu0 %v1008
        %1464 = vmatpush1.bf16.msra.mxu0 %v1007
        %1465 = vmatprep.subr.bf16.mxu0 %v1004
        %1466 = vmatpush1.bf16.msra.mxu0 %v1003
        %1467 = vmatprep.subr.bf16.mxu0 %v1000
        %1468 = vmatpush1.bf16.msra.mxu0 %v999
        %1469 = vmatprep.subr.bf16.mxu0 %v996
        %1470 = vmatpush1.bf16.msra.mxu0 %v995
        %1471 = vmatprep.subr.bf16.mxu0 %v992
        %1472 = vmatpush1.bf16.msra.mxu0 %v991
        %1473 = vmatprep.subr.bf16.mxu0 %v988
        %1474 = vmatpush1.bf16.msra.mxu0 %v987
        %1475 = vmatprep.subr.bf16.mxu0 %v984
        %1476 = vmatpush1.bf16.msra.mxu0 %v983
        %1477 = vmatprep.subr.bf16.mxu0 %v980
        %1478 = vmatpush1.bf16.msra.mxu0 %v979
        %1479 = vmatprep.subr.bf16.mxu0 0
        %1480 = vmatpush2.bf16.msra.mxu0 0
        %1481 = vmatprep.subr.bf16.mxu0 0
        %1482 = vmatpush2.bf16.msra.mxu0 0
        %1483 = vmatprep.subr.bf16.mxu0 0
        %1484 = vmatpush2.bf16.msra.mxu0 0
        %1485 = vmatprep.subr.bf16.mxu0 0
        %1486 = vmatpush2.bf16.msra.mxu0 0
        %1487 = vmatprep.subr.bf16.mxu0 0
        %1488 = vmatpush2.bf16.msra.mxu0 0
        %1489 = vmatprep.subr.bf16.mxu0 0
        %1490 = vmatpush2.bf16.msra.mxu0 0
        %1491 = vmatprep.subr.bf16.mxu0 0
        %1492 = vmatpush2.bf16.msra.mxu0 0
        %1493 = vmatprep.subr.bf16.mxu0 0
        %1494 = vmatpush2.bf16.msra.mxu0 0
        %1495 = vmatprep.mubr.bf16.mxu0 0
        %1496 = vmatmul.mubr.bf16.gmra.mxu0 %v1462
        %v1497 = vpop.f32.mrf.mxu0
        %v1498 = vadd.f32 0.0, %v1497
        %v1499 = vpop.f32.mrf.mxu0
        %v1500 = vadd.f32 0.0, %v1499
        %v1501 = vpop.f32.mrf.mxu0
        %v1502 = vpop.f32.mrf.mxu0
        %1503 = vdwg.mxu0
        %1504 = vmatprep.subr.bf16.mxu0 %v1010
        %1505 = vmatpush1.bf16.msra.mxu0 %v1009
        %1506 = vmatprep.subr.bf16.mxu0 %v1006
        %1507 = vmatpush1.bf16.msra.mxu0 %v1005
        %1508 = vmatprep.subr.bf16.mxu0 %v1002
        %1509 = vmatpush1.bf16.msra.mxu0 %v1001
        %1510 = vmatprep.subr.bf16.mxu0 %v998
        %1511 = vmatpush1.bf16.msra.mxu0 %v997
        %1512 = vmatprep.subr.bf16.mxu0 %v994
        %1513 = vmatpush1.bf16.msra.mxu0 %v993
        %1514 = vmatprep.subr.bf16.mxu0 %v990
        %1515 = vmatpush1.bf16.msra.mxu0 %v989
        %1516 = vmatprep.subr.bf16.mxu0 %v986
        %1517 = vmatpush1.bf16.msra.mxu0 %v985
        %1518 = vmatprep.subr.bf16.mxu0 %v982
        %1519 = vmatpush1.bf16.msra.mxu0 %v981
        %1520 = vmatprep.subr.bf16.mxu0 0
        %1521 = vmatpush2.bf16.msra.mxu0 0
        %1522 = vmatprep.subr.bf16.mxu0 0
        %1523 = vmatpush2.bf16.msra.mxu0 0
        %1524 = vmatprep.subr.bf16.mxu0 0
        %1525 = vmatpush2.bf16.msra.mxu0 0
        %1526 = vmatprep.subr.bf16.mxu0 0
        %1527 = vmatpush2.bf16.msra.mxu0 0
        %1528 = vmatprep.subr.bf16.mxu0 0
        %1529 = vmatpush2.bf16.msra.mxu0 0
        %1530 = vmatprep.subr.bf16.mxu0 0
        %1531 = vmatpush2.bf16.msra.mxu0 0
        %1532 = vmatprep.subr.bf16.mxu0 0
        %1533 = vmatpush2.bf16.msra.mxu0 0
        %1534 = vmatprep.subr.bf16.mxu0 0
        %1535 = vmatpush2.bf16.msra.mxu0 0
        %1536 = vmatprep.mubr.bf16.mxu0 0
        %1537 = vmatmul.mubr.bf16.gmra.mxu0 %v1462
        %v1538 = vpop.f32.mrf.mxu0
        %v1539 = vadd.f32 0.0, %v1538
        %v1540 = vpop.f32.mrf.mxu0
        %v1541 = vadd.f32 0.0, %v1540
        %v1542 = vpop.f32.mrf.mxu0
        %v1543 = vpop.f32.mrf.mxu0
        %1544 = vdwg.mxu0
        %v1545 = vadd.f32 %v1458, %v1498
        %v1546 = vadd.f32 %v1459, %v1500
        %v1547 = vadd.f32 %v1460, %v1539
        %v1548 = vadd.f32 %v1461, %v1541
        %v1549 = vxor.u32 %v1545, 2147483648
        %v1550 = vxor.u32 %v1546, 2147483648
        %v1551 = vxor.u32 %v1547, 2147483648
        %v1552 = vmul.f32 %v1549, 1.442695
        %v1553 = vpow.pop %v1552
        %v1554 = vmul.f32 %v1550, 1.442695
        %v1555 = vpow.pop %v1554
        %v1556 = vmul.f32 %v1551, 1.442695
        %v1557 = vpow.pop %v1556
        %v1558 = vadd.f32 %v1553, 1.0
        %v1559 = vadd.f32 %v1555, 1.0
        %v1560 = vadd.f32 %v1557, 1.0
        %v1561 = vrcp.pop %v1558
        %v1562 = vmul.f32 1.0, %v1561
        %v1563 = vrcp.pop %v1559
        %v1564 = vmul.f32 1.0, %v1563
        %v1565 = vrcp.pop %v1560
        %v1566 = vmul.f32 1.0, %v1565
        %v1567 = vtanh.pop %v1548
        %v1568 = vmul.f32 %v1564, %v1451
        %v1569 = vmul.f32 %v1562, %v1567
        %v1570 = vadd.f32 %v1568, %v1569
        %v1571 = vtanh.pop %v1570
        %v1572 = vmul.f32 %v1566, %v1571
        %vm1573 = vcmp.gt.s32.totalorder %v801, 2
        %v1574 = vsel %vm1573, 1, 0
        %v1575 = vcvt.s32.f32 %v1574
        %1577 = vset.pattern.permute.xlu0 0
        %1578 = vperm.xlu0 %1577, %v1575
        %v1579 = vpop.permute.xlu0 %1578
        %v1581 = vmul.f32 %v1579, %v1572
        %v1582 = vpack.c.bf16 %v1581, %v1581
        %1583 = vmatprep.subr.bf16.mxu0 0
        %1584 = vmatpush1.bf16.msra.mxu0 %v1208
        %1585 = vmatprep.subr.bf16.mxu0 0
        %1586 = vmatpush1.bf16.msra.mxu0 %v1207
        %1587 = vmatprep.subr.bf16.mxu0 0
        %1588 = vmatpush1.bf16.msra.mxu0 %v1206
        %1589 = vmatprep.subr.bf16.mxu0 0
        %1590 = vmatpush1.bf16.msra.mxu0 %v1205
        %1591 = vmatprep.subr.bf16.mxu0 0
        %1592 = vmatpush1.bf16.msra.mxu0 %v1204
        %1593 = vmatprep.subr.bf16.mxu0 0
        %1594 = vmatpush1.bf16.msra.mxu0 %v1203
        %1595 = vmatprep.subr.bf16.mxu0 0
        %1596 = vmatpush1.bf16.msra.mxu0 %v1202
        %1597 = vmatprep.subr.bf16.mxu0 0
        %1598 = vmatpush1.bf16.msra.mxu0 %v1201
        %1599 = vmatprep.subr.bf16.mxu0 0
        %1600 = vmatpush2.bf16.msra.mxu0 0
        %1601 = vmatprep.subr.bf16.mxu0 0
        %1602 = vmatpush2.bf16.msra.mxu0 0
        %1603 = vmatprep.subr.bf16.mxu0 0
        %1604 = vmatpush2.bf16.msra.mxu0 0
        %1605 = vmatprep.subr.bf16.mxu0 0
        %1606 = vmatpush2.bf16.msra.mxu0 0
        %1607 = vmatprep.subr.bf16.mxu0 0
        %1608 = vmatpush2.bf16.msra.mxu0 0
        %1609 = vmatprep.subr.bf16.mxu0 0
        %1610 = vmatpush2.bf16.msra.mxu0 0
        %1611 = vmatprep.subr.bf16.mxu0 0
        %1612 = vmatpush2.bf16.msra.mxu0 0
        %1613 = vmatprep.subr.bf16.mxu0 0
        %1614 = vmatpush2.bf16.msra.mxu0 0
        %1615 = vmatprep.mubr.bf16.mxu0 0
        %1616 = vmatmul.mubr.bf16.gmra.mxu0 %v1582
        %v1617 = vpop.f32.mrf.mxu0
        %v1618 = vadd.f32 %v1167, %v1617
        %v1619 = vpop.f32.mrf.mxu0
        %v1620 = vpop.f32.mrf.mxu0
        %v1621 = vpop.f32.mrf.mxu0
        %1622 = vdwg.mxu0
        %s1623 = scalar_lea.vmem %s438, 16 [#allocation4]
        %1624 = vst [vmem:[%s1623] sm:$0xff] %v1618
        %v1625 = vsub.f32 1.0, %v1575
        %1627 = vset.pattern.permute.xlu0 0
        %1628 = vperm.xlu0 %1627, %v1625
        %v1629 = vpop.permute.xlu0 %1628
        %v1631 = vmul.f32 %v1629, %v1448
        %v1632 = vadd.f32 %v1581, %v1631
        %v1633 = vmul.f32 %v1579, %v1570
        %v1634 = vmul.f32 %v1629, %v1451
        %v1635 = vadd.f32 %v1633, %v1634
        %v1636 = vld [vmem:[#allocation2 + $0x30] sm:$0xff]
        %v1637 = vld [vmem:[#allocation2 + $0x38] sm:$0xff]
        %v1638 = vunpack.c.l.bf16 %v1636
        %v1639 = vunpack.c.h.bf16 %v1636
        %v1640 = vunpack.c.l.bf16 %v1637
        %v1641 = vunpack.c.h.bf16 %v1637
        %v1642 = vadd.f32 %v1638, %v862
        %v1643 = vadd.f32 %v1639, %v866
        %v1644 = vadd.f32 %v1640, %v870
        %v1645 = vadd.f32 %v1641, %v874
        %v1646 = vpack.c.bf16 %v1632, %v1632
        %1647 = vmatprep.subr.bf16.mxu0 %v1008
        %1648 = vmatpush1.bf16.msra.mxu0 %v1007
        %1649 = vmatprep.subr.bf16.mxu0 %v1004
        %1650 = vmatpush1.bf16.msra.mxu0 %v1003
        %1651 = vmatprep.subr.bf16.mxu0 %v1000
        %1652 = vmatpush1.bf16.msra.mxu0 %v999
        %1653 = vmatprep.subr.bf16.mxu0 %v996
        %1654 = vmatpush1.bf16.msra.mxu0 %v995
        %1655 = vmatprep.subr.bf16.mxu0 %v992
        %1656 = vmatpush1.bf16.msra.mxu0 %v991
        %1657 = vmatprep.subr.bf16.mxu0 %v988
        %1658 = vmatpush1.bf16.msra.mxu0 %v987
        %1659 = vmatprep.subr.bf16.mxu0 %v984
        %1660 = vmatpush1.bf16.msra.mxu0 %v983
        %1661 = vmatprep.subr.bf16.mxu0 %v980
        %1662 = vmatpush1.bf16.msra.mxu0 %v979
        %1663 = vmatprep.subr.bf16.mxu0 0
        %1664 = vmatpush2.bf16.msra.mxu0 0
        %1665 = vmatprep.subr.bf16.mxu0 0
        %1666 = vmatpush2.bf16.msra.mxu0 0
        %1667 = vmatprep.subr.bf16.mxu0 0
        %1668 = vmatpush2.bf16.msra.mxu0 0
        %1669 = vmatprep.subr.bf16.mxu0 0
        %1670 = vmatpush2.bf16.msra.mxu0 0
        %1671 = vmatprep.subr.bf16.mxu0 0
        %1672 = vmatpush2.bf16.msra.mxu0 0
        %1673 = vmatprep.subr.bf16.mxu0 0
        %1674 = vmatpush2.bf16.msra.mxu0 0
        %1675 = vmatprep.subr.bf16.mxu0 0
        %1676 = vmatpush2.bf16.msra.mxu0 0
        %1677 = vmatprep.subr.bf16.mxu0 0
        %1678 = vmatpush2.bf16.msra.mxu0 0
        %1679 = vmatprep.mubr.bf16.mxu0 0
        %1680 = vmatmul.mubr.bf16.gmra.mxu0 %v1646
        %v1681 = vpop.f32.mrf.mxu0
        %v1682 = vadd.f32 0.0, %v1681
        %v1683 = vpop.f32.mrf.mxu0
        %v1684 = vadd.f32 0.0, %v1683
        %v1685 = vpop.f32.mrf.mxu0
        %v1686 = vpop.f32.mrf.mxu0
        %1687 = vdwg.mxu0
        %1688 = vmatprep.subr.bf16.mxu0 %v1010
        %1689 = vmatpush1.bf16.msra.mxu0 %v1009
        %1690 = vmatprep.subr.bf16.mxu0 %v1006
        %1691 = vmatpush1.bf16.msra.mxu0 %v1005
        %1692 = vmatprep.subr.bf16.mxu0 %v1002
        %1693 = vmatpush1.bf16.msra.mxu0 %v1001
        %1694 = vmatprep.subr.bf16.mxu0 %v998
        %1695 = vmatpush1.bf16.msra.mxu0 %v997
        %1696 = vmatprep.subr.bf16.mxu0 %v994
        %1697 = vmatpush1.bf16.msra.mxu0 %v993
        %1698 = vmatprep.subr.bf16.mxu0 %v990
        %1699 = vmatpush1.bf16.msra.mxu0 %v989
        %1700 = vmatprep.subr.bf16.mxu0 %v986
        %1701 = vmatpush1.bf16.msra.mxu0 %v985
        %1702 = vmatprep.subr.bf16.mxu0 %v982
        %1703 = vmatpush1.bf16.msra.mxu0 %v981
        %1704 = vmatprep.subr.bf16.mxu0 0
        %1705 = vmatpush2.bf16.msra.mxu0 0
        %1706 = vmatprep.subr.bf16.mxu0 0
        %1707 = vmatpush2.bf16.msra.mxu0 0
        %1708 = vmatprep.subr.bf16.mxu0 0
        %1709 = vmatpush2.bf16.msra.mxu0 0
        %1710 = vmatprep.subr.bf16.mxu0 0
        %1711 = vmatpush2.bf16.msra.mxu0 0
        %1712 = vmatprep.subr.bf16.mxu0 0
        %1713 = vmatpush2.bf16.msra.mxu0 0
        %1714 = vmatprep.subr.bf16.mxu0 0
        %1715 = vmatpush2.bf16.msra.mxu0 0
        %1716 = vmatprep.subr.bf16.mxu0 0
        %1717 = vmatpush2.bf16.msra.mxu0 0
        %1718 = vmatprep.subr.bf16.mxu0 0
        %1719 = vmatpush2.bf16.msra.mxu0 0
        %1720 = vmatprep.mubr.bf16.mxu0 0
        %1721 = vmatmul.mubr.bf16.gmra.mxu0 %v1646
        %v1722 = vpop.f32.mrf.mxu0
        %v1723 = vadd.f32 0.0, %v1722
        %v1724 = vpop.f32.mrf.mxu0
        %v1725 = vadd.f32 0.0, %v1724
        %v1726 = vpop.f32.mrf.mxu0
        %v1727 = vpop.f32.mrf.mxu0
        %1728 = vdwg.mxu0
        %v1729 = vadd.f32 %v1642, %v1682
        %v1730 = vadd.f32 %v1643, %v1684
        %v1731 = vadd.f32 %v1644, %v1723
        %v1732 = vadd.f32 %v1645, %v1725
        %v1733 = vxor.u32 %v1729, 2147483648
        %v1734 = vxor.u32 %v1730, 2147483648
        %v1735 = vxor.u32 %v1731, 2147483648
        %v1736 = vmul.f32 %v1733, 1.442695
        %v1737 = vpow.pop %v1736
        %v1738 = vmul.f32 %v1734, 1.442695
        %v1739 = vpow.pop %v1738
        %v1740 = vmul.f32 %v1735, 1.442695
        %v1741 = vpow.pop %v1740
        %v1742 = vadd.f32 %v1737, 1.0
        %v1743 = vadd.f32 %v1739, 1.0
        %v1744 = vadd.f32 %v1741, 1.0
        %v1745 = vrcp.pop %v1742
        %v1746 = vmul.f32 1.0, %v1745
        %v1747 = vrcp.pop %v1743
        %v1748 = vmul.f32 1.0, %v1747
        %v1749 = vrcp.pop %v1744
        %v1750 = vmul.f32 1.0, %v1749
        %v1751 = vtanh.pop %v1732
        %v1752 = vmul.f32 %v1748, %v1635
        %v1753 = vmul.f32 %v1746, %v1751
        %v1754 = vadd.f32 %v1752, %v1753
        %v1755 = vtanh.pop %v1754
        %v1756 = vmul.f32 %v1750, %v1755
        %vm1757 = vcmp.gt.s32.totalorder %v801, 3
        %v1758 = vsel %vm1757, 1, 0
        %v1759 = vcvt.s32.f32 %v1758
        %1761 = vset.pattern.permute.xlu0 0
        %1762 = vperm.xlu0 %1761, %v1759
        %v1763 = vpop.permute.xlu0 %1762
        %v1765 = vmul.f32 %v1763, %v1756
        %v1766 = vpack.c.bf16 %v1765, %v1765
        %1767 = vmatprep.subr.bf16.mxu0 0
        %1768 = vmatpush1.bf16.msra.mxu0 %v1208
        %1769 = vmatprep.subr.bf16.mxu0 0
        %1770 = vmatpush1.bf16.msra.mxu0 %v1207
        %1771 = vmatprep.subr.bf16.mxu0 0
        %1772 = vmatpush1.bf16.msra.mxu0 %v1206
        %1773 = vmatprep.subr.bf16.mxu0 0
        %1774 = vmatpush1.bf16.msra.mxu0 %v1205
        %1775 = vmatprep.subr.bf16.mxu0 0
        %1776 = vmatpush1.bf16.msra.mxu0 %v1204
        %1777 = vmatprep.subr.bf16.mxu0 0
        %1778 = vmatpush1.bf16.msra.mxu0 %v1203
        %1779 = vmatprep.subr.bf16.mxu0 0
        %1780 = vmatpush1.bf16.msra.mxu0 %v1202
        %1781 = vmatprep.subr.bf16.mxu0 0
        %1782 = vmatpush1.bf16.msra.mxu0 %v1201
        %1783 = vmatprep.subr.bf16.mxu0 0
        %1784 = vmatpush2.bf16.msra.mxu0 0
        %1785 = vmatprep.subr.bf16.mxu0 0
        %1786 = vmatpush2.bf16.msra.mxu0 0
        %1787 = vmatprep.subr.bf16.mxu0 0
        %1788 = vmatpush2.bf16.msra.mxu0 0
        %1789 = vmatprep.subr.bf16.mxu0 0
        %1790 = vmatpush2.bf16.msra.mxu0 0
        %1791 = vmatprep.subr.bf16.mxu0 0
        %1792 = vmatpush2.bf16.msra.mxu0 0
        %1793 = vmatprep.subr.bf16.mxu0 0
        %1794 = vmatpush2.bf16.msra.mxu0 0
        %1795 = vmatprep.subr.bf16.mxu0 0
        %1796 = vmatpush2.bf16.msra.mxu0 0
        %1797 = vmatprep.subr.bf16.mxu0 0
        %1798 = vmatpush2.bf16.msra.mxu0 0
        %1799 = vmatprep.mubr.bf16.mxu0 0
        %1800 = vmatmul.mubr.bf16.gmra.mxu0 %v1766
        %v1801 = vpop.f32.mrf.mxu0
        %v1802 = vadd.f32 %v1167, %v1801
        %v1803 = vpop.f32.mrf.mxu0
        %v1804 = vpop.f32.mrf.mxu0
        %v1805 = vpop.f32.mrf.mxu0
        %1806 = vdwg.mxu0
        %s1807 = scalar_lea.vmem %s438, 24 [#allocation4]
        %1808 = vst [vmem:[%s1807] sm:$0xff] %v1802
        %v1809 = vsub.f32 1.0, %v1759
        %1811 = vset.pattern.permute.xlu0 0
        %1812 = vperm.xlu0 %1811, %v1809
        %v1813 = vpop.permute.xlu0 %1812
        %v1815 = vmul.f32 %v1813, %v1632
        %v1816 = vadd.f32 %v1765, %v1815
        %v1817 = vmul.f32 %v1763, %v1754
        %v1818 = vmul.f32 %v1813, %v1635
        %v1819 = vadd.f32 %v1817, %v1818
        %v1820 = vld [vmem:[#allocation2 + $0x40] sm:$0xff]
        %v1821 = vld [vmem:[#allocation2 + $0x48] sm:$0xff]
        %v1822 = vunpack.c.l.bf16 %v1820
        %v1823 = vunpack.c.h.bf16 %v1820
        %v1824 = vunpack.c.l.bf16 %v1821
        %v1825 = vunpack.c.h.bf16 %v1821
        %v1826 = vadd.f32 %v1822, %v862
        %v1827 = vadd.f32 %v1823, %v866
        %v1828 = vadd.f32 %v1824, %v870
        %v1829 = vadd.f32 %v1825, %v874
        %v1830 = vpack.c.bf16 %v1816, %v1816
        %1831 = vmatprep.subr.bf16.mxu0 %v1008
        %1832 = vmatpush1.bf16.msra.mxu0 %v1007
        %1833 = vmatprep.subr.bf16.mxu0 %v1004
        %1834 = vmatpush1.bf16.msra.mxu0 %v1003
        %1835 = vmatprep.subr.bf16.mxu0 %v1000
        %1836 = vmatpush1.bf16.msra.mxu0 %v999
        %1837 = vmatprep.subr.bf16.mxu0 %v996
        %1838 = vmatpush1.bf16.msra.mxu0 %v995
        %1839 = vmatprep.subr.bf16.mxu0 %v992
        %1840 = vmatpush1.bf16.msra.mxu0 %v991
        %1841 = vmatprep.subr.bf16.mxu0 %v988
        %1842 = vmatpush1.bf16.msra.mxu0 %v987
        %1843 = vmatprep.subr.bf16.mxu0 %v984
        %1844 = vmatpush1.bf16.msra.mxu0 %v983
        %1845 = vmatprep.subr.bf16.mxu0 %v980
        %1846 = vmatpush1.bf16.msra.mxu0 %v979
        %1847 = vmatprep.subr.bf16.mxu0 0
        %1848 = vmatpush2.bf16.msra.mxu0 0
        %1849 = vmatprep.subr.bf16.mxu0 0
        %1850 = vmatpush2.bf16.msra.mxu0 0
        %1851 = vmatprep.subr.bf16.mxu0 0
        %1852 = vmatpush2.bf16.msra.mxu0 0
        %1853 = vmatprep.subr.bf16.mxu0 0
        %1854 = vmatpush2.bf16.msra.mxu0 0
        %1855 = vmatprep.subr.bf16.mxu0 0
        %1856 = vmatpush2.bf16.msra.mxu0 0
        %1857 = vmatprep.subr.bf16.mxu0 0
        %1858 = vmatpush2.bf16.msra.mxu0 0
        %1859 = vmatprep.subr.bf16.mxu0 0
        %1860 = vmatpush2.bf16.msra.mxu0 0
        %1861 = vmatprep.subr.bf16.mxu0 0
        %1862 = vmatpush2.bf16.msra.mxu0 0
        %1863 = vmatprep.mubr.bf16.mxu0 0
        %1864 = vmatmul.mubr.bf16.gmra.mxu0 %v1830
        %v1865 = vpop.f32.mrf.mxu0
        %v1866 = vadd.f32 0.0, %v1865
        %v1867 = vpop.f32.mrf.mxu0
        %v1868 = vadd.f32 0.0, %v1867
        %v1869 = vpop.f32.mrf.mxu0
        %v1870 = vpop.f32.mrf.mxu0
        %1871 = vdwg.mxu0
        %1872 = vmatprep.subr.bf16.mxu0 %v1010
        %1873 = vmatpush1.bf16.msra.mxu0 %v1009
        %1874 = vmatprep.subr.bf16.mxu0 %v1006
        %1875 = vmatpush1.bf16.msra.mxu0 %v1005
        %1876 = vmatprep.subr.bf16.mxu0 %v1002
        %1877 = vmatpush1.bf16.msra.mxu0 %v1001
        %1878 = vmatprep.subr.bf16.mxu0 %v998
        %1879 = vmatpush1.bf16.msra.mxu0 %v997
        %1880 = vmatprep.subr.bf16.mxu0 %v994
        %1881 = vmatpush1.bf16.msra.mxu0 %v993
        %1882 = vmatprep.subr.bf16.mxu0 %v990
        %1883 = vmatpush1.bf16.msra.mxu0 %v989
        %1884 = vmatprep.subr.bf16.mxu0 %v986
        %1885 = vmatpush1.bf16.msra.mxu0 %v985
        %1886 = vmatprep.subr.bf16.mxu0 %v982
        %1887 = vmatpush1.bf16.msra.mxu0 %v981
        %1888 = vmatprep.subr.bf16.mxu0 0
        %1889 = vmatpush2.bf16.msra.mxu0 0
        %1890 = vmatprep.subr.bf16.mxu0 0
        %1891 = vmatpush2.bf16.msra.mxu0 0
        %1892 = vmatprep.subr.bf16.mxu0 0
        %1893 = vmatpush2.bf16.msra.mxu0 0
        %1894 = vmatprep.subr.bf16.mxu0 0
        %1895 = vmatpush2.bf16.msra.mxu0 0
        %1896 = vmatprep.subr.bf16.mxu0 0
        %1897 = vmatpush2.bf16.msra.mxu0 0
        %1898 = vmatprep.subr.bf16.mxu0 0
        %1899 = vmatpush2.bf16.msra.mxu0 0
        %1900 = vmatprep.subr.bf16.mxu0 0
        %1901 = vmatpush2.bf16.msra.mxu0 0
        %1902 = vmatprep.subr.bf16.mxu0 0
        %1903 = vmatpush2.bf16.msra.mxu0 0
        %1904 = vmatprep.mubr.bf16.mxu0 0
        %1905 = vmatmul.mubr.bf16.gmra.mxu0 %v1830
        %v1906 = vpop.f32.mrf.mxu0
        %v1907 = vadd.f32 0.0, %v1906
        %v1908 = vpop.f32.mrf.mxu0
        %v1909 = vadd.f32 0.0, %v1908
        %v1910 = vpop.f32.mrf.mxu0
        %v1911 = vpop.f32.mrf.mxu0
        %1912 = vdwg.mxu0
        %v1913 = vadd.f32 %v1826, %v1866
        %v1914 = vadd.f32 %v1827, %v1868
        %v1915 = vadd.f32 %v1828, %v1907
        %v1916 = vadd.f32 %v1829, %v1909
        %v1917 = vxor.u32 %v1913, 2147483648
        %v1918 = vxor.u32 %v1914, 2147483648
        %v1919 = vxor.u32 %v1915, 2147483648
        %v1920 = vmul.f32 %v1917, 1.442695
        %v1921 = vpow.pop %v1920
        %v1922 = vmul.f32 %v1918, 1.442695
        %v1923 = vpow.pop %v1922
        %v1924 = vmul.f32 %v1919, 1.442695
        %v1925 = vpow.pop %v1924
        %v1926 = vadd.f32 %v1921, 1.0
        %v1927 = vadd.f32 %v1923, 1.0
        %v1928 = vadd.f32 %v1925, 1.0
        %v1929 = vrcp.pop %v1926
        %v1930 = vmul.f32 1.0, %v1929
        %v1931 = vrcp.pop %v1927
        %v1932 = vmul.f32 1.0, %v1931
        %v1933 = vrcp.pop %v1928
        %v1934 = vmul.f32 1.0, %v1933
        %v1935 = vtanh.pop %v1916
        %v1936 = vmul.f32 %v1932, %v1819
        %v1937 = vmul.f32 %v1930, %v1935
        %v1938 = vadd.f32 %v1936, %v1937
        %v1939 = vtanh.pop %v1938
        %v1940 = vmul.f32 %v1934, %v1939
        %vm1941 = vcmp.gt.s32.totalorder %v801, 4
        %v1942 = vsel %vm1941, 1, 0
        %v1943 = vcvt.s32.f32 %v1942
        %1945 = vset.pattern.permute.xlu0 0
        %1946 = vperm.xlu0 %1945, %v1943
        %v1947 = vpop.permute.xlu0 %1946
        %v1949 = vmul.f32 %v1947, %v1940
        %v1950 = vpack.c.bf16 %v1949, %v1949
        %1951 = vmatprep.subr.bf16.mxu0 0
        %1952 = vmatpush1.bf16.msra.mxu0 %v1208
        %1953 = vmatprep.subr.bf16.mxu0 0
        %1954 = vmatpush1.bf16.msra.mxu0 %v1207
        %1955 = vmatprep.subr.bf16.mxu0 0
        %1956 = vmatpush1.bf16.msra.mxu0 %v1206
        %1957 = vmatprep.subr.bf16.mxu0 0
        %1958 = vmatpush1.bf16.msra.mxu0 %v1205
        %1959 = vmatprep.subr.bf16.mxu0 0
        %1960 = vmatpush1.bf16.msra.mxu0 %v1204
        %1961 = vmatprep.subr.bf16.mxu0 0
        %1962 = vmatpush1.bf16.msra.mxu0 %v1203
        %1963 = vmatprep.subr.bf16.mxu0 0
        %1964 = vmatpush1.bf16.msra.mxu0 %v1202
        %1965 = vmatprep.subr.bf16.mxu0 0
        %1966 = vmatpush1.bf16.msra.mxu0 %v1201
        %1967 = vmatprep.subr.bf16.mxu0 0
        %1968 = vmatpush2.bf16.msra.mxu0 0
        %1969 = vmatprep.subr.bf16.mxu0 0
        %1970 = vmatpush2.bf16.msra.mxu0 0
        %1971 = vmatprep.subr.bf16.mxu0 0
        %1972 = vmatpush2.bf16.msra.mxu0 0
        %1973 = vmatprep.subr.bf16.mxu0 0
        %1974 = vmatpush2.bf16.msra.mxu0 0
        %1975 = vmatprep.subr.bf16.mxu0 0
        %1976 = vmatpush2.bf16.msra.mxu0 0
        %1977 = vmatprep.subr.bf16.mxu0 0
        %1978 = vmatpush2.bf16.msra.mxu0 0
        %1979 = vmatprep.subr.bf16.mxu0 0
        %1980 = vmatpush2.bf16.msra.mxu0 0
        %1981 = vmatprep.subr.bf16.mxu0 0
        %1982 = vmatpush2.bf16.msra.mxu0 0
        %1983 = vmatprep.mubr.bf16.mxu0 0
        %1984 = vmatmul.mubr.bf16.gmra.mxu0 %v1950
        %v1985 = vpop.f32.mrf.mxu0
        %v1986 = vadd.f32 %v1167, %v1985
        %v1987 = vpop.f32.mrf.mxu0
        %v1988 = vpop.f32.mrf.mxu0
        %v1989 = vpop.f32.mrf.mxu0
        %1990 = vdwg.mxu0
        %s1991 = scalar_lea.vmem %s438, 32 [#allocation4]
        %1992 = vst [vmem:[%s1991] sm:$0xff] %v1986
        %v1993 = vsub.f32 1.0, %v1943
        %1995 = vset.pattern.permute.xlu0 0
        %1996 = vperm.xlu0 %1995, %v1993
        %v1997 = vpop.permute.xlu0 %1996
        %v1999 = vmul.f32 %v1997, %v1816
        %v2000 = vadd.f32 %v1949, %v1999
        %v2001 = vmul.f32 %v1947, %v1938
        %v2002 = vmul.f32 %v1997, %v1819
        %v2003 = vadd.f32 %v2001, %v2002
        %v2004 = vld [vmem:[#allocation2 + $0x50] sm:$0xff]
        %v2005 = vld [vmem:[#allocation2 + $0x58] sm:$0xff]
        %v2006 = vunpack.c.l.bf16 %v2004
        %v2007 = vunpack.c.h.bf16 %v2004
        %v2008 = vunpack.c.l.bf16 %v2005
        %v2009 = vunpack.c.h.bf16 %v2005
        %v2010 = vadd.f32 %v2006, %v862
        %v2011 = vadd.f32 %v2007, %v866
        %v2012 = vadd.f32 %v2008, %v870
        %v2013 = vadd.f32 %v2009, %v874
        %v2014 = vpack.c.bf16 %v2000, %v2000
        %2015 = vmatprep.subr.bf16.mxu0 %v1008
        %2016 = vmatpush1.bf16.msra.mxu0 %v1007
        %2017 = vmatprep.subr.bf16.mxu0 %v1004
        %2018 = vmatpush1.bf16.msra.mxu0 %v1003
        %2019 = vmatprep.subr.bf16.mxu0 %v1000
        %2020 = vmatpush1.bf16.msra.mxu0 %v999
        %2021 = vmatprep.subr.bf16.mxu0 %v996
        %2022 = vmatpush1.bf16.msra.mxu0 %v995
        %2023 = vmatprep.subr.bf16.mxu0 %v992
        %2024 = vmatpush1.bf16.msra.mxu0 %v991
        %2025 = vmatprep.subr.bf16.mxu0 %v988
        %2026 = vmatpush1.bf16.msra.mxu0 %v987
        %2027 = vmatprep.subr.bf16.mxu0 %v984
        %2028 = vmatpush1.bf16.msra.mxu0 %v983
        %2029 = vmatprep.subr.bf16.mxu0 %v980
        %2030 = vmatpush1.bf16.msra.mxu0 %v979
        %2031 = vmatprep.subr.bf16.mxu0 0
        %2032 = vmatpush2.bf16.msra.mxu0 0
        %2033 = vmatprep.subr.bf16.mxu0 0
        %2034 = vmatpush2.bf16.msra.mxu0 0
        %2035 = vmatprep.subr.bf16.mxu0 0
        %2036 = vmatpush2.bf16.msra.mxu0 0
        %2037 = vmatprep.subr.bf16.mxu0 0
        %2038 = vmatpush2.bf16.msra.mxu0 0
        %2039 = vmatprep.subr.bf16.mxu0 0
        %2040 = vmatpush2.bf16.msra.mxu0 0
        %2041 = vmatprep.subr.bf16.mxu0 0
        %2042 = vmatpush2.bf16.msra.mxu0 0
        %2043 = vmatprep.subr.bf16.mxu0 0
        %2044 = vmatpush2.bf16.msra.mxu0 0
        %2045 = vmatprep.subr.bf16.mxu0 0
        %2046 = vmatpush2.bf16.msra.mxu0 0
        %2047 = vmatprep.mubr.bf16.mxu0 0
        %2048 = vmatmul.mubr.bf16.gmra.mxu0 %v2014
        %v2049 = vpop.f32.mrf.mxu0
        %v2050 = vadd.f32 0.0, %v2049
        %v2051 = vpop.f32.mrf.mxu0
        %v2052 = vadd.f32 0.0, %v2051
        %v2053 = vpop.f32.mrf.mxu0
        %v2054 = vpop.f32.mrf.mxu0
        %2055 = vdwg.mxu0
        %2056 = vmatprep.subr.bf16.mxu0 %v1010
        %2057 = vmatpush1.bf16.msra.mxu0 %v1009
        %2058 = vmatprep.subr.bf16.mxu0 %v1006
        %2059 = vmatpush1.bf16.msra.mxu0 %v1005
        %2060 = vmatprep.subr.bf16.mxu0 %v1002
        %2061 = vmatpush1.bf16.msra.mxu0 %v1001
        %2062 = vmatprep.subr.bf16.mxu0 %v998
        %2063 = vmatpush1.bf16.msra.mxu0 %v997
        %2064 = vmatprep.subr.bf16.mxu0 %v994
        %2065 = vmatpush1.bf16.msra.mxu0 %v993
        %2066 = vmatprep.subr.bf16.mxu0 %v990
        %2067 = vmatpush1.bf16.msra.mxu0 %v989
        %2068 = vmatprep.subr.bf16.mxu0 %v986
        %2069 = vmatpush1.bf16.msra.mxu0 %v985
        %2070 = vmatprep.subr.bf16.mxu0 %v982
        %2071 = vmatpush1.bf16.msra.mxu0 %v981
        %2072 = vmatprep.subr.bf16.mxu0 0
        %2073 = vmatpush2.bf16.msra.mxu0 0
        %2074 = vmatprep.subr.bf16.mxu0 0
        %2075 = vmatpush2.bf16.msra.mxu0 0
        %2076 = vmatprep.subr.bf16.mxu0 0
        %2077 = vmatpush2.bf16.msra.mxu0 0
        %2078 = vmatprep.subr.bf16.mxu0 0
        %2079 = vmatpush2.bf16.msra.mxu0 0
        %2080 = vmatprep.subr.bf16.mxu0 0
        %2081 = vmatpush2.bf16.msra.mxu0 0
        %2082 = vmatprep.subr.bf16.mxu0 0
        %2083 = vmatpush2.bf16.msra.mxu0 0
        %2084 = vmatprep.subr.bf16.mxu0 0
        %2085 = vmatpush2.bf16.msra.mxu0 0
        %2086 = vmatprep.subr.bf16.mxu0 0
        %2087 = vmatpush2.bf16.msra.mxu0 0
        %2088 = vmatprep.mubr.bf16.mxu0 0
        %2089 = vmatmul.mubr.bf16.gmra.mxu0 %v2014
        %v2090 = vpop.f32.mrf.mxu0
        %v2091 = vadd.f32 0.0, %v2090
        %v2092 = vpop.f32.mrf.mxu0
        %v2093 = vadd.f32 0.0, %v2092
        %v2094 = vpop.f32.mrf.mxu0
        %v2095 = vpop.f32.mrf.mxu0
        %2096 = vdwg.mxu0
        %v2097 = vadd.f32 %v2010, %v2050
        %v2098 = vadd.f32 %v2011, %v2052
        %v2099 = vadd.f32 %v2012, %v2091
        %v2100 = vadd.f32 %v2013, %v2093
        %v2101 = vxor.u32 %v2097, 2147483648
        %v2102 = vxor.u32 %v2098, 2147483648
        %v2103 = vxor.u32 %v2099, 2147483648
        %v2104 = vmul.f32 %v2101, 1.442695
        %v2105 = vpow.pop %v2104
        %v2106 = vmul.f32 %v2102, 1.442695
        %v2107 = vpow.pop %v2106
        %v2108 = vmul.f32 %v2103, 1.442695
        %v2109 = vpow.pop %v2108
        %v2110 = vadd.f32 %v2105, 1.0
        %v2111 = vadd.f32 %v2107, 1.0
        %v2112 = vadd.f32 %v2109, 1.0
        %v2113 = vrcp.pop %v2110
        %v2114 = vmul.f32 1.0, %v2113
        %v2115 = vrcp.pop %v2111
        %v2116 = vmul.f32 1.0, %v2115
        %v2117 = vrcp.pop %v2112
        %v2118 = vmul.f32 1.0, %v2117
        %v2119 = vtanh.pop %v2100
        %v2120 = vmul.f32 %v2116, %v2003
        %v2121 = vmul.f32 %v2114, %v2119
        %v2122 = vadd.f32 %v2120, %v2121
        %v2123 = vtanh.pop %v2122
        %v2124 = vmul.f32 %v2118, %v2123
        %vm2125 = vcmp.gt.s32.totalorder %v801, 5
        %v2126 = vsel %vm2125, 1, 0
        %v2127 = vcvt.s32.f32 %v2126
        %2129 = vset.pattern.permute.xlu0 0
        %2130 = vperm.xlu0 %2129, %v2127
        %v2131 = vpop.permute.xlu0 %2130
        %v2133 = vmul.f32 %v2131, %v2124
        %v2134 = vpack.c.bf16 %v2133, %v2133
        %2135 = vmatprep.subr.bf16.mxu0 0
        %2136 = vmatpush1.bf16.msra.mxu0 %v1208
        %2137 = vmatprep.subr.bf16.mxu0 0
        %2138 = vmatpush1.bf16.msra.mxu0 %v1207
        %2139 = vmatprep.subr.bf16.mxu0 0
        %2140 = vmatpush1.bf16.msra.mxu0 %v1206
        %2141 = vmatprep.subr.bf16.mxu0 0
        %2142 = vmatpush1.bf16.msra.mxu0 %v1205
        %2143 = vmatprep.subr.bf16.mxu0 0
        %2144 = vmatpush1.bf16.msra.mxu0 %v1204
        %2145 = vmatprep.subr.bf16.mxu0 0
        %2146 = vmatpush1.bf16.msra.mxu0 %v1203
        %2147 = vmatprep.subr.bf16.mxu0 0
        %2148 = vmatpush1.bf16.msra.mxu0 %v1202
        %2149 = vmatprep.subr.bf16.mxu0 0
        %2150 = vmatpush1.bf16.msra.mxu0 %v1201
        %2151 = vmatprep.subr.bf16.mxu0 0
        %2152 = vmatpush2.bf16.msra.mxu0 0
        %2153 = vmatprep.subr.bf16.mxu0 0
        %2154 = vmatpush2.bf16.msra.mxu0 0
        %2155 = vmatprep.subr.bf16.mxu0 0
        %2156 = vmatpush2.bf16.msra.mxu0 0
        %2157 = vmatprep.subr.bf16.mxu0 0
        %2158 = vmatpush2.bf16.msra.mxu0 0
        %2159 = vmatprep.subr.bf16.mxu0 0
        %2160 = vmatpush2.bf16.msra.mxu0 0
        %2161 = vmatprep.subr.bf16.mxu0 0
        %2162 = vmatpush2.bf16.msra.mxu0 0
        %2163 = vmatprep.subr.bf16.mxu0 0
        %2164 = vmatpush2.bf16.msra.mxu0 0
        %2165 = vmatprep.subr.bf16.mxu0 0
        %2166 = vmatpush2.bf16.msra.mxu0 0
        %2167 = vmatprep.mubr.bf16.mxu0 0
        %2168 = vmatmul.mubr.bf16.gmra.mxu0 %v2134
        %v2169 = vpop.f32.mrf.mxu0
        %v2170 = vadd.f32 %v1167, %v2169
        %v2171 = vpop.f32.mrf.mxu0
        %v2172 = vpop.f32.mrf.mxu0
        %v2173 = vpop.f32.mrf.mxu0
        %2174 = vdwg.mxu0
        %s2175 = scalar_lea.vmem %s438, 40 [#allocation4]
        %2176 = vst [vmem:[%s2175] sm:$0xff] %v2170
        %v2177 = vsub.f32 1.0, %v2127
        %2179 = vset.pattern.permute.xlu0 0
        %2180 = vperm.xlu0 %2179, %v2177
        %v2181 = vpop.permute.xlu0 %2180
        %v2183 = vmul.f32 %v2181, %v2000
        %v2184 = vadd.f32 %v2133, %v2183
        %v2185 = vmul.f32 %v2131, %v2122
        %v2186 = vmul.f32 %v2181, %v2003
        %v2187 = vadd.f32 %v2185, %v2186
        %v2188 = vld [vmem:[#allocation2 + $0x60] sm:$0xff]
        %v2189 = vld [vmem:[#allocation2 + $0x68] sm:$0xff]
        %v2190 = vunpack.c.l.bf16 %v2188
        %v2191 = vunpack.c.h.bf16 %v2188
        %v2192 = vunpack.c.l.bf16 %v2189
        %v2193 = vunpack.c.h.bf16 %v2189
        %v2194 = vadd.f32 %v2190, %v862
        %v2195 = vadd.f32 %v2191, %v866
        %v2196 = vadd.f32 %v2192, %v870
        %v2197 = vadd.f32 %v2193, %v874
        %v2198 = vpack.c.bf16 %v2184, %v2184
        %2199 = vmatprep.subr.bf16.mxu0 %v1008
        %2200 = vmatpush1.bf16.msra.mxu0 %v1007
        %2201 = vmatprep.subr.bf16.mxu0 %v1004
        %2202 = vmatpush1.bf16.msra.mxu0 %v1003
        %2203 = vmatprep.subr.bf16.mxu0 %v1000
        %2204 = vmatpush1.bf16.msra.mxu0 %v999
        %2205 = vmatprep.subr.bf16.mxu0 %v996
        %2206 = vmatpush1.bf16.msra.mxu0 %v995
        %2207 = vmatprep.subr.bf16.mxu0 %v992
        %2208 = vmatpush1.bf16.msra.mxu0 %v991
        %2209 = vmatprep.subr.bf16.mxu0 %v988
        %2210 = vmatpush1.bf16.msra.mxu0 %v987
        %2211 = vmatprep.subr.bf16.mxu0 %v984
        %2212 = vmatpush1.bf16.msra.mxu0 %v983
        %2213 = vmatprep.subr.bf16.mxu0 %v980
        %2214 = vmatpush1.bf16.msra.mxu0 %v979
        %2215 = vmatprep.subr.bf16.mxu0 0
        %2216 = vmatpush2.bf16.msra.mxu0 0
        %2217 = vmatprep.subr.bf16.mxu0 0
        %2218 = vmatpush2.bf16.msra.mxu0 0
        %2219 = vmatprep.subr.bf16.mxu0 0
        %2220 = vmatpush2.bf16.msra.mxu0 0
        %2221 = vmatprep.subr.bf16.mxu0 0
        %2222 = vmatpush2.bf16.msra.mxu0 0
        %2223 = vmatprep.subr.bf16.mxu0 0
        %2224 = vmatpush2.bf16.msra.mxu0 0
        %2225 = vmatprep.subr.bf16.mxu0 0
        %2226 = vmatpush2.bf16.msra.mxu0 0
        %2227 = vmatprep.subr.bf16.mxu0 0
        %2228 = vmatpush2.bf16.msra.mxu0 0
        %2229 = vmatprep.subr.bf16.mxu0 0
        %2230 = vmatpush2.bf16.msra.mxu0 0
        %2231 = vmatprep.mubr.bf16.mxu0 0
        %2232 = vmatmul.mubr.bf16.gmra.mxu0 %v2198
        %v2233 = vpop.f32.mrf.mxu0
        %v2234 = vadd.f32 0.0, %v2233
        %v2235 = vpop.f32.mrf.mxu0
        %v2236 = vadd.f32 0.0, %v2235
        %v2237 = vpop.f32.mrf.mxu0
        %v2238 = vpop.f32.mrf.mxu0
        %2239 = vdwg.mxu0
        %2240 = vmatprep.subr.bf16.mxu0 %v1010
        %2241 = vmatpush1.bf16.msra.mxu0 %v1009
        %2242 = vmatprep.subr.bf16.mxu0 %v1006
        %2243 = vmatpush1.bf16.msra.mxu0 %v1005
        %2244 = vmatprep.subr.bf16.mxu0 %v1002
        %2245 = vmatpush1.bf16.msra.mxu0 %v1001
        %2246 = vmatprep.subr.bf16.mxu0 %v998
        %2247 = vmatpush1.bf16.msra.mxu0 %v997
        %2248 = vmatprep.subr.bf16.mxu0 %v994
        %2249 = vmatpush1.bf16.msra.mxu0 %v993
        %2250 = vmatprep.subr.bf16.mxu0 %v990
        %2251 = vmatpush1.bf16.msra.mxu0 %v989
        %2252 = vmatprep.subr.bf16.mxu0 %v986
        %2253 = vmatpush1.bf16.msra.mxu0 %v985
        %2254 = vmatprep.subr.bf16.mxu0 %v982
        %2255 = vmatpush1.bf16.msra.mxu0 %v981
        %2256 = vmatprep.subr.bf16.mxu0 0
        %2257 = vmatpush2.bf16.msra.mxu0 0
        %2258 = vmatprep.subr.bf16.mxu0 0
        %2259 = vmatpush2.bf16.msra.mxu0 0
        %2260 = vmatprep.subr.bf16.mxu0 0
        %2261 = vmatpush2.bf16.msra.mxu0 0
        %2262 = vmatprep.subr.bf16.mxu0 0
        %2263 = vmatpush2.bf16.msra.mxu0 0
        %2264 = vmatprep.subr.bf16.mxu0 0
        %2265 = vmatpush2.bf16.msra.mxu0 0
        %2266 = vmatprep.subr.bf16.mxu0 0
        %2267 = vmatpush2.bf16.msra.mxu0 0
        %2268 = vmatprep.subr.bf16.mxu0 0
        %2269 = vmatpush2.bf16.msra.mxu0 0
        %2270 = vmatprep.subr.bf16.mxu0 0
        %2271 = vmatpush2.bf16.msra.mxu0 0
        %2272 = vmatprep.mubr.bf16.mxu0 0
        %2273 = vmatmul.mubr.bf16.gmra.mxu0 %v2198
        %v2274 = vpop.f32.mrf.mxu0
        %v2275 = vadd.f32 0.0, %v2274
        %v2276 = vpop.f32.mrf.mxu0
        %v2277 = vadd.f32 0.0, %v2276
        %v2278 = vpop.f32.mrf.mxu0
        %v2279 = vpop.f32.mrf.mxu0
        %2280 = vdwg.mxu0
        %v2281 = vadd.f32 %v2194, %v2234
        %v2282 = vadd.f32 %v2195, %v2236
        %v2283 = vadd.f32 %v2196, %v2275
        %v2284 = vadd.f32 %v2197, %v2277
        %v2285 = vxor.u32 %v2281, 2147483648
        %v2286 = vxor.u32 %v2282, 2147483648
        %v2287 = vxor.u32 %v2283, 2147483648
        %v2288 = vmul.f32 %v2285, 1.442695
        %v2289 = vpow.pop %v2288
        %v2290 = vmul.f32 %v2286, 1.442695
        %v2291 = vpow.pop %v2290
        %v2292 = vmul.f32 %v2287, 1.442695
        %v2293 = vpow.pop %v2292
        %v2294 = vadd.f32 %v2289, 1.0
        %v2295 = vadd.f32 %v2291, 1.0
        %v2296 = vadd.f32 %v2293, 1.0
        %v2297 = vrcp.pop %v2294
        %v2298 = vmul.f32 1.0, %v2297
        %v2299 = vrcp.pop %v2295
        %v2300 = vmul.f32 1.0, %v2299
        %v2301 = vrcp.pop %v2296
        %v2302 = vmul.f32 1.0, %v2301
        %v2303 = vtanh.pop %v2284
        %v2304 = vmul.f32 %v2300, %v2187
        %v2305 = vmul.f32 %v2298, %v2303
        %v2306 = vadd.f32 %v2304, %v2305
        %v2307 = vtanh.pop %v2306
        %v2308 = vmul.f32 %v2302, %v2307
        %vm2309 = vcmp.gt.s32.totalorder %v801, 6
        %v2310 = vsel %vm2309, 1, 0
        %v2311 = vcvt.s32.f32 %v2310
        %2313 = vset.pattern.permute.xlu0 0
        %2314 = vperm.xlu0 %2313, %v2311
        %v2315 = vpop.permute.xlu0 %2314
        %v2317 = vmul.f32 %v2315, %v2308
        %v2318 = vpack.c.bf16 %v2317, %v2317
        %2319 = vmatprep.subr.bf16.mxu0 0
        %2320 = vmatpush1.bf16.msra.mxu0 %v1208
        %2321 = vmatprep.subr.bf16.mxu0 0
        %2322 = vmatpush1.bf16.msra.mxu0 %v1207
        %2323 = vmatprep.subr.bf16.mxu0 0
        %2324 = vmatpush1.bf16.msra.mxu0 %v1206
        %2325 = vmatprep.subr.bf16.mxu0 0
        %2326 = vmatpush1.bf16.msra.mxu0 %v1205
        %2327 = vmatprep.subr.bf16.mxu0 0
        %2328 = vmatpush1.bf16.msra.mxu0 %v1204
        %2329 = vmatprep.subr.bf16.mxu0 0
        %2330 = vmatpush1.bf16.msra.mxu0 %v1203
        %2331 = vmatprep.subr.bf16.mxu0 0
        %2332 = vmatpush1.bf16.msra.mxu0 %v1202
        %2333 = vmatprep.subr.bf16.mxu0 0
        %2334 = vmatpush1.bf16.msra.mxu0 %v1201
        %2335 = vmatprep.subr.bf16.mxu0 0
        %2336 = vmatpush2.bf16.msra.mxu0 0
        %2337 = vmatprep.subr.bf16.mxu0 0
        %2338 = vmatpush2.bf16.msra.mxu0 0
        %2339 = vmatprep.subr.bf16.mxu0 0
        %2340 = vmatpush2.bf16.msra.mxu0 0
        %2341 = vmatprep.subr.bf16.mxu0 0
        %2342 = vmatpush2.bf16.msra.mxu0 0
        %2343 = vmatprep.subr.bf16.mxu0 0
        %2344 = vmatpush2.bf16.msra.mxu0 0
        %2345 = vmatprep.subr.bf16.mxu0 0
        %2346 = vmatpush2.bf16.msra.mxu0 0
        %2347 = vmatprep.subr.bf16.mxu0 0
        %2348 = vmatpush2.bf16.msra.mxu0 0
        %2349 = vmatprep.subr.bf16.mxu0 0
        %2350 = vmatpush2.bf16.msra.mxu0 0
        %2351 = vmatprep.mubr.bf16.mxu0 0
        %2352 = vmatmul.mubr.bf16.gmra.mxu0 %v2318
        %v2353 = vpop.f32.mrf.mxu0
        %v2354 = vadd.f32 %v1167, %v2353
        %v2355 = vpop.f32.mrf.mxu0
        %v2356 = vpop.f32.mrf.mxu0
        %v2357 = vpop.f32.mrf.mxu0
        %2358 = vdwg.mxu0
        %s2359 = scalar_lea.vmem %s438, 48 [#allocation4]
        %2360 = vst [vmem:[%s2359] sm:$0xff] %v2354
        %v2361 = vsub.f32 1.0, %v2311
        %2363 = vset.pattern.permute.xlu0 0
        %2364 = vperm.xlu0 %2363, %v2361
        %v2365 = vpop.permute.xlu0 %2364
        %v2367 = vmul.f32 %v2365, %v2184
        %v2368 = vadd.f32 %v2317, %v2367
        %v2369 = vmul.f32 %v2315, %v2306
        %v2370 = vmul.f32 %v2365, %v2187
        %v2371 = vadd.f32 %v2369, %v2370
        %v2372 = vld [vmem:[#allocation2 + $0x70] sm:$0xff]
        %v2373 = vld [vmem:[#allocation2 + $0x78] sm:$0xff]
        %v2374 = vunpack.c.l.bf16 %v2372
        %v2375 = vunpack.c.h.bf16 %v2372
        %v2376 = vunpack.c.l.bf16 %v2373
        %v2377 = vunpack.c.h.bf16 %v2373
        %v2378 = vadd.f32 %v2374, %v862
        %v2379 = vadd.f32 %v2375, %v866
        %v2380 = vadd.f32 %v2376, %v870
        %v2381 = vadd.f32 %v2377, %v874
        %v2382 = vpack.c.bf16 %v2368, %v2368
        %2383 = vmatprep.subr.bf16.mxu0 %v1008
        %2384 = vmatpush1.bf16.msra.mxu0 %v1007
        %2385 = vmatprep.subr.bf16.mxu0 %v1004
        %2386 = vmatpush1.bf16.msra.mxu0 %v1003
        %2387 = vmatprep.subr.bf16.mxu0 %v1000
        %2388 = vmatpush1.bf16.msra.mxu0 %v999
        %2389 = vmatprep.subr.bf16.mxu0 %v996
        %2390 = vmatpush1.bf16.msra.mxu0 %v995
        %2391 = vmatprep.subr.bf16.mxu0 %v992
        %2392 = vmatpush1.bf16.msra.mxu0 %v991
        %2393 = vmatprep.subr.bf16.mxu0 %v988
        %2394 = vmatpush1.bf16.msra.mxu0 %v987
        %2395 = vmatprep.subr.bf16.mxu0 %v984
        %2396 = vmatpush1.bf16.msra.mxu0 %v983
        %2397 = vmatprep.subr.bf16.mxu0 %v980
        %2398 = vmatpush1.bf16.msra.mxu0 %v979
        %2399 = vmatprep.subr.bf16.mxu0 0
        %2400 = vmatpush2.bf16.msra.mxu0 0
        %2401 = vmatprep.subr.bf16.mxu0 0
        %2402 = vmatpush2.bf16.msra.mxu0 0
        %2403 = vmatprep.subr.bf16.mxu0 0
        %2404 = vmatpush2.bf16.msra.mxu0 0
        %2405 = vmatprep.subr.bf16.mxu0 0
        %2406 = vmatpush2.bf16.msra.mxu0 0
        %2407 = vmatprep.subr.bf16.mxu0 0
        %2408 = vmatpush2.bf16.msra.mxu0 0
        %2409 = vmatprep.subr.bf16.mxu0 0
        %2410 = vmatpush2.bf16.msra.mxu0 0
        %2411 = vmatprep.subr.bf16.mxu0 0
        %2412 = vmatpush2.bf16.msra.mxu0 0
        %2413 = vmatprep.subr.bf16.mxu0 0
        %2414 = vmatpush2.bf16.msra.mxu0 0
        %2415 = vmatprep.mubr.bf16.mxu0 0
        %2416 = vmatmul.mubr.bf16.gmra.mxu0 %v2382
        %v2417 = vpop.f32.mrf.mxu0
        %v2418 = vadd.f32 0.0, %v2417
        %v2419 = vpop.f32.mrf.mxu0
        %v2420 = vadd.f32 0.0, %v2419
        %v2421 = vpop.f32.mrf.mxu0
        %v2422 = vpop.f32.mrf.mxu0
        %2423 = vdwg.mxu0
        %2424 = vmatprep.subr.bf16.mxu0 %v1010
        %2425 = vmatpush1.bf16.msra.mxu0 %v1009
        %2426 = vmatprep.subr.bf16.mxu0 %v1006
        %2427 = vmatpush1.bf16.msra.mxu0 %v1005
        %2428 = vmatprep.subr.bf16.mxu0 %v1002
        %2429 = vmatpush1.bf16.msra.mxu0 %v1001
        %2430 = vmatprep.subr.bf16.mxu0 %v998
        %2431 = vmatpush1.bf16.msra.mxu0 %v997
        %2432 = vmatprep.subr.bf16.mxu0 %v994
        %2433 = vmatpush1.bf16.msra.mxu0 %v993
        %2434 = vmatprep.subr.bf16.mxu0 %v990
        %2435 = vmatpush1.bf16.msra.mxu0 %v989
        %2436 = vmatprep.subr.bf16.mxu0 %v986
        %2437 = vmatpush1.bf16.msra.mxu0 %v985
        %2438 = vmatprep.subr.bf16.mxu0 %v982
        %2439 = vmatpush1.bf16.msra.mxu0 %v981
        %2440 = vmatprep.subr.bf16.mxu0 0
        %2441 = vmatpush2.bf16.msra.mxu0 0
        %2442 = vmatprep.subr.bf16.mxu0 0
        %2443 = vmatpush2.bf16.msra.mxu0 0
        %2444 = vmatprep.subr.bf16.mxu0 0
        %2445 = vmatpush2.bf16.msra.mxu0 0
        %2446 = vmatprep.subr.bf16.mxu0 0
        %2447 = vmatpush2.bf16.msra.mxu0 0
        %2448 = vmatprep.subr.bf16.mxu0 0
        %2449 = vmatpush2.bf16.msra.mxu0 0
        %2450 = vmatprep.subr.bf16.mxu0 0
        %2451 = vmatpush2.bf16.msra.mxu0 0
        %2452 = vmatprep.subr.bf16.mxu0 0
        %2453 = vmatpush2.bf16.msra.mxu0 0
        %2454 = vmatprep.subr.bf16.mxu0 0
        %2455 = vmatpush2.bf16.msra.mxu0 0
        %2456 = vmatprep.mubr.bf16.mxu0 0
        %2457 = vmatmul.mubr.bf16.gmra.mxu0 %v2382
        %v2458 = vpop.f32.mrf.mxu0
        %v2459 = vadd.f32 0.0, %v2458
        %v2460 = vpop.f32.mrf.mxu0
        %v2461 = vadd.f32 0.0, %v2460
        %v2462 = vpop.f32.mrf.mxu0
        %v2463 = vpop.f32.mrf.mxu0
        %2464 = vdwg.mxu0
        %v2465 = vadd.f32 %v2378, %v2418
        %v2466 = vadd.f32 %v2379, %v2420
        %v2467 = vadd.f32 %v2380, %v2459
        %v2468 = vadd.f32 %v2381, %v2461
        %v2469 = vxor.u32 %v2465, 2147483648
        %v2470 = vxor.u32 %v2466, 2147483648
        %v2471 = vxor.u32 %v2467, 2147483648
        %v2472 = vmul.f32 %v2469, 1.442695
        %v2473 = vpow.pop %v2472
        %v2474 = vmul.f32 %v2470, 1.442695
        %v2475 = vpow.pop %v2474
        %v2476 = vmul.f32 %v2471, 1.442695
        %v2477 = vpow.pop %v2476
        %v2478 = vadd.f32 %v2473, 1.0
        %v2479 = vadd.f32 %v2475, 1.0
        %v2480 = vadd.f32 %v2477, 1.0
        %v2481 = vrcp.pop %v2478
        %v2482 = vmul.f32 1.0, %v2481
        %v2483 = vrcp.pop %v2479
        %v2484 = vmul.f32 1.0, %v2483
        %v2485 = vrcp.pop %v2480
        %v2486 = vmul.f32 1.0, %v2485
        %v2487 = vtanh.pop %v2468
        %v2488 = vmul.f32 %v2484, %v2371
        %v2489 = vmul.f32 %v2482, %v2487
        %v2490 = vadd.f32 %v2488, %v2489
        %v2491 = vtanh.pop %v2490
        %v2492 = vmul.f32 %v2486, %v2491
        %vm2493 = vcmp.gt.s32.totalorder %v801, 7
        %v2494 = vsel %vm2493, 1, 0
        %v2495 = vcvt.s32.f32 %v2494
        %2497 = vset.pattern.permute.xlu0 0
        %2498 = vperm.xlu0 %2497, %v2495
        %v2499 = vpop.permute.xlu0 %2498
        %v2501 = vmul.f32 %v2499, %v2492
        %v2502 = vpack.c.bf16 %v2501, %v2501
        %2503 = vmatprep.subr.bf16.mxu0 0
        %2504 = vmatpush1.bf16.msra.mxu0 %v1208
        %2505 = vmatprep.subr.bf16.mxu0 0
        %2506 = vmatpush1.bf16.msra.mxu0 %v1207
        %2507 = vmatprep.subr.bf16.mxu0 0
        %2508 = vmatpush1.bf16.msra.mxu0 %v1206
        %2509 = vmatprep.subr.bf16.mxu0 0
        %2510 = vmatpush1.bf16.msra.mxu0 %v1205
        %2511 = vmatprep.subr.bf16.mxu0 0
        %2512 = vmatpush1.bf16.msra.mxu0 %v1204
        %2513 = vmatprep.subr.bf16.mxu0 0
        %2514 = vmatpush1.bf16.msra.mxu0 %v1203
        %2515 = vmatprep.subr.bf16.mxu0 0
        %2516 = vmatpush1.bf16.msra.mxu0 %v1202
        %2517 = vmatprep.subr.bf16.mxu0 0
        %2518 = vmatpush1.bf16.msra.mxu0 %v1201
        %2519 = vmatprep.subr.bf16.mxu0 0
        %2520 = vmatpush2.bf16.msra.mxu0 0
        %2521 = vmatprep.subr.bf16.mxu0 0
        %2522 = vmatpush2.bf16.msra.mxu0 0
        %2523 = vmatprep.subr.bf16.mxu0 0
        %2524 = vmatpush2.bf16.msra.mxu0 0
        %2525 = vmatprep.subr.bf16.mxu0 0
        %2526 = vmatpush2.bf16.msra.mxu0 0
        %2527 = vmatprep.subr.bf16.mxu0 0
        %2528 = vmatpush2.bf16.msra.mxu0 0
        %2529 = vmatprep.subr.bf16.mxu0 0
        %2530 = vmatpush2.bf16.msra.mxu0 0
        %2531 = vmatprep.subr.bf16.mxu0 0
        %2532 = vmatpush2.bf16.msra.mxu0 0
        %2533 = vmatprep.subr.bf16.mxu0 0
        %2534 = vmatpush2.bf16.msra.mxu0 0
        %2535 = vmatprep.mubr.bf16.mxu0 0
        %2536 = vmatmul.mubr.bf16.gmra.mxu0 %v2502
        %v2537 = vpop.f32.mrf.mxu0
        %v2538 = vadd.f32 %v1167, %v2537
        %v2539 = vpop.f32.mrf.mxu0
        %v2540 = vpop.f32.mrf.mxu0
        %v2541 = vpop.f32.mrf.mxu0
        %2542 = vdwg.mxu0
        %s2543 = scalar_lea.vmem %s438, 56 [#allocation4]
        %2544 = vst [vmem:[%s2543] sm:$0xff] %v2538
        %v2545 = vsub.f32 1.0, %v2495
        %2547 = vset.pattern.permute.xlu0 0
        %2548 = vperm.xlu0 %2547, %v2545
        %v2549 = vpop.permute.xlu0 %2548
        %v2551 = vmul.f32 %v2549, %v2368
        %v2552 = vadd.f32 %v2501, %v2551
        %v2553 = vpack.c.bf16 %v2552, %v2552
        %v2554 = vld [vmem:[%s7] sm:$0xf]
        %v2555 = vld [vmem:[%s7 + $0x4] sm:$0xf]
        %v2556 = vld [vmem:[%s7 + $0x8] sm:$0xf]
        %v2557 = vld [vmem:[%s7 + $0xc] sm:$0xf]
        %v2558 = vld [vmem:[%s7 + $0x10] sm:$0xf]
        %v2559 = vld [vmem:[%s7 + $0x14] sm:$0xf]
        %v2560 = vld [vmem:[%s7 + $0x18] sm:$0xf]
        %v2561 = vld [vmem:[%s7 + $0x1c] sm:$0xf]
        %v2562 = vld [vmem:[%s7 + $0x20] sm:$0xf]
        %v2563 = vld [vmem:[%s7 + $0x24] sm:$0xf]
        %v2564 = vld [vmem:[%s7 + $0x28] sm:$0xf]
        %v2565 = vld [vmem:[%s7 + $0x2c] sm:$0xf]
        %v2566 = vld [vmem:[%s7 + $0x30] sm:$0xf]
        %v2567 = vld [vmem:[%s7 + $0x34] sm:$0xf]
        %v2568 = vld [vmem:[%s7 + $0x38] sm:$0xf]
        %v2569 = vld [vmem:[%s7 + $0x3c] sm:$0xf]
        %v2570 = vld [vmem:[%s8] sm:$0x1]
        %v2572 = vlaneseq
        %v2573 = vshrl.u32 %v2572, 7
        %v2574 = vsub.s32 0, %v2573
        %v2575 = vrot.slane %v2570, %v2574
        %v2593 = vunpack.c.l.b16 %v2554
        %v2594 = vunpack.c.l.b16 %v2555
        %v2595 = vunpack.c.l.b16 %v2556
        %v2596 = vunpack.c.l.b16 %v2557
        %v2597 = vunpack.c.l.b16 %v2558
        %v2598 = vunpack.c.l.b16 %v2559
        %v2599 = vunpack.c.l.b16 %v2560
        %v2600 = vunpack.c.l.b16 %v2561
        %v2601 = vunpack.c.l.b16 %v2562
        %v2602 = vunpack.c.l.b16 %v2563
        %v2603 = vunpack.c.l.b16 %v2564
        %v2604 = vunpack.c.l.b16 %v2565
        %v2605 = vunpack.c.l.b16 %v2566
        %v2606 = vunpack.c.l.b16 %v2567
        %v2607 = vunpack.c.l.b16 %v2568
        %v2608 = vunpack.c.l.b16 %v2569
        %v2609 = vpack.c.b16 %v2594, %v2593
        %v2610 = vpack.c.b16 %v2596, %v2595
        %v2611 = vpack.c.b16 %v2598, %v2597
        %v2612 = vpack.c.b16 %v2600, %v2599
        %v2613 = vpack.c.b16 %v2602, %v2601
        %v2614 = vpack.c.b16 %v2604, %v2603
        %v2615 = vpack.c.b16 %v2606, %v2605
        %v2616 = vpack.c.b16 %v2608, %v2607
        %2625 = vmatprep.subr.bf16.mxu0 0
        %2626 = vmatpush1.bf16.msra.mxu0 %v2616
        %2627 = vmatprep.subr.bf16.mxu0 0
        %2628 = vmatpush1.bf16.msra.mxu0 %v2615
        %2629 = vmatprep.subr.bf16.mxu0 0
        %2630 = vmatpush1.bf16.msra.mxu0 %v2614
        %2631 = vmatprep.subr.bf16.mxu0 0
        %2632 = vmatpush1.bf16.msra.mxu0 %v2613
        %2633 = vmatprep.subr.bf16.mxu0 0
        %2634 = vmatpush1.bf16.msra.mxu0 %v2612
        %2635 = vmatprep.subr.bf16.mxu0 0
        %2636 = vmatpush1.bf16.msra.mxu0 %v2611
        %2637 = vmatprep.subr.bf16.mxu0 0
        %2638 = vmatpush1.bf16.msra.mxu0 %v2610
        %2639 = vmatprep.subr.bf16.mxu0 0
        %2640 = vmatpush1.bf16.msra.mxu0 %v2609
        %2641 = vmatprep.subr.bf16.mxu0 0
        %2642 = vmatpush2.bf16.msra.mxu0 0
        %2643 = vmatprep.subr.bf16.mxu0 0
        %2644 = vmatpush2.bf16.msra.mxu0 0
        %2645 = vmatprep.subr.bf16.mxu0 0
        %2646 = vmatpush2.bf16.msra.mxu0 0
        %2647 = vmatprep.subr.bf16.mxu0 0
        %2648 = vmatpush2.bf16.msra.mxu0 0
        %2649 = vmatprep.subr.bf16.mxu0 0
        %2650 = vmatpush2.bf16.msra.mxu0 0
        %2651 = vmatprep.subr.bf16.mxu0 0
        %2652 = vmatpush2.bf16.msra.mxu0 0
        %2653 = vmatprep.subr.bf16.mxu0 0
        %2654 = vmatpush2.bf16.msra.mxu0 0
        %2655 = vmatprep.subr.bf16.mxu0 0
        %2656 = vmatpush2.bf16.msra.mxu0 0
        %2657 = vmatprep.mubr.bf16.mxu0 0
        %2658 = vmatmul.mubr.bf16.gmra.mxu0 %v2553
        %v2659 = vpop.f32.mrf.mxu0
        %v2660 = vadd.f32 %v2575, %v2659
        %v2661 = vpop.f32.mrf.mxu0
        %v2662 = vpop.f32.mrf.mxu0
        %v2663 = vpop.f32.mrf.mxu0
        %2664 = vdwg.mxu0
        %2665 = vst [vmem:[%s452] sm:$0xff] %v2660
        %s2666 = sand.u32 %s229, 1
        %s2667 = sand.u32 %s229, 1
        %s2668 = smul.addr %s2667, 64
        %s2669 = scalar_lea.vmem [#allocation4], %s2668
        %p2670 = scmp.lt.s32.totalorder %s22, 1
        %s2671 = scalar_select %p2670, %s22, 1
        %s2672 = smul.addr %s2671, 8
        %s2673 = scalar_lea.vmem %s10, %s2672
        // Predicated region
        $region98: #{_lambda_.1} parent=92 // pred_check
          %p2674 = pneg %p239
        $region99: #{_lambda_.1} parent=92 // pred_check_branch
          %2676 = sbr.rel (%p2674) target = $region101
        $region100: #{_lambda_.1} parent=92 // pred_region
          %s2677 = smul.addr %s22, 8
          %s2678 = scalar_lea.vmem %s9, %s2677
          // Predicated region
          $region102: #{_lambda_.1} parent=100 // pred_check
            _
          $region103: #{_lambda_.1} parent=100 // pred_check_branch
            %2680 = sbr.rel (0) target = $region105
          $region104: #{_lambda_.1} parent=100 // pred_region
            // Predicated region
            $region106: #{_lambda_.1} parent=104 // pred_check
              _
            $region107: #{_lambda_.1} parent=104 // pred_check_branch
              %2682 = sbr.rel (0) target = $region109
            $region108: #{_lambda_.1} parent=104 // pred_region
              // Predicated region
              $region121: #{_lambda_.1} parent=108 // pred_check
                _
              $region122: #{_lambda_.1} parent=108 // pred_check_branch
                %2712 = sbr.rel (0) target = $region124
              $region123: #{_lambda_.1} parent=108 // pred_region
                loop: start=0, step=1, limit=1
                $region125: #{_lambda_.1} parent=123 // loop_pre_header
                  _
                $region126: #{_lambda_.1} parent=123 // loop_header
                  %s2714 = sphi 0, %s2718
                  %p2715 = scmp.ge.s32.totalorder %s2714, 1
                  %s2719 = sphi %s2669, %s2669
                  %s2720 = sphi %s2678, %s2678
                $region127: #{_lambda_.1} parent=123 // loop_header_branch
                  %2717 = sbr.rel (%p2715) target = $region131
                $region128: #{_lambda_.1} parent=123 // loop_body
                  %v2721 = vld [vmem:[%s2719] sm:$0xff]
                  %2722 = vst [vmem:[%s2720] sm:$0xff] %v2721
                  %v2723 = vld [vmem:[%s2719 + $0x8] sm:$0xff]
                  %2724 = vst [vmem:[%s2720 + $0x10] sm:$0xff] %v2723
                  %v2725 = vld [vmem:[%s2719 + $0x10] sm:$0xff]
                  %2726 = vst [vmem:[%s2720 + $0x20] sm:$0xff] %v2725
                  %v2727 = vld [vmem:[%s2719 + $0x18] sm:$0xff]
                  %2728 = vst [vmem:[%s2720 + $0x30] sm:$0xff] %v2727
                  %v2729 = vld [vmem:[%s2719 + $0x20] sm:$0xff]
                  %2730 = vst [vmem:[%s2720 + $0x40] sm:$0xff] %v2729
                  %v2731 = vld [vmem:[%s2719 + $0x28] sm:$0xff]
                  %2732 = vst [vmem:[%s2720 + $0x50] sm:$0xff] %v2731
                  %v2733 = vld [vmem:[%s2719 + $0x30] sm:$0xff]
                  %2734 = vst [vmem:[%s2720 + $0x60] sm:$0xff] %v2733
                  %v2735 = vld [vmem:[%s2719 + $0x38] sm:$0xff]
                  %2736 = vst [vmem:[%s2720 + $0x70] sm:$0xff] %v2735
                $region129: #{_lambda_.1} parent=123 // loop_footer
                  %s2718 = sadd.s32 1, %s2714
                $region130: #{_lambda_.1} parent=123 // loop_footer_branch
                  %2713 = sbr.rel target = $region126
                $region131: #{_lambda_.1} parent=123 // loop_exit
                  _
              $region124: #{_lambda_.1} parent=108 // pred_fallthru
                _
              // Predicated region
              $region132: #{_lambda_.1} parent=108 // pred_check
                _
              $region133: #{_lambda_.1} parent=108 // pred_check_branch
                %2738 = sbr.rel target = $region135
              $region134: #{_lambda_.1} parent=108 // pred_region
                _
              $region135: #{_lambda_.1} parent=108 // pred_fallthru
                _
            $region109: #{_lambda_.1} parent=104 // pred_fallthru
              _
            // Predicated region
            $region110: #{_lambda_.1} parent=104 // pred_check
              _
            $region111: #{_lambda_.1} parent=104 // pred_check_branch
              %2684 = sbr.rel target = $region113
            $region112: #{_lambda_.1} parent=104 // pred_region
              %s2686 = ssub.s32 256, 1
              loop: start=0, step=1, limit=1
              $region114: #{_lambda_.1} parent=112 // loop_pre_header
                _
              $region115: #{_lambda_.1} parent=112 // loop_header
                %s2688 = sphi 0, %s2692
                %p2689 = scmp.ge.s32.totalorder %s2688, 1
                %s2693 = sphi %s2669, %s2669
                %s2694 = sphi %s2678, %s2678
              $region116: #{_lambda_.1} parent=112 // loop_header_branch
                %2691 = sbr.rel (%p2689) target = $region120
              $region117: #{_lambda_.1} parent=112 // loop_body
                %v2695 = vld [vmem:[%s2693] sm:%s2686]
                %2696 = vst [vmem:[%s2694] sm:%s2686] %v2695
                %v2697 = vld [vmem:[%s2693 + $0x8] sm:%s2686]
                %2698 = vst [vmem:[%s2694 + $0x10] sm:%s2686] %v2697
                %v2699 = vld [vmem:[%s2693 + $0x10] sm:%s2686]
                %2700 = vst [vmem:[%s2694 + $0x20] sm:%s2686] %v2699
                %v2701 = vld [vmem:[%s2693 + $0x18] sm:%s2686]
                %2702 = vst [vmem:[%s2694 + $0x30] sm:%s2686] %v2701
                %v2703 = vld [vmem:[%s2693 + $0x20] sm:%s2686]
                %2704 = vst [vmem:[%s2694 + $0x40] sm:%s2686] %v2703
                %v2705 = vld [vmem:[%s2693 + $0x28] sm:%s2686]
                %2706 = vst [vmem:[%s2694 + $0x50] sm:%s2686] %v2705
                %v2707 = vld [vmem:[%s2693 + $0x30] sm:%s2686]
                %2708 = vst [vmem:[%s2694 + $0x60] sm:%s2686] %v2707
                %v2709 = vld [vmem:[%s2693 + $0x38] sm:%s2686]
                %2710 = vst [vmem:[%s2694 + $0x70] sm:%s2686] %v2709
              $region118: #{_lambda_.1} parent=112 // loop_footer
                %s2692 = sadd.s32 1, %s2688
              $region119: #{_lambda_.1} parent=112 // loop_footer_branch
                %2687 = sbr.rel target = $region115
              $region120: #{_lambda_.1} parent=112 // loop_exit
                _
            $region113: #{_lambda_.1} parent=104 // pred_fallthru
              _
          $region105: #{_lambda_.1} parent=100 // pred_fallthru
            _
          %2739 = vnop
        $region101: #{_lambda_.1} parent=92 // pred_fallthru
          _
        // Predicated region
        $region136: #{_lambda_.1} parent=92 // pred_check
          %p2740 = pneg %p265
        $region137: #{_lambda_.1} parent=92 // pred_check_branch
          %2742 = sbr.rel (%p2740) target = $region139
        $region138: #{_lambda_.1} parent=92 // pred_region
          _
        $region139: #{_lambda_.1} parent=92 // pred_fallthru
          _
      $region93: #{_lambda_.1} parent=5 // pred_fallthru
        _
      %p2743 = scmp.le.s32.totalorder 2, %s17
      // Predicated region
      $region140: #{_lambda_.1} parent=5 // pred_check
        %p2744 = pneg %p2743
      $region141: #{_lambda_.1} parent=5 // pred_check_branch
        %2746 = sbr.rel (%p2744) target = $region143
      $region142: #{_lambda_.1} parent=5 // pred_region
        %s2747 = ssub.s32 %s17, 2
        // Predicated region
        $region144: #{_lambda_.1} parent=142 // pred_check
          %p2748 = pneg %p245
        $region145: #{_lambda_.1} parent=142 // pred_check_branch
          %2750 = sbr.rel (%p2748) target = $region147
        $region146: #{_lambda_.1} parent=142 // pred_region
          %s2751 = sand.u32 %s230, 1
          %s2752 = sand.u32 %s230, 1
          %s2753 = smul.addr %s2752, 64
          %s2754 = scalar_lea.vmem [#allocation4], %s2753
        $region147: #{_lambda_.1} parent=142 // pred_fallthru
          _
        // Predicated region
        $region148: #{_lambda_.1} parent=142 // pred_check
          %p2755 = pneg %p271
        $region149: #{_lambda_.1} parent=142 // pred_check_branch
          %2757 = sbr.rel (%p2755) target = $region151
        $region150: #{_lambda_.1} parent=142 // pred_region
          %p2758 = scmp.lt.s32.totalorder %s23, 1
          %s2759 = scalar_select %p2758, %s23, 1
          %s2760 = smul.addr %s2759, 8
          %s2761 = scalar_lea.vmem %s10, %s2760
        $region151: #{_lambda_.1} parent=142 // pred_fallthru
          _
      $region143: #{_lambda_.1} parent=5 // pred_fallthru
        _
    $region6: #{_lambda_.1} parent=1 // loop_footer
      %s21 = sadd.s32 1, %s17
    $region7: #{_lambda_.1} parent=1 // loop_footer_branch
      %16 = sbr.rel target = $region3
    $region8: #{_lambda_.1} parent=1 // loop_exit
      _

</llo_original>
